<compile_context>
chip_gen: v7x
topology: tpu7x:2x2x1
jax: 0.10.0
libtpu: 0.0.40
codegen_flags: <defaults>
</compile_context>

<pallas_src>
import numpy as np
import jax
import jax.numpy as jnp
from jax import lax
from jax.experimental import pallas as pl
from jax.experimental.pallas import tpu as pltpu


def basic_block_kernel(x_ref, w1_ref, b1_ref, w2_ref, b2_ref, o_ref, t1_ref):
    # Block shapes:
    #   x_ref : (1, H + 4, W, Cin)   f32   whole padded image (resident)
    #   w*_ref: (9 * Cin, C)         bf16  BN-folded, rows ordered (kh, kw, cin)
    #   b*_ref: (1, C)               f32   BN-folded bias
    #   o_ref : (1, TH, W, C)        f32
    #   t1_ref: ((TH + 2) * W, C)    f32   scratch: conv1 output + 1-row halo
    th = o_ref.shape[1]
    w_img = x_ref.shape[2]
    c_in = x_ref.shape[3]
    c_out = o_ref.shape[3]

    ti = pl.program_id(1)
    r0 = pl.multiple_of(ti * th, th)

    # W-boundary masks, built ONCE at the larger (conv1) source size; conv2
    # reuses a row-prefix (the column pattern repeats every W rows).
    m_src1 = (th + 4) * w_img
    col = lax.broadcasted_iota(jnp.int32, (th + 4, w_img, c_in), 1)
    col = col.reshape(m_src1, c_in)
    ok_m1 = col != 0                 # lanes valid for the "reads w-1" variant
    ok_p1 = col != w_img - 1         # lanes valid for the "reads w+1" variant

    def conv3x3(src_f32, wk_ref, rows_out):
        """3x3 'same' conv as ONE MXU matmul with K = 9 * C.

        src_f32: ((rows_out + 2) * W, C) f32 flattened rows with a 1-row halo
        on each side.  W zero-padding comes from the boundary masks; H zero-
        padding comes from the caller-supplied halo rows.
        Returns (rows_out * W, Cout) f32.
        """
        m_src = (rows_out + 2) * w_img
        m_out = rows_out * w_img
        # Three W-shifted variants of the whole source slab (2 XLU rolls + 2
        # f32 boundary selects), then a single bf16 cast per variant.
        v_m1 = jnp.where(ok_m1[:m_src], pltpu.roll(src_f32, 1, 0), 0.0)
        v_p1 = jnp.where(ok_p1[:m_src], pltpu.roll(src_f32, m_src - 1, 0), 0.0)
        variants = (v_m1.astype(jnp.bfloat16),       # reads column w - 1
                    src_f32.astype(jnp.bfloat16),    # reads column w
                    v_p1.astype(jnp.bfloat16))       # reads column w + 1
        # 9 taps = aligned row slices of the 3 variants (W % 8 == 0 keeps them
        # sublane-aligned), concatenated along lanes -> (M, 9*C) im2col slab.
        taps = [variants[kw][kh * w_img: kh * w_img + m_out]
                for kh in range(3) for kw in range(3)]
        im2col = jnp.concatenate(taps, axis=1)
        return jnp.dot(im2col, wk_ref[...], preferred_element_type=jnp.float32)

    # ---- conv1 + bn1 + relu over TH + 2 rows (1-row halo for conv2) --------
    src1 = x_ref[0, pl.ds(r0, th + 4), :, :].reshape(m_src1, c_in)
    t1_ref[...] = jnp.maximum(conv3x3(src1, w1_ref, th + 2) + b1_ref[...], 0.0)

    # conv2's H zero-padding: a conv1-halo row lying outside the image must be
    # exactly zero (not relu(bias)); only the first / last H tile has one.
    @pl.when(ti == 0)
    def _():
        t1_ref[0:w_img, :] = jnp.zeros((w_img, c_out), jnp.float32)

    @pl.when(ti == pl.num_programs(1) - 1)
    def _():
        t1_ref[(th + 1) * w_img:(th + 2) * w_img, :] = jnp.zeros(
            (w_img, c_out), jnp.float32)

    # ---- conv2 + bn2 + residual + relu (single fused epilogue pass) --------
    acc2 = conv3x3(t1_ref[...], w2_ref, th)
    res = x_ref[0, pl.ds(r0 + 2, th), :, :].reshape(th * w_img, c_in)   # f32
    out = jnp.maximum(acc2 + b2_ref[...] + res, 0.0)
    o_ref[0] = out.reshape(th, w_img, c_out)


def fold_bn_into_conv(w_hwio, gamma, beta, mean, var, eps=1e-5):
    """Fold eval-mode BatchNorm into an HWIO conv weight -> (weight, bias)."""
    scale = gamma / jnp.sqrt(var + eps)                      # (Cout,)
    return w_hwio * scale, beta - mean * scale


def basic_block_pallas(x_nchw, params, *, tile_h=32):
    """BasicBlock forward.  x_nchw: (N, C, H, W) f32 (PyTorch layout)."""
    w1, g1, be1, mu1, v1, w2, g2, be2, mu2, v2 = params
    x = jnp.transpose(x_nchw, (0, 2, 3, 1)).astype(jnp.float32)   # -> NHWC
    n, h, w, c_in = x.shape
    planes = w1.shape[-1]
    assert w1.shape == (3, 3, c_in, planes) and w2.shape == (3, 3, planes, planes)
    assert planes == c_in, "stride=1 / downsample=None requires inplanes == planes"
    assert w % 8 == 0, "W must be a multiple of 8 (TPU sublane tiling)"

    # Fat H tiles: largest divisor of H that is <= tile_h (whole image for the
    # 16-row demo) so the per-grid-step fixed cost is amortized.
    th = h
    for cand in range(min(tile_h, h), 0, -1):
        if h % cand == 0:
            th = cand
            break

    # Fold BN into the convs at trace time; weights go to bf16 (MXU) laid out
    # as (9*Cin, Cout) to match the in-kernel im2col; biases stay f32.
    w1f, b1 = fold_bn_into_conv(w1, g1, be1, mu1, v1)
    w2f, b2 = fold_bn_into_conv(w2, g2, be2, mu2, v2)
    w1k = w1f.reshape(9 * c_in, planes).astype(jnp.bfloat16)
    w2k = w2f.reshape(9 * planes, planes).astype(jnp.bfloat16)
    b1k = b1.reshape(1, planes).astype(jnp.float32)
    b2k = b2.reshape(1, planes).astype(jnp.float32)

    # 2-row zero halo along H (receptive field of the two stacked 3x3 convs).
    xp = jnp.pad(x, ((0, 0), (2, 2), (0, 0), (0, 0)))

    out = pl.pallas_call(
        basic_block_kernel,
        out_shape=jax.ShapeDtypeStruct((n, h, w, planes), jnp.float32),
        grid=(n, h // th),
        in_specs=[
            # Whole padded image; constant across the H-tile axis -> resident.
            # TODO(synk): for large feature maps budget this against v7x's
            # 64 MiB VMEM (per-tile halo windows + manual DMA instead).
            pl.BlockSpec((1, h + 4, w, c_in), lambda b, i: (b, 0, 0, 0)),
            pl.BlockSpec((9 * c_in, planes), lambda b, i: (0, 0)),
            pl.BlockSpec((1, planes), lambda b, i: (0, 0)),
            pl.BlockSpec((9 * planes, planes), lambda b, i: (0, 0)),
            pl.BlockSpec((1, planes), lambda b, i: (0, 0)),
        ],
        out_specs=pl.BlockSpec((1, th, w, planes), lambda b, i: (b, i, 0, 0)),
        scratch_shapes=[pltpu.VMEM(((th + 2) * w, planes), jnp.float32)],
        compiler_params=pltpu.CompilerParams(
            dimension_semantics=("parallel", "parallel")),
    )(xp, w1k, b1k, w2k, b2k)

    return jnp.transpose(out, (0, 3, 1, 2))                       # back to NCHW


def basic_block_ref(x_nchw, params):
    """Pure-JAX reference mirroring the kernel's precision policy
    (bf16 matmul operands, f32 accumulation, f32 residual)."""
    w1, g1, be1, mu1, v1, w2, g2, be2, mu2, v2 = params
    w1f, b1 = fold_bn_into_conv(w1, g1, be1, mu1, v1)
    w2f, b2 = fold_bn_into_conv(w2, g2, be2, mu2, v2)
    x = jnp.transpose(x_nchw, (0, 2, 3, 1)).astype(jnp.float32)
    dn = ("NHWC", "HWIO", "NHWC")
    conv = lambda a, wgt: lax.conv_general_dilated(
        a.astype(jnp.bfloat16), wgt.astype(jnp.bfloat16), (1, 1),
        [(1, 1), (1, 1)], dimension_numbers=dn,
        preferred_element_type=jnp.float32)
    t = jnp.maximum(conv(x, w1f) + b1, 0.0)
    t = conv(t, w2f) + b2
    out = jnp.maximum(t + x, 0.0)
    return jnp.transpose(out, (0, 3, 1, 2))


def make_params(key, inplanes, planes):
    """Deterministic synthetic parameters matching BasicBlock.__init__ shapes.

    Conv weights are stored in HWIO (a PyTorch OIHW weight maps via
    w.transpose(2, 3, 1, 0)); BN params are (gamma, beta, running_mean,
    running_var) per layer."""
    ks = jax.random.split(key, 10)
    w1 = 0.1 * jax.random.normal(ks[0], (3, 3, inplanes, planes), jnp.float32)
    w2 = 0.1 * jax.random.normal(ks[1], (3, 3, planes, planes), jnp.float32)

    def bn(k0, k1, k2, k3, c):
        gamma = 1.0 + 0.1 * jax.random.normal(k0, (c,), jnp.float32)
        beta = 0.1 * jax.random.normal(k1, (c,), jnp.float32)
        mean = 0.1 * jax.random.normal(k2, (c,), jnp.float32)
        var = jax.random.uniform(k3, (c,), jnp.float32, 0.5, 1.5)
        return gamma, beta, mean, var

    g1, be1, mu1, v1 = bn(ks[2], ks[3], ks[4], ks[5], planes)
    g2, be2, mu2, v2 = bn(ks[6], ks[7], ks[8], ks[9], planes)
    return (w1, g1, be1, mu1, v1, w2, g2, be2, mu2, v2)


if __name__ == "__main__":
    key = jax.random.PRNGKey(0)
    k_x, k_p = jax.random.split(key)

    # BasicBlock default config: inplanes == planes (stride=1, no downsample).
    # C = 128 (ResNet layer2 width) keeps every lane dimension 128-dense.
    N, C, H, W = 2, 128, 16, 16
    x = jax.random.normal(k_x, (N, C, H, W), jnp.float32)
    params = make_params(k_p, inplanes=C, planes=C)

    out = basic_block_pallas(x, params)
    jax.block_until_ready(out)

    ref = basic_block_ref(x, params)
    np.testing.assert_allclose(np.asarray(out), np.asarray(ref),
                               rtol=1e-2, atol=1e-2)
    print("KERNEL_OK")
</pallas_src>

<mosaic_0001>
module attributes {stable_mosaic.version = 11 : i64} {
  func.func @basic_block_kernel(%arg0: i32, %arg1: i32, %arg2: memref<1x20x16x128xf32, #tpu.memory_space<vmem>>, %arg3: memref<1152x128xbf16, #tpu.memory_space<vmem>>, %arg4: memref<1x128xf32, #tpu.memory_space<vmem>>, %arg5: memref<1152x128xbf16, #tpu.memory_space<vmem>>, %arg6: memref<1x128xf32, #tpu.memory_space<vmem>>, %arg7: memref<1x16x16x128xf32, #tpu.memory_space<vmem>>, %arg8: memref<288x128xf32, #tpu.memory_space<vmem>>) attributes {dimension_semantics = [#tpu.dimension_semantics<parallel>, #tpu.dimension_semantics<parallel>], iteration_bounds = array<i64: 2, 1>, scalar_prefetch = 0 : i64, scratch_operands = 1 : i64, tpu.core_type = #tpu.core_type<tc>, window_params = [{transform_indices = @transform_0, window_bounds = array<i64: 1, 20, 16, 128>}, {pipeline_mode = #tpu.pipeline_mode<synchronous>, transform_indices = @transform_1, window_bounds = array<i64: 1152, 128>}, {pipeline_mode = #tpu.pipeline_mode<synchronous>, transform_indices = @transform_2, window_bounds = array<i64: 1, 128>}, {pipeline_mode = #tpu.pipeline_mode<synchronous>, transform_indices = @transform_3, window_bounds = array<i64: 1152, 128>}, {pipeline_mode = #tpu.pipeline_mode<synchronous>, transform_indices = @transform_4, window_bounds = array<i64: 1, 128>}, {transform_indices = @transform_5, window_bounds = array<i64: 1, 16, 16, 128>}]} {
    %c16_i32 = arith.constant 16 : i32
    %0 = arith.muli %arg1, %c16_i32 : i32
    %1 = tpu.assume_multiple %0, 16 : i32
    %2 = tpu.iota {dimensions = array<i32: 1>} : vector<20x16x128xi32>
    %3 = vector.shape_cast %2 : vector<20x16x128xi32> to vector<320x128xi32>
    %c0_i32 = arith.constant 0 : i32
    %4 = vector.broadcast %c0_i32 : i32 to vector<320x128xi32>
    %5 = arith.cmpi ne, %3, %4 : vector<320x128xi32>
    %c15_i32 = arith.constant 15 : i32
    %6 = vector.broadcast %c15_i32 : i32 to vector<320x128xi32>
    %7 = arith.cmpi ne, %3, %6 : vector<320x128xi32>
    %c0 = arith.constant 0 : index
    %8 = arith.index_cast %1 : i32 to index
    %c0_0 = arith.constant 0 : index
    %c0_1 = arith.constant 0 : index
    %9 = vector.load %arg2[%c0, %8, %c0_0, %c0_1] : memref<1x20x16x128xf32, #tpu.memory_space<vmem>>, vector<1x20x16x128xf32>
    %10 = vector.shape_cast %9 : vector<1x20x16x128xf32> to vector<20x16x128xf32>
    %11 = vector.shape_cast %10 : vector<20x16x128xf32> to vector<320x128xf32>
    %c1_i32 = arith.constant 1 : i32
    %12 = tpu.dynamic_rotate %11 by %c1_i32 dim 0 : vector<320x128xf32>, i32 -> vector<320x128xf32>
    %cst = arith.constant 0.000000e+00 : f32
    %13 = vector.broadcast %cst : f32 to vector<320x128xf32>
    %14 = arith.select %5, %12, %13 : vector<320x128xi1>, vector<320x128xf32>
    %c319_i32 = arith.constant 319 : i32
    %15 = tpu.dynamic_rotate %11 by %c319_i32 dim 0 : vector<320x128xf32>, i32 -> vector<320x128xf32>
    %cst_2 = arith.constant 0.000000e+00 : f32
    %16 = vector.broadcast %cst_2 : f32 to vector<320x128xf32>
    %17 = arith.select %7, %15, %16 : vector<320x128xi1>, vector<320x128xf32>
    %18 = arith.truncf %14 : vector<320x128xf32> to vector<320x128xbf16>
    %19 = arith.truncf %11 : vector<320x128xf32> to vector<320x128xbf16>
    %20 = arith.truncf %17 : vector<320x128xf32> to vector<320x128xbf16>
    %21 = vector.extract_strided_slice %18 {offsets = [0, 0], sizes = [288, 128], strides = [1, 1]} : vector<320x128xbf16> to vector<288x128xbf16>
    %22 = vector.extract_strided_slice %19 {offsets = [0, 0], sizes = [288, 128], strides = [1, 1]} : vector<320x128xbf16> to vector<288x128xbf16>
    %23 = vector.extract_strided_slice %20 {offsets = [0, 0], sizes = [288, 128], strides = [1, 1]} : vector<320x128xbf16> to vector<288x128xbf16>
    %24 = vector.extract_strided_slice %18 {offsets = [16, 0], sizes = [288, 128], strides = [1, 1]} : vector<320x128xbf16> to vector<288x128xbf16>
    %25 = vector.extract_strided_slice %19 {offsets = [16, 0], sizes = [288, 128], strides = [1, 1]} : vector<320x128xbf16> to vector<288x128xbf16>
    %26 = vector.extract_strided_slice %20 {offsets = [16, 0], sizes = [288, 128], strides = [1, 1]} : vector<320x128xbf16> to vector<288x128xbf16>
    %27 = vector.extract_strided_slice %18 {offsets = [32, 0], sizes = [288, 128], strides = [1, 1]} : vector<320x128xbf16> to vector<288x128xbf16>
    %28 = vector.extract_strided_slice %19 {offsets = [32, 0], sizes = [288, 128], strides = [1, 1]} : vector<320x128xbf16> to vector<288x128xbf16>
    %29 = vector.extract_strided_slice %20 {offsets = [32, 0], sizes = [288, 128], strides = [1, 1]} : vector<320x128xbf16> to vector<288x128xbf16>
    %30 = tpu.concatenate %21, %22, %23, %24, %25, %26, %27, %28, %29 in 1 : vector<288x128xbf16>, vector<288x128xbf16>, vector<288x128xbf16>, vector<288x128xbf16>, vector<288x128xbf16>, vector<288x128xbf16>, vector<288x128xbf16>, vector<288x128xbf16>, vector<288x128xbf16> -> vector<288x1152xbf16>
    %c0_3 = arith.constant 0 : index
    %c0_4 = arith.constant 0 : index
    %31 = vector.load %arg3[%c0_3, %c0_4] : memref<1152x128xbf16, #tpu.memory_space<vmem>>, vector<1152x128xbf16>
    %cst_5 = arith.constant dense<0.000000e+00> : vector<288x128xf32>
    %32 = tpu.matmul %30, %31, %cst_5 {dimension_numbers = #tpu.dot_dimension_numbers<[1], [0], [0], [1], [0, 0, 1, 1], [], []>} : vector<288x1152xbf16>, vector<1152x128xbf16>, vector<288x128xf32> -> vector<288x128xf32>
    %c0_6 = arith.constant 0 : index
    %c0_7 = arith.constant 0 : index
    %33 = vector.load %arg4[%c0_6, %c0_7] : memref<1x128xf32, #tpu.memory_space<vmem>>, vector<1x128xf32>
    %34 = vector.broadcast %33 : vector<1x128xf32> to vector<288x128xf32>
    %35 = arith.addf %32, %34 : vector<288x128xf32>
    %cst_8 = arith.constant 0.000000e+00 : f32
    %36 = vector.broadcast %cst_8 : f32 to vector<288x128xf32>
    %37 = arith.maximumf %35, %36 : vector<288x128xf32>
    %c0_9 = arith.constant 0 : index
    %c0_10 = arith.constant 0 : index
    %38 = vector.load %arg8[%c0_9, %c0_10] : memref<288x128xf32, #tpu.memory_space<vmem>>, vector<288x128xf32>
    tpu.vector_store %arg8[%c0_9, %c0_10], %37 {strides = array<i32>} : memref<288x128xf32, #tpu.memory_space<vmem>>, vector<288x128xf32>,
    %c0_i32_11 = arith.constant 0 : i32
    %39 = arith.cmpi eq, %arg1, %c0_i32_11 : i32
    %40 = arith.extui %39 : i1 to i32
    %c0_i32_12 = arith.constant 0 : i32
    %41 = arith.cmpi ne, %40, %c0_i32_12 : i32
    scf.if %41 {
      %cst_33 = arith.constant 0.000000e+00 : f32
      %84 = vector.broadcast %cst_33 : f32 to vector<16x128xf32>
      %c0_34 = arith.constant 0 : index
      %c0_35 = arith.constant 0 : index
      %85 = vector.load %arg8[%c0_34, %c0_35] : memref<288x128xf32, #tpu.memory_space<vmem>>, vector<16x128xf32>
      tpu.vector_store %arg8[%c0_34, %c0_35], %84 {strides = array<i32>} : memref<288x128xf32, #tpu.memory_space<vmem>>, vector<16x128xf32>,
    } else {
    }
    %c0_i32_13 = arith.constant 0 : i32
    %42 = arith.cmpi eq, %arg1, %c0_i32_13 : i32
    %43 = arith.extui %42 : i1 to i32
    %c0_i32_14 = arith.constant 0 : i32
    %44 = arith.cmpi ne, %43, %c0_i32_14 : i32
    scf.if %44 {
      %cst_33 = arith.constant 0.000000e+00 : f32
      %84 = vector.broadcast %cst_33 : f32 to vector<16x128xf32>
      %c272 = arith.constant 272 : index
      %c0_34 = arith.constant 0 : index
      %85 = vector.load %arg8[%c272, %c0_34] : memref<288x128xf32, #tpu.memory_space<vmem>>, vector<16x128xf32>
      tpu.vector_store %arg8[%c272, %c0_34], %84 {strides = array<i32>} : memref<288x128xf32, #tpu.memory_space<vmem>>, vector<16x128xf32>,
    } else {
    }
    %c0_15 = arith.constant 0 : index
    %c0_16 = arith.constant 0 : index
    %45 = vector.load %arg8[%c0_15, %c0_16] : memref<288x128xf32, #tpu.memory_space<vmem>>, vector<288x128xf32>
    %46 = vector.extract_strided_slice %5 {offsets = [0, 0], sizes = [288, 128], strides = [1, 1]} : vector<320x128xi1> to vector<288x128xi1>
    %c1_i32_17 = arith.constant 1 : i32
    %47 = tpu.dynamic_rotate %45 by %c1_i32_17 dim 0 : vector<288x128xf32>, i32 -> vector<288x128xf32>
    %cst_18 = arith.constant 0.000000e+00 : f32
    %48 = vector.broadcast %cst_18 : f32 to vector<288x128xf32>
    %49 = arith.select %46, %47, %48 : vector<288x128xi1>, vector<288x128xf32>
    %50 = vector.extract_strided_slice %7 {offsets = [0, 0], sizes = [288, 128], strides = [1, 1]} : vector<320x128xi1> to vector<288x128xi1>
    %c287_i32 = arith.constant 287 : i32
    %51 = tpu.dynamic_rotate %45 by %c287_i32 dim 0 : vector<288x128xf32>, i32 -> vector<288x128xf32>
    %cst_19 = arith.constant 0.000000e+00 : f32
    %52 = vector.broadcast %cst_19 : f32 to vector<288x128xf32>
    %53 = arith.select %50, %51, %52 : vector<288x128xi1>, vector<288x128xf32>
    %54 = arith.truncf %49 : vector<288x128xf32> to vector<288x128xbf16>
    %55 = arith.truncf %45 : vector<288x128xf32> to vector<288x128xbf16>
    %56 = arith.truncf %53 : vector<288x128xf32> to vector<288x128xbf16>
    %57 = vector.extract_strided_slice %54 {offsets = [0, 0], sizes = [256, 128], strides = [1, 1]} : vector<288x128xbf16> to vector<256x128xbf16>
    %58 = vector.extract_strided_slice %55 {offsets = [0, 0], sizes = [256, 128], strides = [1, 1]} : vector<288x128xbf16> to vector<256x128xbf16>
    %59 = vector.extract_strided_slice %56 {offsets = [0, 0], sizes = [256, 128], strides = [1, 1]} : vector<288x128xbf16> to vector<256x128xbf16>
    %60 = vector.extract_strided_slice %54 {offsets = [16, 0], sizes = [256, 128], strides = [1, 1]} : vector<288x128xbf16> to vector<256x128xbf16>
    %61 = vector.extract_strided_slice %55 {offsets = [16, 0], sizes = [256, 128], strides = [1, 1]} : vector<288x128xbf16> to vector<256x128xbf16>
    %62 = vector.extract_strided_slice %56 {offsets = [16, 0], sizes = [256, 128], strides = [1, 1]} : vector<288x128xbf16> to vector<256x128xbf16>
    %63 = vector.extract_strided_slice %54 {offsets = [32, 0], sizes = [256, 128], strides = [1, 1]} : vector<288x128xbf16> to vector<256x128xbf16>
    %64 = vector.extract_strided_slice %55 {offsets = [32, 0], sizes = [256, 128], strides = [1, 1]} : vector<288x128xbf16> to vector<256x128xbf16>
    %65 = vector.extract_strided_slice %56 {offsets = [32, 0], sizes = [256, 128], strides = [1, 1]} : vector<288x128xbf16> to vector<256x128xbf16>
    %66 = tpu.concatenate %57, %58, %59, %60, %61, %62, %63, %64, %65 in 1 : vector<256x128xbf16>, vector<256x128xbf16>, vector<256x128xbf16>, vector<256x128xbf16>, vector<256x128xbf16>, vector<256x128xbf16>, vector<256x128xbf16>, vector<256x128xbf16>, vector<256x128xbf16> -> vector<256x1152xbf16>
    %c0_20 = arith.constant 0 : index
    %c0_21 = arith.constant 0 : index
    %67 = vector.load %arg5[%c0_20, %c0_21] : memref<1152x128xbf16, #tpu.memory_space<vmem>>, vector<1152x128xbf16>
    %cst_22 = arith.constant dense<0.000000e+00> : vector<256x128xf32>
    %68 = tpu.matmul %66, %67, %cst_22 {dimension_numbers = #tpu.dot_dimension_numbers<[1], [0], [0], [1], [0, 0, 1, 1], [], []>} : vector<256x1152xbf16>, vector<1152x128xbf16>, vector<256x128xf32> -> vector<256x128xf32>
    %c2_i32 = arith.constant 2 : i32
    %69 = arith.addi %1, %c2_i32 : i32
    %c0_23 = arith.constant 0 : index
    %70 = arith.index_cast %69 : i32 to index
    %c0_24 = arith.constant 0 : index
    %c0_25 = arith.constant 0 : index
    %71 = vector.load %arg2[%c0_23, %70, %c0_24, %c0_25] : memref<1x20x16x128xf32, #tpu.memory_space<vmem>>, vector<1x16x16x128xf32>
    %72 = vector.shape_cast %71 : vector<1x16x16x128xf32> to vector<16x16x128xf32>
    %73 = vector.shape_cast %72 : vector<16x16x128xf32> to vector<256x128xf32>
    %c0_26 = arith.constant 0 : index
    %c0_27 = arith.constant 0 : index
    %74 = vector.load %arg6[%c0_26, %c0_27] : memref<1x128xf32, #tpu.memory_space<vmem>>, vector<1x128xf32>
    %75 = vector.broadcast %74 : vector<1x128xf32> to vector<256x128xf32>
    %76 = arith.addf %68, %75 : vector<256x128xf32>
    %77 = arith.addf %76, %73 : vector<256x128xf32>
    %cst_28 = arith.constant 0.000000e+00 : f32
    %78 = vector.broadcast %cst_28 : f32 to vector<256x128xf32>
    %79 = arith.maximumf %77, %78 : vector<256x128xf32>
    %80 = vector.shape_cast %79 : vector<256x128xf32> to vector<16x16x128xf32>
    %c0_29 = arith.constant 0 : index
    %c0_30 = arith.constant 0 : index
    %c0_31 = arith.constant 0 : index
    %c0_32 = arith.constant 0 : index
    %81 = vector.load %arg7[%c0_29, %c0_30, %c0_31, %c0_32] : memref<1x16x16x128xf32, #tpu.memory_space<vmem>>, vector<1x16x16x128xf32>
    %82 = vector.shape_cast %81 : vector<1x16x16x128xf32> to vector<16x16x128xf32>
    %83 = vector.shape_cast %80 : vector<16x16x128xf32> to vector<1x16x16x128xf32>
    tpu.vector_store %arg7[%c0_29, %c0_30, %c0_31, %c0_32], %83 {strides = array<i32>} : memref<1x16x16x128xf32, #tpu.memory_space<vmem>>, vector<1x16x16x128xf32>,
    return
  }
  func.func @transform_0(%arg0: i32, %arg1: i32) -> (i32, i32, i32, i32) {
    %c0_i32 = arith.constant 0 : i32
    %c0_i32_0 = arith.constant 0 : i32
    %c0_i32_1 = arith.constant 0 : i32
    %c0_i32_2 = arith.constant 0 : i32
    return %arg0, %c0_i32, %c0_i32_0, %c0_i32_1 : i32, i32, i32, i32
  }
  func.func @transform_1(%arg0: i32, %arg1: i32) -> (i32, i32) {
    %c0_i32 = arith.constant 0 : i32
    %c0_i32_0 = arith.constant 0 : i32
    %c0_i32_1 = arith.constant 0 : i32
    return %c0_i32, %c0_i32_0 : i32, i32
  }
  func.func @transform_2(%arg0: i32, %arg1: i32) -> (i32, i32) {
    %c0_i32 = arith.constant 0 : i32
    %c0_i32_0 = arith.constant 0 : i32
    %c0_i32_1 = arith.constant 0 : i32
    return %c0_i32, %c0_i32_0 : i32, i32
  }
  func.func @transform_3(%arg0: i32, %arg1: i32) -> (i32, i32) {
    %c0_i32 = arith.constant 0 : i32
    %c0_i32_0 = arith.constant 0 : i32
    %c0_i32_1 = arith.constant 0 : i32
    return %c0_i32, %c0_i32_0 : i32, i32
  }
  func.func @transform_4(%arg0: i32, %arg1: i32) -> (i32, i32) {
    %c0_i32 = arith.constant 0 : i32
    %c0_i32_0 = arith.constant 0 : i32
    %c0_i32_1 = arith.constant 0 : i32
    return %c0_i32, %c0_i32_0 : i32, i32
  }
  func.func @transform_5(%arg0: i32, %arg1: i32) -> (i32, i32, i32, i32) {
    %c0_i32 = arith.constant 0 : i32
    %c0_i32_0 = arith.constant 0 : i32
    %c0_i32_1 = arith.constant 0 : i32
    return %arg0, %arg1, %c0_i32, %c0_i32_0 : i32, i32, i32, i32
  }
}

</mosaic_0001>

<llo_original>
// kernel: tpu_custom_call.1
$region0: #{tpu_custom_call.1}
  #allocation0 [shape = 'u32[]', space=smem, size = 0x4, offset = 0x4, fixed_abs, tag = 'smem constant byte address 0x4 - core index']
  #allocation1 [shape = 'u32[144,128]{1,0:T(1,128)}', space=vmem, size = 0x12000, scoped, tag = 'internal scratch']
  #allocation2 [shape = 'f32[288,128]{1,0:T(8,128)}', space=vmem, size = 0x24000, scoped, tag = 'scratch operand']
  %s0 = inlined_call_operand.hbm [shape: f32[2,20,16,128], index: 0, kind: input, shape index: {}]
  %s1 = inlined_call_operand.hbm [shape: bf16[1152,128], index: 1, kind: input, shape index: {}]
  %s2 = inlined_call_operand.vmem [shape: f32[1,128], index: 2, kind: input, shape index: {}]
  %s3 = inlined_call_operand.hbm [shape: bf16[1152,128], index: 3, kind: input, shape index: {}]
  %s4 = inlined_call_operand.vmem [shape: f32[1,128], index: 4, kind: input, shape index: {}]
  %s5 = inlined_call_operand.hbm [shape: f32[2,16,16,128], index: 5, kind: output, shape index: {}]
  %s6 = sld [smem:[#allocation0]]
  $region69: #{tpu_custom_call.1} parent=0
    _
  %s8 = ssub.s32 1, %s6
  %s9 = scalar_select 0, %s8, %s6
  $region1: #{tpu_custom_call.1} parent=0
    #allocation3 [shape = 'u8[327680]{0}', space=vmem, size = 0x50000, scoped, tag = 'input window, operand 0']
    #allocation4 [shape = 's32[2]{0}', space=sflag, size = 0x8, scoped, tag = 'scoped memory for tpu_custom_call.1']
    #allocation5 [shape = 's32[2]{0}', space=sflag, size = 0x8, scoped, tag = 'scoped memory for tpu_custom_call.1']
    #allocation6 [shape = 'u8[294912]{0}', space=vmem, size = 0x48000, scoped, tag = 'input window, operand 1, single buffered']
    #allocation7 [shape = 's32[1]{0}', space=sflag, size = 0x4, scoped, tag = 'scoped memory for tpu_custom_call.1']
    #allocation8 [shape = 'u8[294912]{0}', space=vmem, size = 0x48000, scoped, tag = 'input window, operand 3, single buffered']
    #allocation9 [shape = 'u8[262144]{0}', space=vmem, size = 0x40000, scoped, tag = 'output window, operand 0']
    %10 = vsyncpa [#allocation4], 0
    %s11 = scalar_lea.sflag [#allocation4], 1
    %12 = vsyncpa %s11, 0
    %13 = vsyncpa [#allocation7], 0
    %14 = vsyncpa [#allocation5], 0
    %s15 = scalar_lea.sflag [#allocation5], 1
    %16 = vsyncpa %s15, 0
    loop: start=0, step=1, limit=4
    $region2: #{tpu_custom_call.1} parent=1 // loop_pre_header
      _
    $region3: #{tpu_custom_call.1} parent=1 // loop_header
      %s18 = sphi 0, %s22
      %p19 = scmp.ge.s32.totalorder %s18, 4
      %s25 = sphi 0, %s37
      %s26 = sphi 0, %s33
      %s27 = sphi 0, %s25
      %s28 = sphi 0, %s26
      %s29 = sphi 0, %s27
      %s30 = sphi 0, %s28
      %s40 = sphi 0, %s42
      %s43 = sphi 0, %s40
      %s44 = sphi 0, %s43
      %s60 = sphi 0, %s44
      %s64 = sphi 0, %s64
      %s66 = sphi 0, %s64
      %s67 = sphi 0, %s66
      %s81 = sphi 0, %s67
      %s85 = sphi 0, %s85
      %s87 = sphi 0, %s85
      %s88 = sphi 0, %s87
      %s102 = sphi 0, %s88
      %s106 = sphi 0, %s106
      %s108 = sphi 0, %s106
      %s109 = sphi 0, %s108
      %s123 = sphi 0, %s109
      %s127 = sphi 0, %s127
      %s129 = sphi 0, %s127
      %s130 = sphi 0, %s129
      %s144 = sphi 0, %s130
      %s152 = sphi 0, %s154
      %s155 = sphi 0, %s152
      %s156 = sphi 0, %s155
      %s172 = sphi 0, %s156
    $region4: #{tpu_custom_call.1} parent=1 // loop_header_branch
      %21 = sbr.rel (%p19) target = $region8
    $region5: #{tpu_custom_call.1} parent=1 // loop_body
      %s23 = ssub.s32 %s18, 1
      %s24 = ssub.s32 %s18, 2
      %s31 = sadd.s32 1, %s26
      %p32 = scmp.ge.s32.totalorder %s31, 1
      %s33 = scalar_select %p32, 0, %s31
      %s34 = sadd.s32 1, %s25
      %s35 = scalar_select %p32, %s34, %s25
      %p36 = scmp.ge.s32.totalorder %s35, 2
      %s37 = scalar_select %p36, 0, %s35
      %s38 = ssub.s32 %s25, %s37
      %p39 = scmp.eq.s32.totalorder %s38, 0
      %s41 = sadd.s32 %s40, 1
      %s42 = scalar_select %p39, %s40, %s41
      %p45 = pneg %p39
      %p46 = scmp.eq.s32.totalorder %s18, 1
      %p47 = por %p45, %p46
      %p48 = scmp.ne.s32.totalorder %s40, %s43
      %p49 = scmp.eq.s32.totalorder %s18, 0
      %p50 = por %p48, %p49
      %p51 = scmp.ne.s32.totalorder %s40, %s43
      %p52 = scmp.eq.s32.totalorder %s23, 1
      %p53 = por %p51, %p52
      %p54 = scmp.ne.s32.totalorder %s43, %s44
      %p55 = scmp.eq.s32.totalorder %s23, 0
      %p56 = por %p54, %p55
      %p57 = scmp.ne.s32.totalorder %s43, %s44
      %p58 = scmp.eq.s32.totalorder %s24, 1
      %p59 = por %p57, %p58
      %p61 = scmp.ne.s32.totalorder %s44, %s60
      %p62 = scmp.eq.s32.totalorder %s24, 0
      %p63 = por %p61, %p62
      %s65 = sadd.s32 %s64, 1
      %p68 = scmp.eq.s32.totalorder %s18, 1
      %p69 = scmp.ne.s32.totalorder %s64, %s66
      %p70 = scmp.eq.s32.totalorder %s18, 0
      %p71 = por %p69, %p70
      %p72 = scmp.ne.s32.totalorder %s64, %s66
      %p73 = scmp.eq.s32.totalorder %s23, 1
      %p74 = por %p72, %p73
      %p75 = scmp.ne.s32.totalorder %s66, %s67
      %p76 = scmp.eq.s32.totalorder %s23, 0
      %p77 = por %p75, %p76
      %p78 = scmp.ne.s32.totalorder %s66, %s67
      %p79 = scmp.eq.s32.totalorder %s24, 1
      %p80 = por %p78, %p79
      %p82 = scmp.ne.s32.totalorder %s67, %s81
      %p83 = scmp.eq.s32.totalorder %s24, 0
      %p84 = por %p82, %p83
      %s86 = sadd.s32 %s85, 1
      %p89 = scmp.eq.s32.totalorder %s18, 1
      %p90 = scmp.ne.s32.totalorder %s85, %s87
      %p91 = scmp.eq.s32.totalorder %s18, 0
      %p92 = por %p90, %p91
      %p93 = scmp.ne.s32.totalorder %s85, %s87
      %p94 = scmp.eq.s32.totalorder %s23, 1
      %p95 = por %p93, %p94
      %p96 = scmp.ne.s32.totalorder %s87, %s88
      %p97 = scmp.eq.s32.totalorder %s23, 0
      %p98 = por %p96, %p97
      %p99 = scmp.ne.s32.totalorder %s87, %s88
      %p100 = scmp.eq.s32.totalorder %s24, 1
      %p101 = por %p99, %p100
      %p103 = scmp.ne.s32.totalorder %s88, %s102
      %p104 = scmp.eq.s32.totalorder %s24, 0
      %p105 = por %p103, %p104
      %s107 = sadd.s32 %s106, 1
      %p110 = scmp.eq.s32.totalorder %s18, 1
      %p111 = scmp.ne.s32.totalorder %s106, %s108
      %p112 = scmp.eq.s32.totalorder %s18, 0
      %p113 = por %p111, %p112
      %p114 = scmp.ne.s32.totalorder %s106, %s108
      %p115 = scmp.eq.s32.totalorder %s23, 1
      %p116 = por %p114, %p115
      %p117 = scmp.ne.s32.totalorder %s108, %s109
      %p118 = scmp.eq.s32.totalorder %s23, 0
      %p119 = por %p117, %p118
      %p120 = scmp.ne.s32.totalorder %s108, %s109
      %p121 = scmp.eq.s32.totalorder %s24, 1
      %p122 = por %p120, %p121
      %p124 = scmp.ne.s32.totalorder %s109, %s123
      %p125 = scmp.eq.s32.totalorder %s24, 0
      %p126 = por %p124, %p125
      %s128 = sadd.s32 %s127, 1
      %p131 = scmp.eq.s32.totalorder %s18, 1
      %p132 = scmp.ne.s32.totalorder %s127, %s129
      %p133 = scmp.eq.s32.totalorder %s18, 0
      %p134 = por %p132, %p133
      %p135 = scmp.ne.s32.totalorder %s127, %s129
      %p136 = scmp.eq.s32.totalorder %s23, 1
      %p137 = por %p135, %p136
      %p138 = scmp.ne.s32.totalorder %s129, %s130
      %p139 = scmp.eq.s32.totalorder %s23, 0
      %p140 = por %p138, %p139
      %p141 = scmp.ne.s32.totalorder %s129, %s130
      %p142 = scmp.eq.s32.totalorder %s24, 1
      %p143 = por %p141, %p142
      %p145 = scmp.ne.s32.totalorder %s130, %s144
      %p146 = scmp.eq.s32.totalorder %s24, 0
      %p147 = por %p145, %p146
      %s148 = ssub.s32 %s25, %s37
      %s149 = ssub.s32 %s26, %s33
      %s150 = sor.u32 %s148, %s149
      %p151 = scmp.eq.s32.totalorder %s150, 0
      %s153 = sadd.s32 %s152, 1
      %s154 = scalar_select %p151, %s152, %s153
      %p157 = pneg %p151
      %p158 = scmp.eq.s32.totalorder %s18, 1
      %p159 = por %p157, %p158
      %p160 = scmp.ne.s32.totalorder %s152, %s155
      %p161 = scmp.eq.s32.totalorder %s18, 0
      %p162 = por %p160, %p161
      %p163 = scmp.ne.s32.totalorder %s152, %s155
      %p164 = scmp.eq.s32.totalorder %s23, 1
      %p165 = por %p163, %p164
      %p166 = scmp.ne.s32.totalorder %s155, %s156
      %p167 = scmp.eq.s32.totalorder %s23, 0
      %p168 = por %p166, %p167
      %p169 = scmp.ne.s32.totalorder %s155, %s156
      %p170 = scmp.eq.s32.totalorder %s24, 1
      %p171 = por %p169, %p170
      %p173 = scmp.ne.s32.totalorder %s156, %s172
      %p174 = scmp.eq.s32.totalorder %s24, 0
      %p175 = por %p173, %p174
      %p176 = scmp.le.s32.totalorder 1, %s18
      %p177 = scmp.lt.s32.totalorder %s18, 3
      %p178 = pnand %p176, %p177
      %p179 = pneg %p178
      // Predicated region
      $region9: #{tpu_custom_call.1} parent=5 // pred_check
        _
      $region10: #{tpu_custom_call.1} parent=5 // pred_check_branch
        %181 = sbr.rel (%p178) target = $region12
      $region11: #{tpu_custom_call.1} parent=5 // pred_region
        %s182 = ssub.s32 %s18, 1
        // Predicated region
        $region13: #{tpu_custom_call.1} parent=11 // pred_check
          %p183 = pneg %p77
        $region14: #{tpu_custom_call.1} parent=11 // pred_check_branch
          %185 = sbr.rel (%p183) target = $region16
        $region15: #{tpu_custom_call.1} parent=11 // pred_region
          %s187 = ssub.s32 9216, 9216
          %188 = vsyncadd [#allocation7], %s187
          %s189 = sshll.u32 [#allocation6], 4
          %s190 = int_to_ptr.vmem [resolvable:$true] %s189
          %195 = dma.hbm_to_vmem [thread:$0]  %s1, 9216, %s190, [#allocation7], 64, 64, 4
        $region16: #{tpu_custom_call.1} parent=11 // pred_fallthru
          _
        // Predicated region
        $region17: #{tpu_custom_call.1} parent=11 // pred_check
          %p196 = pneg %p98
        $region18: #{tpu_custom_call.1} parent=11 // pred_check_branch
          %198 = sbr.rel (%p196) target = $region20
        $region19: #{tpu_custom_call.1} parent=11 // pred_region
          _
        $region20: #{tpu_custom_call.1} parent=11 // pred_fallthru
          _
        // Predicated region
        $region21: #{tpu_custom_call.1} parent=11 // pred_check
          %p199 = pneg %p119
        $region22: #{tpu_custom_call.1} parent=11 // pred_check_branch
          %201 = sbr.rel (%p199) target = $region24
        $region23: #{tpu_custom_call.1} parent=11 // pred_region
          %s203 = ssub.s32 9216, 9216
          %204 = vsyncadd [#allocation7], %s203
          %s205 = sshll.u32 [#allocation8], 4
          %s206 = int_to_ptr.vmem [resolvable:$true] %s205
          %211 = dma.hbm_to_vmem [thread:$0]  %s3, 9216, %s206, [#allocation7], 64, 64, 4
        $region24: #{tpu_custom_call.1} parent=11 // pred_fallthru
          _
        // Predicated region
        $region25: #{tpu_custom_call.1} parent=11 // pred_check
          %p212 = pneg %p140
        $region26: #{tpu_custom_call.1} parent=11 // pred_check_branch
          %214 = sbr.rel (%p212) target = $region28
        $region27: #{tpu_custom_call.1} parent=11 // pred_region
          _
        $region28: #{tpu_custom_call.1} parent=11 // pred_fallthru
          _
      $region12: #{tpu_custom_call.1} parent=5 // pred_fallthru
        _
      %p215 = scmp.lt.s32.totalorder %s18, 2
      // Predicated region
      $region29: #{tpu_custom_call.1} parent=5 // pred_check
        %p216 = pneg %p215
      $region30: #{tpu_custom_call.1} parent=5 // pred_check_branch
        %218 = sbr.rel (%p216) target = $region32
      $region31: #{tpu_custom_call.1} parent=5 // pred_region
        // Predicated region
        $region33: #{tpu_custom_call.1} parent=31 // pred_check
          %p219 = pneg %p50
        $region34: #{tpu_custom_call.1} parent=31 // pred_check_branch
          %221 = sbr.rel (%p219) target = $region36
        $region35: #{tpu_custom_call.1} parent=31 // pred_region
          %s222 = sand.u32 %s40, 1
          %s223 = scalar_lea.sflag [#allocation4], %s222
          %s224 = sand.u32 %s40, 1
          %s225 = smul.addr %s224, 320
          %s226 = scalar_lea.vmem [#allocation3], %s225
          %s228 = ssub.s32 5120, 5120
          %229 = vsyncadd %s223, %s228
          %s230 = smul.addr %s25, 40
          %s231 = smul.addr %s230, 128
          %s232 = scalar_lea.hbm %s0, %s231
          %s233 = sshll.u32 %s226, 4
          %s234 = int_to_ptr.vmem [resolvable:$true] %s233
          %239 = dma.hbm_to_vmem [thread:$0]  %s232, 5120, %s234, %s223, 128, 128, 8
        $region36: #{tpu_custom_call.1} parent=31 // pred_fallthru
          _
      $region32: #{tpu_custom_call.1} parent=5 // pred_fallthru
        _
      %p240 = scmp.le.s32.totalorder 1, %s18
      %p241 = scmp.lt.s32.totalorder %s18, 3
      %p242 = pnand %p240, %p241
      %p243 = pneg %p242
      // Predicated region
      $region37: #{tpu_custom_call.1} parent=5 // pred_check
        _
      $region38: #{tpu_custom_call.1} parent=5 // pred_check_branch
        %245 = sbr.rel (%p242) target = $region40
      $region39: #{tpu_custom_call.1} parent=5 // pred_region
        %s246 = ssub.s32 %s18, 1
        %s247 = sand.u32 %s43, 1
        %s248 = scalar_lea.sflag [#allocation4], %s247
        %s249 = sand.u32 %s43, 1
        %s250 = smul.addr %s249, 320
        %s251 = scalar_lea.vmem [#allocation3], %s250
        // Predicated region
        $region41: #{tpu_custom_call.1} parent=39 // pred_check
          %p252 = pneg %p56
        $region42: #{tpu_custom_call.1} parent=39 // pred_check_branch
          %254 = sbr.rel (%p252) target = $region44
        $region43: #{tpu_custom_call.1} parent=39 // pred_region
          %255 = dma.done %s248, 5120
        $region44: #{tpu_custom_call.1} parent=39 // pred_fallthru
          _
        // Predicated region
        $region45: #{tpu_custom_call.1} parent=39 // pred_check
          %p256 = pneg %p77
        $region46: #{tpu_custom_call.1} parent=39 // pred_check_branch
          %258 = sbr.rel (%p256) target = $region48
        $region47: #{tpu_custom_call.1} parent=39 // pred_region
          %259 = dma.done [#allocation7], 9216
        $region48: #{tpu_custom_call.1} parent=39 // pred_fallthru
          _
        // Predicated region
        $region49: #{tpu_custom_call.1} parent=39 // pred_check
          %p260 = pneg %p119
        $region50: #{tpu_custom_call.1} parent=39 // pred_check_branch
          %262 = sbr.rel (%p260) target = $region52
        $region51: #{tpu_custom_call.1} parent=39 // pred_region
          %263 = dma.done [#allocation7], 9216
        $region52: #{tpu_custom_call.1} parent=39 // pred_fallthru
          _
        %s264 = sand.u32 %s43, 1
        %s265 = scalar_lea.sflag [#allocation4], %s264
        %s266 = sand.u32 %s43, 1
        %s267 = smul.addr %s266, 320
        %s268 = scalar_lea.vmem [#allocation3], %s267
        %p269 = pneg %p56
        %p270 = pneg %p53
        %p271 = pneg %p77
        %p272 = pneg %p74
        %p273 = pneg %p98
        %p274 = pneg %p95
        %p275 = pneg %p119
        %p276 = pneg %p116
        %p277 = pneg %p140
        %p278 = pneg %p137
        %p279 = pneg %p168
        %p280 = pneg %p165
        %s281 = sand.u32 %s155, 1
        %s282 = scalar_lea.sflag [#allocation5], %s281
        %s283 = sand.u32 %s155, 1
        %s284 = smul.addr %s283, 256
        %s285 = scalar_lea.vmem [#allocation9], %s284
        %s286 = smul.u32 16, %s28
        %s288 = smul.u32 %s28, 16
        %v289 = vlaneseq
        %v290 = vshrl.u32 %v289, 7
        %v291 = vadd.s32 %v290, 8
        %vm292 = vcmp.ne.s32.totalorder %v290, 0
        %vm293 = vcmp.ne.s32.totalorder %v291, 0
        %vm294 = vcmp.ne.s32.totalorder %v290, 15
        %vm295 = vcmp.ne.s32.totalorder %v291, 15
        %s296 = smul.u32 %s288, 16
        %s297 = scalar_lea.vmem %s251, %s296 [#allocation3]
        %v298 = vld [vmem:[%s297] sm:$0xff]
        %v299 = vld [vmem:[%s297 + $0x8] sm:$0xff]
        %v300 = vld [vmem:[%s297 + $0x10] sm:$0xff]
        %v301 = vld [vmem:[%s297 + $0x18] sm:$0xff]
        %v302 = vld [vmem:[%s297 + $0x20] sm:$0xff]
        %v303 = vld [vmem:[%s297 + $0x28] sm:$0xff]
        %v304 = vld [vmem:[%s297 + $0x30] sm:$0xff]
        %v305 = vld [vmem:[%s297 + $0x38] sm:$0xff]
        %v306 = vld [vmem:[%s297 + $0x40] sm:$0xff]
        %v307 = vld [vmem:[%s297 + $0x48] sm:$0xff]
        %v308 = vld [vmem:[%s297 + $0x50] sm:$0xff]
        %v309 = vld [vmem:[%s297 + $0x58] sm:$0xff]
        %v310 = vld [vmem:[%s297 + $0x60] sm:$0xff]
        %v311 = vld [vmem:[%s297 + $0x68] sm:$0xff]
        %v312 = vld [vmem:[%s297 + $0x70] sm:$0xff]
        %v313 = vld [vmem:[%s297 + $0x78] sm:$0xff]
        %v314 = vld [vmem:[%s297 + $0x80] sm:$0xff]
        %v315 = vld [vmem:[%s297 + $0x88] sm:$0xff]
        %v316 = vld [vmem:[%s297 + $0x90] sm:$0xff]
        %v317 = vld [vmem:[%s297 + $0x98] sm:$0xff]
        %v318 = vld [vmem:[%s297 + $0xa0] sm:$0xff]
        %v319 = vld [vmem:[%s297 + $0xa8] sm:$0xff]
        %v320 = vld [vmem:[%s297 + $0xb0] sm:$0xff]
        %v321 = vld [vmem:[%s297 + $0xb8] sm:$0xff]
        %v322 = vld [vmem:[%s297 + $0xc0] sm:$0xff]
        %v323 = vld [vmem:[%s297 + $0xc8] sm:$0xff]
        %v324 = vld [vmem:[%s297 + $0xd0] sm:$0xff]
        %v325 = vld [vmem:[%s297 + $0xd8] sm:$0xff]
        %v326 = vld [vmem:[%s297 + $0xe0] sm:$0xff]
        %v327 = vld [vmem:[%s297 + $0xe8] sm:$0xff]
        %v328 = vld [vmem:[%s297 + $0xf0] sm:$0xff]
        %v329 = vld [vmem:[%s297 + $0xf8] sm:$0xff]
        %v330 = vld [vmem:[%s297 + $0x100] sm:$0xff]
        %v331 = vld [vmem:[%s297 + $0x108] sm:$0xff]
        %v332 = vld [vmem:[%s297 + $0x110] sm:$0xff]
        %v333 = vld [vmem:[%s297 + $0x118] sm:$0xff]
        %v334 = vld [vmem:[%s297 + $0x120] sm:$0xff]
        %v335 = vld [vmem:[%s297 + $0x128] sm:$0xff]
        %v336 = vld [vmem:[%s297 + $0x130] sm:$0xff]
        %v337 = vld [vmem:[%s297 + $0x138] sm:$0xff]
        %v338 = vrot.slane %v298, 7
        %v339 = vrot.slane %v299, 7
        %v340 = vrot.slane %v300, 7
        %v341 = vrot.slane %v301, 7
        %v342 = vrot.slane %v302, 7
        %v343 = vrot.slane %v303, 7
        %v344 = vrot.slane %v304, 7
        %v345 = vrot.slane %v305, 7
        %v346 = vrot.slane %v306, 7
        %v347 = vrot.slane %v307, 7
        %v348 = vrot.slane %v308, 7
        %v349 = vrot.slane %v309, 7
        %v350 = vrot.slane %v310, 7
        %v351 = vrot.slane %v311, 7
        %v352 = vrot.slane %v312, 7
        %v353 = vrot.slane %v313, 7
        %v354 = vrot.slane %v314, 7
        %v355 = vrot.slane %v315, 7
        %v356 = vrot.slane %v316, 7
        %v357 = vrot.slane %v317, 7
        %v358 = vrot.slane %v318, 7
        %v359 = vrot.slane %v319, 7
        %v360 = vrot.slane %v320, 7
        %v361 = vrot.slane %v321, 7
        %v362 = vrot.slane %v322, 7
        %v363 = vrot.slane %v323, 7
        %v364 = vrot.slane %v324, 7
        %v365 = vrot.slane %v325, 7
        %v366 = vrot.slane %v326, 7
        %v367 = vrot.slane %v327, 7
        %v368 = vrot.slane %v328, 7
        %v369 = vrot.slane %v329, 7
        %v370 = vrot.slane %v330, 7
        %v371 = vrot.slane %v331, 7
        %v372 = vrot.slane %v332, 7
        %v373 = vrot.slane %v333, 7
        %v374 = vrot.slane %v334, 7
        %v375 = vrot.slane %v335, 7
        %v376 = vrot.slane %v336, 7
        %v377 = vrot.slane %v337, 7
        %vm378 = vcmp.lt.s32.totalorder %v290, 1
        %v379 = vsel %vm378, %v376, %v377
        %v380 = vsel %vm378, %v375, %v376
        %v381 = vsel %vm378, %v374, %v375
        %v382 = vsel %vm378, %v373, %v374
        %v383 = vsel %vm378, %v372, %v373
        %v384 = vsel %vm378, %v371, %v372
        %v385 = vsel %vm378, %v370, %v371
        %v386 = vsel %vm378, %v369, %v370
        %v387 = vsel %vm378, %v368, %v369
        %v388 = vsel %vm378, %v367, %v368
        %v389 = vsel %vm378, %v366, %v367
        %v390 = vsel %vm378, %v365, %v366
        %v391 = vsel %vm378, %v364, %v365
        %v392 = vsel %vm378, %v363, %v364
        %v393 = vsel %vm378, %v362, %v363
        %v394 = vsel %vm378, %v361, %v362
        %v395 = vsel %vm378, %v360, %v361
        %v396 = vsel %vm378, %v359, %v360
        %v397 = vsel %vm378, %v358, %v359
        %v398 = vsel %vm378, %v357, %v358
        %v399 = vsel %vm378, %v356, %v357
        %v400 = vsel %vm378, %v355, %v356
        %v401 = vsel %vm378, %v354, %v355
        %v402 = vsel %vm378, %v353, %v354
        %v403 = vsel %vm378, %v352, %v353
        %v404 = vsel %vm378, %v351, %v352
        %v405 = vsel %vm378, %v350, %v351
        %v406 = vsel %vm378, %v349, %v350
        %v407 = vsel %vm378, %v348, %v349
        %v408 = vsel %vm378, %v347, %v348
        %v409 = vsel %vm378, %v346, %v347
        %v410 = vsel %vm378, %v345, %v346
        %v411 = vsel %vm378, %v344, %v345
        %v412 = vsel %vm378, %v343, %v344
        %v413 = vsel %vm378, %v342, %v343
        %v414 = vsel %vm378, %v341, %v342
        %v415 = vsel %vm378, %v340, %v341
        %v416 = vsel %vm378, %v339, %v340
        %v417 = vsel %vm378, %v338, %v339
        %v418 = vsel %vm378, %v377, %v338
        %v419 = vsel %vm292, %v418, 0.0
        %v420 = vsel %vm293, %v417, 0.0
        %v421 = vsel %vm292, %v416, 0.0
        %v422 = vsel %vm293, %v415, 0.0
        %v423 = vsel %vm292, %v414, 0.0
        %v424 = vsel %vm293, %v413, 0.0
        %v425 = vsel %vm292, %v412, 0.0
        %v426 = vsel %vm293, %v411, 0.0
        %v427 = vsel %vm292, %v410, 0.0
        %v428 = vsel %vm293, %v409, 0.0
        %v429 = vsel %vm292, %v408, 0.0
        %v430 = vsel %vm293, %v407, 0.0
        %v431 = vsel %vm292, %v406, 0.0
        %v432 = vsel %vm293, %v405, 0.0
        %v433 = vsel %vm292, %v404, 0.0
        %v434 = vsel %vm293, %v403, 0.0
        %v435 = vsel %vm292, %v402, 0.0
        %v436 = vsel %vm293, %v401, 0.0
        %v437 = vsel %vm292, %v400, 0.0
        %v438 = vsel %vm293, %v399, 0.0
        %v439 = vsel %vm292, %v398, 0.0
        %v440 = vsel %vm293, %v397, 0.0
        %v441 = vsel %vm292, %v396, 0.0
        %v442 = vsel %vm293, %v395, 0.0
        %v443 = vsel %vm292, %v394, 0.0
        %v444 = vsel %vm293, %v393, 0.0
        %v445 = vsel %vm292, %v392, 0.0
        %v446 = vsel %vm293, %v391, 0.0
        %v447 = vsel %vm292, %v390, 0.0
        %v448 = vsel %vm293, %v389, 0.0
        %v449 = vsel %vm292, %v388, 0.0
        %v450 = vsel %vm293, %v387, 0.0
        %v451 = vsel %vm292, %v386, 0.0
        %v452 = vsel %vm293, %v385, 0.0
        %v453 = vsel %vm292, %v384, 0.0
        %v454 = vsel %vm293, %v383, 0.0
        %v455 = vsel %vm292, %v382, 0.0
        %v456 = vsel %vm293, %v381, 0.0
        %v457 = vsel %vm292, %v380, 0.0
        %v458 = vsel %vm293, %v379, 0.0
        %v459 = vrot.slane %v298, 1
        %v460 = vrot.slane %v299, 1
        %v461 = vrot.slane %v300, 1
        %v462 = vrot.slane %v301, 1
        %v463 = vrot.slane %v302, 1
        %v464 = vrot.slane %v303, 1
        %v465 = vrot.slane %v304, 1
        %v466 = vrot.slane %v305, 1
        %v467 = vrot.slane %v306, 1
        %v468 = vrot.slane %v307, 1
        %v469 = vrot.slane %v308, 1
        %v470 = vrot.slane %v309, 1
        %v471 = vrot.slane %v310, 1
        %v472 = vrot.slane %v311, 1
        %v473 = vrot.slane %v312, 1
        %v474 = vrot.slane %v313, 1
        %v475 = vrot.slane %v314, 1
        %v476 = vrot.slane %v315, 1
        %v477 = vrot.slane %v316, 1
        %v478 = vrot.slane %v317, 1
        %v479 = vrot.slane %v318, 1
        %v480 = vrot.slane %v319, 1
        %v481 = vrot.slane %v320, 1
        %v482 = vrot.slane %v321, 1
        %v483 = vrot.slane %v322, 1
        %v484 = vrot.slane %v323, 1
        %v485 = vrot.slane %v324, 1
        %v486 = vrot.slane %v325, 1
        %v487 = vrot.slane %v326, 1
        %v488 = vrot.slane %v327, 1
        %v489 = vrot.slane %v328, 1
        %v490 = vrot.slane %v329, 1
        %v491 = vrot.slane %v330, 1
        %v492 = vrot.slane %v331, 1
        %v493 = vrot.slane %v332, 1
        %v494 = vrot.slane %v333, 1
        %v495 = vrot.slane %v334, 1
        %v496 = vrot.slane %v335, 1
        %v497 = vrot.slane %v336, 1
        %v498 = vrot.slane %v337, 1
        %vm499 = vcmp.lt.s32.totalorder %v290, 7
        %v500 = vsel %vm499, %v497, %v498
        %v501 = vsel %vm499, %v496, %v497
        %v502 = vsel %vm499, %v495, %v496
        %v503 = vsel %vm499, %v494, %v495
        %v504 = vsel %vm499, %v493, %v494
        %v505 = vsel %vm499, %v492, %v493
        %v506 = vsel %vm499, %v491, %v492
        %v507 = vsel %vm499, %v490, %v491
        %v508 = vsel %vm499, %v489, %v490
        %v509 = vsel %vm499, %v488, %v489
        %v510 = vsel %vm499, %v487, %v488
        %v511 = vsel %vm499, %v486, %v487
        %v512 = vsel %vm499, %v485, %v486
        %v513 = vsel %vm499, %v484, %v485
        %v514 = vsel %vm499, %v483, %v484
        %v515 = vsel %vm499, %v482, %v483
        %v516 = vsel %vm499, %v481, %v482
        %v517 = vsel %vm499, %v480, %v481
        %v518 = vsel %vm499, %v479, %v480
        %v519 = vsel %vm499, %v478, %v479
        %v520 = vsel %vm499, %v477, %v478
        %v521 = vsel %vm499, %v476, %v477
        %v522 = vsel %vm499, %v475, %v476
        %v523 = vsel %vm499, %v474, %v475
        %v524 = vsel %vm499, %v473, %v474
        %v525 = vsel %vm499, %v472, %v473
        %v526 = vsel %vm499, %v471, %v472
        %v527 = vsel %vm499, %v470, %v471
        %v528 = vsel %vm499, %v469, %v470
        %v529 = vsel %vm499, %v468, %v469
        %v530 = vsel %vm499, %v467, %v468
        %v531 = vsel %vm499, %v466, %v467
        %v532 = vsel %vm499, %v465, %v466
        %v533 = vsel %vm499, %v464, %v465
        %v534 = vsel %vm499, %v463, %v464
        %v535 = vsel %vm499, %v462, %v463
        %v536 = vsel %vm499, %v461, %v462
        %v537 = vsel %vm499, %v460, %v461
        %v538 = vsel %vm499, %v459, %v460
        %v539 = vsel %vm499, %v498, %v459
        %v540 = vsel %vm294, %v538, 0.0
        %v541 = vsel %vm295, %v537, 0.0
        %v542 = vsel %vm294, %v536, 0.0
        %v543 = vsel %vm295, %v535, 0.0
        %v544 = vsel %vm294, %v534, 0.0
        %v545 = vsel %vm295, %v533, 0.0
        %v546 = vsel %vm294, %v532, 0.0
        %v547 = vsel %vm295, %v531, 0.0
        %v548 = vsel %vm294, %v530, 0.0
        %v549 = vsel %vm295, %v529, 0.0
        %v550 = vsel %vm294, %v528, 0.0
        %v551 = vsel %vm295, %v527, 0.0
        %v552 = vsel %vm294, %v526, 0.0
        %v553 = vsel %vm295, %v525, 0.0
        %v554 = vsel %vm294, %v524, 0.0
        %v555 = vsel %vm295, %v523, 0.0
        %v556 = vsel %vm294, %v522, 0.0
        %v557 = vsel %vm295, %v521, 0.0
        %v558 = vsel %vm294, %v520, 0.0
        %v559 = vsel %vm295, %v519, 0.0
        %v560 = vsel %vm294, %v518, 0.0
        %v561 = vsel %vm295, %v517, 0.0
        %v562 = vsel %vm294, %v516, 0.0
        %v563 = vsel %vm295, %v515, 0.0
        %v564 = vsel %vm294, %v514, 0.0
        %v565 = vsel %vm295, %v513, 0.0
        %v566 = vsel %vm294, %v512, 0.0
        %v567 = vsel %vm295, %v511, 0.0
        %v568 = vsel %vm294, %v510, 0.0
        %v569 = vsel %vm295, %v509, 0.0
        %v570 = vsel %vm294, %v508, 0.0
        %v571 = vsel %vm295, %v507, 0.0
        %v572 = vsel %vm294, %v506, 0.0
        %v573 = vsel %vm295, %v505, 0.0
        %v574 = vsel %vm294, %v504, 0.0
        %v575 = vsel %vm295, %v503, 0.0
        %v576 = vsel %vm294, %v502, 0.0
        %v577 = vsel %vm295, %v501, 0.0
        %v578 = vsel %vm294, %v500, 0.0
        %v579 = vsel %vm295, %v539, 0.0
        %v580 = vpack.c.bf16 %v420, %v419
        %v581 = vpack.c.bf16 %v422, %v421
        %v582 = vpack.c.bf16 %v424, %v423
        %v583 = vpack.c.bf16 %v426, %v425
        %v584 = vpack.c.bf16 %v428, %v427
        %v585 = vpack.c.bf16 %v430, %v429
        %v586 = vpack.c.bf16 %v432, %v431
        %v587 = vpack.c.bf16 %v434, %v433
        %v588 = vpack.c.bf16 %v436, %v435
        %v589 = vpack.c.bf16 %v438, %v437
        %v590 = vpack.c.bf16 %v440, %v439
        %v591 = vpack.c.bf16 %v442, %v441
        %v592 = vpack.c.bf16 %v444, %v443
        %v593 = vpack.c.bf16 %v446, %v445
        %v594 = vpack.c.bf16 %v448, %v447
        %v595 = vpack.c.bf16 %v450, %v449
        %v596 = vpack.c.bf16 %v452, %v451
        %v597 = vpack.c.bf16 %v454, %v453
        %v598 = vpack.c.bf16 %v456, %v455
        %v599 = vpack.c.bf16 %v458, %v457
        %v600 = vpack.c.bf16 %v299, %v298
        %v601 = vpack.c.bf16 %v301, %v300
        %v602 = vpack.c.bf16 %v303, %v302
        %v603 = vpack.c.bf16 %v305, %v304
        %v604 = vpack.c.bf16 %v307, %v306
        %v605 = vpack.c.bf16 %v309, %v308
        %v606 = vpack.c.bf16 %v311, %v310
        %v607 = vpack.c.bf16 %v313, %v312
        %v608 = vpack.c.bf16 %v315, %v314
        %v609 = vpack.c.bf16 %v317, %v316
        %v610 = vpack.c.bf16 %v319, %v318
        %v611 = vpack.c.bf16 %v321, %v320
        %v612 = vpack.c.bf16 %v323, %v322
        %v613 = vpack.c.bf16 %v325, %v324
        %v614 = vpack.c.bf16 %v327, %v326
        %v615 = vpack.c.bf16 %v329, %v328
        %v616 = vpack.c.bf16 %v331, %v330
        %v617 = vpack.c.bf16 %v333, %v332
        %v618 = vpack.c.bf16 %v335, %v334
        %v619 = vpack.c.bf16 %v337, %v336
        %v620 = vpack.c.bf16 %v541, %v540
        %v621 = vpack.c.bf16 %v543, %v542
        %v622 = vpack.c.bf16 %v545, %v544
        %v623 = vpack.c.bf16 %v547, %v546
        %v624 = vpack.c.bf16 %v549, %v548
        %v625 = vpack.c.bf16 %v551, %v550
        %v626 = vpack.c.bf16 %v553, %v552
        %v627 = vpack.c.bf16 %v555, %v554
        %v628 = vpack.c.bf16 %v557, %v556
        %v629 = vpack.c.bf16 %v559, %v558
        %v630 = vpack.c.bf16 %v561, %v560
        %v631 = vpack.c.bf16 %v563, %v562
        %v632 = vpack.c.bf16 %v565, %v564
        %v633 = vpack.c.bf16 %v567, %v566
        %v634 = vpack.c.bf16 %v569, %v568
        %v635 = vpack.c.bf16 %v571, %v570
        %v636 = vpack.c.bf16 %v573, %v572
        %v637 = vpack.c.bf16 %v575, %v574
        %v638 = vpack.c.bf16 %v577, %v576
        %v639 = vpack.c.bf16 %v579, %v578
        %v640 = vld [vmem:[#allocation6] sm:$0xf]
        %v641 = vld [vmem:[#allocation6 + $0x4] sm:$0xf]
        %v642 = vld [vmem:[#allocation6 + $0x8] sm:$0xf]
        %v643 = vld [vmem:[#allocation6 + $0xc] sm:$0xf]
        %v644 = vld [vmem:[#allocation6 + $0x10] sm:$0xf]
        %v645 = vld [vmem:[#allocation6 + $0x14] sm:$0xf]
        %v646 = vld [vmem:[#allocation6 + $0x18] sm:$0xf]
        %v647 = vld [vmem:[#allocation6 + $0x1c] sm:$0xf]
        %v648 = vld [vmem:[#allocation6 + $0x20] sm:$0xf]
        %v649 = vld [vmem:[#allocation6 + $0x24] sm:$0xf]
        %v650 = vld [vmem:[#allocation6 + $0x28] sm:$0xf]
        %v651 = vld [vmem:[#allocation6 + $0x2c] sm:$0xf]
        %v652 = vld [vmem:[#allocation6 + $0x30] sm:$0xf]
        %v653 = vld [vmem:[#allocation6 + $0x34] sm:$0xf]
        %v654 = vld [vmem:[#allocation6 + $0x38] sm:$0xf]
        %v655 = vld [vmem:[#allocation6 + $0x3c] sm:$0xf]
        %v656 = vld [vmem:[#allocation6 + $0x40] sm:$0xf]
        %v657 = vld [vmem:[#allocation6 + $0x44] sm:$0xf]
        %v658 = vld [vmem:[#allocation6 + $0x48] sm:$0xf]
        %v659 = vld [vmem:[#allocation6 + $0x4c] sm:$0xf]
        %v660 = vld [vmem:[#allocation6 + $0x50] sm:$0xf]
        %v661 = vld [vmem:[#allocation6 + $0x54] sm:$0xf]
        %v662 = vld [vmem:[#allocation6 + $0x58] sm:$0xf]
        %v663 = vld [vmem:[#allocation6 + $0x5c] sm:$0xf]
        %v664 = vld [vmem:[#allocation6 + $0x60] sm:$0xf]
        %v665 = vld [vmem:[#allocation6 + $0x64] sm:$0xf]
        %v666 = vld [vmem:[#allocation6 + $0x68] sm:$0xf]
        %v667 = vld [vmem:[#allocation6 + $0x6c] sm:$0xf]
        %v668 = vld [vmem:[#allocation6 + $0x70] sm:$0xf]
        %v669 = vld [vmem:[#allocation6 + $0x74] sm:$0xf]
        %v670 = vld [vmem:[#allocation6 + $0x78] sm:$0xf]
        %v671 = vld [vmem:[#allocation6 + $0x7c] sm:$0xf]
        %v672 = vld [vmem:[#allocation6 + $0x80] sm:$0xf]
        %v673 = vld [vmem:[#allocation6 + $0x84] sm:$0xf]
        %v674 = vld [vmem:[#allocation6 + $0x88] sm:$0xf]
        %v675 = vld [vmem:[#allocation6 + $0x8c] sm:$0xf]
        %v676 = vld [vmem:[#allocation6 + $0x90] sm:$0xf]
        %v677 = vld [vmem:[#allocation6 + $0x94] sm:$0xf]
        %v678 = vld [vmem:[#allocation6 + $0x98] sm:$0xf]
        %v679 = vld [vmem:[#allocation6 + $0x9c] sm:$0xf]
        %v680 = vld [vmem:[#allocation6 + $0xa0] sm:$0xf]
        %v681 = vld [vmem:[#allocation6 + $0xa4] sm:$0xf]
        %v682 = vld [vmem:[#allocation6 + $0xa8] sm:$0xf]
        %v683 = vld [vmem:[#allocation6 + $0xac] sm:$0xf]
        %v684 = vld [vmem:[#allocation6 + $0xb0] sm:$0xf]
        %v685 = vld [vmem:[#allocation6 + $0xb4] sm:$0xf]
        %v686 = vld [vmem:[#allocation6 + $0xb8] sm:$0xf]
        %v687 = vld [vmem:[#allocation6 + $0xbc] sm:$0xf]
        %v688 = vld [vmem:[#allocation6 + $0xc0] sm:$0xf]
        %v689 = vld [vmem:[#allocation6 + $0xc4] sm:$0xf]
        %v690 = vld [vmem:[#allocation6 + $0xc8] sm:$0xf]
        %v691 = vld [vmem:[#allocation6 + $0xcc] sm:$0xf]
        %v692 = vld [vmem:[#allocation6 + $0xd0] sm:$0xf]
        %v693 = vld [vmem:[#allocation6 + $0xd4] sm:$0xf]
        %v694 = vld [vmem:[#allocation6 + $0xd8] sm:$0xf]
        %v695 = vld [vmem:[#allocation6 + $0xdc] sm:$0xf]
        %v696 = vld [vmem:[#allocation6 + $0xe0] sm:$0xf]
        %v697 = vld [vmem:[#allocation6 + $0xe4] sm:$0xf]
        %v698 = vld [vmem:[#allocation6 + $0xe8] sm:$0xf]
        %v699 = vld [vmem:[#allocation6 + $0xec] sm:$0xf]
        %v700 = vld [vmem:[#allocation6 + $0xf0] sm:$0xf]
        %v701 = vld [vmem:[#allocation6 + $0xf4] sm:$0xf]
        %v702 = vld [vmem:[#allocation6 + $0xf8] sm:$0xf]
        %v703 = vld [vmem:[#allocation6 + $0xfc] sm:$0xf]
        %v704 = vld [vmem:[#allocation6 + $0x100] sm:$0xf]
        %v705 = vld [vmem:[#allocation6 + $0x104] sm:$0xf]
        %v706 = vld [vmem:[#allocation6 + $0x108] sm:$0xf]
        %v707 = vld [vmem:[#allocation6 + $0x10c] sm:$0xf]
        %v708 = vld [vmem:[#allocation6 + $0x110] sm:$0xf]
        %v709 = vld [vmem:[#allocation6 + $0x114] sm:$0xf]
        %v710 = vld [vmem:[#allocation6 + $0x118] sm:$0xf]
        %v711 = vld [vmem:[#allocation6 + $0x11c] sm:$0xf]
        %v712 = vld [vmem:[#allocation6 + $0x120] sm:$0xf]
        %v713 = vld [vmem:[#allocation6 + $0x124] sm:$0xf]
        %v714 = vld [vmem:[#allocation6 + $0x128] sm:$0xf]
        %v715 = vld [vmem:[#allocation6 + $0x12c] sm:$0xf]
        %v716 = vld [vmem:[#allocation6 + $0x130] sm:$0xf]
        %v717 = vld [vmem:[#allocation6 + $0x134] sm:$0xf]
        %v718 = vld [vmem:[#allocation6 + $0x138] sm:$0xf]
        %v719 = vld [vmem:[#allocation6 + $0x13c] sm:$0xf]
        %v720 = vld [vmem:[#allocation6 + $0x140] sm:$0xf]
        %v721 = vld [vmem:[#allocation6 + $0x144] sm:$0xf]
        %v722 = vld [vmem:[#allocation6 + $0x148] sm:$0xf]
        %v723 = vld [vmem:[#allocation6 + $0x14c] sm:$0xf]
        %v724 = vld [vmem:[#allocation6 + $0x150] sm:$0xf]
        %v725 = vld [vmem:[#allocation6 + $0x154] sm:$0xf]
        %v726 = vld [vmem:[#allocation6 + $0x158] sm:$0xf]
        %v727 = vld [vmem:[#allocation6 + $0x15c] sm:$0xf]
        %v728 = vld [vmem:[#allocation6 + $0x160] sm:$0xf]
        %v729 = vld [vmem:[#allocation6 + $0x164] sm:$0xf]
        %v730 = vld [vmem:[#allocation6 + $0x168] sm:$0xf]
        %v731 = vld [vmem:[#allocation6 + $0x16c] sm:$0xf]
        %v732 = vld [vmem:[#allocation6 + $0x170] sm:$0xf]
        %v733 = vld [vmem:[#allocation6 + $0x174] sm:$0xf]
        %v734 = vld [vmem:[#allocation6 + $0x178] sm:$0xf]
        %v735 = vld [vmem:[#allocation6 + $0x17c] sm:$0xf]
        %v736 = vld [vmem:[#allocation6 + $0x180] sm:$0xf]
        %v737 = vld [vmem:[#allocation6 + $0x184] sm:$0xf]
        %v738 = vld [vmem:[#allocation6 + $0x188] sm:$0xf]
        %v739 = vld [vmem:[#allocation6 + $0x18c] sm:$0xf]
        %v740 = vld [vmem:[#allocation6 + $0x190] sm:$0xf]
        %v741 = vld [vmem:[#allocation6 + $0x194] sm:$0xf]
        %v742 = vld [vmem:[#allocation6 + $0x198] sm:$0xf]
        %v743 = vld [vmem:[#allocation6 + $0x19c] sm:$0xf]
        %v744 = vld [vmem:[#allocation6 + $0x1a0] sm:$0xf]
        %v745 = vld [vmem:[#allocation6 + $0x1a4] sm:$0xf]
        %v746 = vld [vmem:[#allocation6 + $0x1a8] sm:$0xf]
        %v747 = vld [vmem:[#allocation6 + $0x1ac] sm:$0xf]
        %v748 = vld [vmem:[#allocation6 + $0x1b0] sm:$0xf]
        %v749 = vld [vmem:[#allocation6 + $0x1b4] sm:$0xf]
        %v750 = vld [vmem:[#allocation6 + $0x1b8] sm:$0xf]
        %v751 = vld [vmem:[#allocation6 + $0x1bc] sm:$0xf]
        %v752 = vld [vmem:[#allocation6 + $0x1c0] sm:$0xf]
        %v753 = vld [vmem:[#allocation6 + $0x1c4] sm:$0xf]
        %v754 = vld [vmem:[#allocation6 + $0x1c8] sm:$0xf]
        %v755 = vld [vmem:[#allocation6 + $0x1cc] sm:$0xf]
        %v756 = vld [vmem:[#allocation6 + $0x1d0] sm:$0xf]
        %v757 = vld [vmem:[#allocation6 + $0x1d4] sm:$0xf]
        %v758 = vld [vmem:[#allocation6 + $0x1d8] sm:$0xf]
        %v759 = vld [vmem:[#allocation6 + $0x1dc] sm:$0xf]
        %v760 = vld [vmem:[#allocation6 + $0x1e0] sm:$0xf]
        %v761 = vld [vmem:[#allocation6 + $0x1e4] sm:$0xf]
        %v762 = vld [vmem:[#allocation6 + $0x1e8] sm:$0xf]
        %v763 = vld [vmem:[#allocation6 + $0x1ec] sm:$0xf]
        %v764 = vld [vmem:[#allocation6 + $0x1f0] sm:$0xf]
        %v765 = vld [vmem:[#allocation6 + $0x1f4] sm:$0xf]
        %v766 = vld [vmem:[#allocation6 + $0x1f8] sm:$0xf]
        %v767 = vld [vmem:[#allocation6 + $0x1fc] sm:$0xf]
        %v768 = vld [vmem:[#allocation6 + $0x200] sm:$0xf]
        %v769 = vld [vmem:[#allocation6 + $0x204] sm:$0xf]
        %v770 = vld [vmem:[#allocation6 + $0x208] sm:$0xf]
        %v771 = vld [vmem:[#allocation6 + $0x20c] sm:$0xf]
        %v772 = vld [vmem:[#allocation6 + $0x210] sm:$0xf]
        %v773 = vld [vmem:[#allocation6 + $0x214] sm:$0xf]
        %v774 = vld [vmem:[#allocation6 + $0x218] sm:$0xf]
        %v775 = vld [vmem:[#allocation6 + $0x21c] sm:$0xf]
        %v776 = vld [vmem:[#allocation6 + $0x220] sm:$0xf]
        %v777 = vld [vmem:[#allocation6 + $0x224] sm:$0xf]
        %v778 = vld [vmem:[#allocation6 + $0x228] sm:$0xf]
        %v779 = vld [vmem:[#allocation6 + $0x22c] sm:$0xf]
        %v780 = vld [vmem:[#allocation6 + $0x230] sm:$0xf]
        %v781 = vld [vmem:[#allocation6 + $0x234] sm:$0xf]
        %v782 = vld [vmem:[#allocation6 + $0x238] sm:$0xf]
        %v783 = vld [vmem:[#allocation6 + $0x23c] sm:$0xf]
        %v784 = vld [vmem:[%s2] sm:$0x1]
        %v786 = vlaneseq
        %v787 = vshrl.u32 %v786, 7
        %v788 = vsub.s32 0, %v787
        %v789 = vrot.slane %v784, %v788
        %v935 = vunpack.c.l.b16 %v640
        %v936 = vunpack.c.l.b16 %v641
        %v937 = vunpack.c.l.b16 %v642
        %v938 = vunpack.c.l.b16 %v643
        %v939 = vunpack.c.l.b16 %v644
        %v940 = vunpack.c.l.b16 %v645
        %v941 = vunpack.c.l.b16 %v646
        %v942 = vunpack.c.l.b16 %v647
        %v943 = vunpack.c.l.b16 %v648
        %v944 = vunpack.c.l.b16 %v649
        %v945 = vunpack.c.l.b16 %v650
        %v946 = vunpack.c.l.b16 %v651
        %v947 = vunpack.c.l.b16 %v652
        %v948 = vunpack.c.l.b16 %v653
        %v949 = vunpack.c.l.b16 %v654
        %v950 = vunpack.c.l.b16 %v655
        %v951 = vunpack.c.l.b16 %v656
        %v952 = vunpack.c.l.b16 %v657
        %v953 = vunpack.c.l.b16 %v658
        %v954 = vunpack.c.l.b16 %v659
        %v955 = vunpack.c.l.b16 %v660
        %v956 = vunpack.c.l.b16 %v661
        %v957 = vunpack.c.l.b16 %v662
        %v958 = vunpack.c.l.b16 %v663
        %v959 = vunpack.c.l.b16 %v664
        %v960 = vunpack.c.l.b16 %v665
        %v961 = vunpack.c.l.b16 %v666
        %v962 = vunpack.c.l.b16 %v667
        %v963 = vunpack.c.l.b16 %v668
        %v964 = vunpack.c.l.b16 %v669
        %v965 = vunpack.c.l.b16 %v670
        %v966 = vunpack.c.l.b16 %v671
        %v967 = vunpack.c.l.b16 %v672
        %v968 = vunpack.c.l.b16 %v673
        %v969 = vunpack.c.l.b16 %v674
        %v970 = vunpack.c.l.b16 %v675
        %v971 = vunpack.c.l.b16 %v676
        %v972 = vunpack.c.l.b16 %v677
        %v973 = vunpack.c.l.b16 %v678
        %v974 = vunpack.c.l.b16 %v679
        %v975 = vunpack.c.l.b16 %v680
        %v976 = vunpack.c.l.b16 %v681
        %v977 = vunpack.c.l.b16 %v682
        %v978 = vunpack.c.l.b16 %v683
        %v979 = vunpack.c.l.b16 %v684
        %v980 = vunpack.c.l.b16 %v685
        %v981 = vunpack.c.l.b16 %v686
        %v982 = vunpack.c.l.b16 %v687
        %v983 = vunpack.c.l.b16 %v688
        %v984 = vunpack.c.l.b16 %v689
        %v985 = vunpack.c.l.b16 %v690
        %v986 = vunpack.c.l.b16 %v691
        %v987 = vunpack.c.l.b16 %v692
        %v988 = vunpack.c.l.b16 %v693
        %v989 = vunpack.c.l.b16 %v694
        %v990 = vunpack.c.l.b16 %v695
        %v991 = vunpack.c.l.b16 %v696
        %v992 = vunpack.c.l.b16 %v697
        %v993 = vunpack.c.l.b16 %v698
        %v994 = vunpack.c.l.b16 %v699
        %v995 = vunpack.c.l.b16 %v700
        %v996 = vunpack.c.l.b16 %v701
        %v997 = vunpack.c.l.b16 %v702
        %v998 = vunpack.c.l.b16 %v703
        %v999 = vunpack.c.l.b16 %v704
        %v1000 = vunpack.c.l.b16 %v705
        %v1001 = vunpack.c.l.b16 %v706
        %v1002 = vunpack.c.l.b16 %v707
        %v1003 = vunpack.c.l.b16 %v708
        %v1004 = vunpack.c.l.b16 %v709
        %v1005 = vunpack.c.l.b16 %v710
        %v1006 = vunpack.c.l.b16 %v711
        %v1007 = vunpack.c.l.b16 %v712
        %v1008 = vunpack.c.l.b16 %v713
        %v1009 = vunpack.c.l.b16 %v714
        %v1010 = vunpack.c.l.b16 %v715
        %v1011 = vunpack.c.l.b16 %v716
        %v1012 = vunpack.c.l.b16 %v717
        %v1013 = vunpack.c.l.b16 %v718
        %v1014 = vunpack.c.l.b16 %v719
        %v1015 = vunpack.c.l.b16 %v720
        %v1016 = vunpack.c.l.b16 %v721
        %v1017 = vunpack.c.l.b16 %v722
        %v1018 = vunpack.c.l.b16 %v723
        %v1019 = vunpack.c.l.b16 %v724
        %v1020 = vunpack.c.l.b16 %v725
        %v1021 = vunpack.c.l.b16 %v726
        %v1022 = vunpack.c.l.b16 %v727
        %v1023 = vunpack.c.l.b16 %v728
        %v1024 = vunpack.c.l.b16 %v729
        %v1025 = vunpack.c.l.b16 %v730
        %v1026 = vunpack.c.l.b16 %v731
        %v1027 = vunpack.c.l.b16 %v732
        %v1028 = vunpack.c.l.b16 %v733
        %v1029 = vunpack.c.l.b16 %v734
        %v1030 = vunpack.c.l.b16 %v735
        %v1031 = vunpack.c.l.b16 %v736
        %v1032 = vunpack.c.l.b16 %v737
        %v1033 = vunpack.c.l.b16 %v738
        %v1034 = vunpack.c.l.b16 %v739
        %v1035 = vunpack.c.l.b16 %v740
        %v1036 = vunpack.c.l.b16 %v741
        %v1037 = vunpack.c.l.b16 %v742
        %v1038 = vunpack.c.l.b16 %v743
        %v1039 = vunpack.c.l.b16 %v744
        %v1040 = vunpack.c.l.b16 %v745
        %v1041 = vunpack.c.l.b16 %v746
        %v1042 = vunpack.c.l.b16 %v747
        %v1043 = vunpack.c.l.b16 %v748
        %v1044 = vunpack.c.l.b16 %v749
        %v1045 = vunpack.c.l.b16 %v750
        %v1046 = vunpack.c.l.b16 %v751
        %v1047 = vunpack.c.l.b16 %v752
        %v1048 = vunpack.c.l.b16 %v753
        %v1049 = vunpack.c.l.b16 %v754
        %v1050 = vunpack.c.l.b16 %v755
        %v1051 = vunpack.c.l.b16 %v756
        %v1052 = vunpack.c.l.b16 %v757
        %v1053 = vunpack.c.l.b16 %v758
        %v1054 = vunpack.c.l.b16 %v759
        %v1055 = vunpack.c.l.b16 %v760
        %v1056 = vunpack.c.l.b16 %v761
        %v1057 = vunpack.c.l.b16 %v762
        %v1058 = vunpack.c.l.b16 %v763
        %v1059 = vunpack.c.l.b16 %v764
        %v1060 = vunpack.c.l.b16 %v765
        %v1061 = vunpack.c.l.b16 %v766
        %v1062 = vunpack.c.l.b16 %v767
        %v1063 = vunpack.c.l.b16 %v768
        %v1064 = vunpack.c.l.b16 %v769
        %v1065 = vunpack.c.l.b16 %v770
        %v1066 = vunpack.c.l.b16 %v771
        %v1067 = vunpack.c.l.b16 %v772
        %v1068 = vunpack.c.l.b16 %v773
        %v1069 = vunpack.c.l.b16 %v774
        %v1070 = vunpack.c.l.b16 %v775
        %v1071 = vunpack.c.l.b16 %v776
        %v1072 = vunpack.c.l.b16 %v777
        %v1073 = vunpack.c.l.b16 %v778
        %v1074 = vunpack.c.l.b16 %v779
        %v1075 = vunpack.c.l.b16 %v780
        %v1076 = vunpack.c.l.b16 %v781
        %v1077 = vunpack.c.l.b16 %v782
        %v1078 = vunpack.c.l.b16 %v783
        %v1079 = vpack.c.b16 %v936, %v935
        %v1080 = vpack.c.b16 %v938, %v937
        %v1081 = vpack.c.b16 %v940, %v939
        %v1082 = vpack.c.b16 %v942, %v941
        %v1083 = vpack.c.b16 %v944, %v943
        %v1084 = vpack.c.b16 %v946, %v945
        %v1085 = vpack.c.b16 %v948, %v947
        %v1086 = vpack.c.b16 %v950, %v949
        %v1087 = vpack.c.b16 %v952, %v951
        %v1088 = vpack.c.b16 %v954, %v953
        %v1089 = vpack.c.b16 %v956, %v955
        %v1090 = vpack.c.b16 %v958, %v957
        %v1091 = vpack.c.b16 %v960, %v959
        %v1092 = vpack.c.b16 %v962, %v961
        %v1093 = vpack.c.b16 %v964, %v963
        %v1094 = vpack.c.b16 %v966, %v965
        %v1095 = vpack.c.b16 %v968, %v967
        %v1096 = vpack.c.b16 %v970, %v969
        %v1097 = vpack.c.b16 %v972, %v971
        %v1098 = vpack.c.b16 %v974, %v973
        %v1099 = vpack.c.b16 %v976, %v975
        %v1100 = vpack.c.b16 %v978, %v977
        %v1101 = vpack.c.b16 %v980, %v979
        %v1102 = vpack.c.b16 %v982, %v981
        %v1103 = vpack.c.b16 %v984, %v983
        %v1104 = vpack.c.b16 %v986, %v985
        %v1105 = vpack.c.b16 %v988, %v987
        %v1106 = vpack.c.b16 %v990, %v989
        %v1107 = vpack.c.b16 %v992, %v991
        %v1108 = vpack.c.b16 %v994, %v993
        %v1109 = vpack.c.b16 %v996, %v995
        %v1110 = vpack.c.b16 %v998, %v997
        %v1111 = vpack.c.b16 %v1000, %v999
        %v1112 = vpack.c.b16 %v1002, %v1001
        %v1113 = vpack.c.b16 %v1004, %v1003
        %v1114 = vpack.c.b16 %v1006, %v1005
        %v1115 = vpack.c.b16 %v1008, %v1007
        %v1116 = vpack.c.b16 %v1010, %v1009
        %v1117 = vpack.c.b16 %v1012, %v1011
        %v1118 = vpack.c.b16 %v1014, %v1013
        %v1119 = vpack.c.b16 %v1016, %v1015
        %v1120 = vpack.c.b16 %v1018, %v1017
        %v1121 = vpack.c.b16 %v1020, %v1019
        %v1122 = vpack.c.b16 %v1022, %v1021
        %v1123 = vpack.c.b16 %v1024, %v1023
        %v1124 = vpack.c.b16 %v1026, %v1025
        %v1125 = vpack.c.b16 %v1028, %v1027
        %v1126 = vpack.c.b16 %v1030, %v1029
        %v1127 = vpack.c.b16 %v1032, %v1031
        %v1128 = vpack.c.b16 %v1034, %v1033
        %v1129 = vpack.c.b16 %v1036, %v1035
        %v1130 = vpack.c.b16 %v1038, %v1037
        %v1131 = vpack.c.b16 %v1040, %v1039
        %v1132 = vpack.c.b16 %v1042, %v1041
        %v1133 = vpack.c.b16 %v1044, %v1043
        %v1134 = vpack.c.b16 %v1046, %v1045
        %v1135 = vpack.c.b16 %v1048, %v1047
        %v1136 = vpack.c.b16 %v1050, %v1049
        %v1137 = vpack.c.b16 %v1052, %v1051
        %v1138 = vpack.c.b16 %v1054, %v1053
        %v1139 = vpack.c.b16 %v1056, %v1055
        %v1140 = vpack.c.b16 %v1058, %v1057
        %v1141 = vpack.c.b16 %v1060, %v1059
        %v1142 = vpack.c.b16 %v1062, %v1061
        %v1143 = vpack.c.b16 %v1064, %v1063
        %v1144 = vpack.c.b16 %v1066, %v1065
        %v1145 = vpack.c.b16 %v1068, %v1067
        %v1146 = vpack.c.b16 %v1070, %v1069
        %v1147 = vpack.c.b16 %v1072, %v1071
        %v1148 = vpack.c.b16 %v1074, %v1073
        %v1149 = vpack.c.b16 %v1076, %v1075
        %v1150 = vpack.c.b16 %v1078, %v1077
        %1223 = vmatprep.subr.bf16.mxu0 0
        %1224 = vmatpush1.bf16.msra.mxu0 %v1079
        %1225 = vmatprep.subr.bf16.mxu0 0
        %1226 = vmatpush1.bf16.msra.mxu0 %v1080
        %1227 = vmatprep.subr.bf16.mxu0 0
        %1228 = vmatpush1.bf16.msra.mxu0 %v1081
        %1229 = vmatprep.subr.bf16.mxu0 0
        %1230 = vmatpush1.bf16.msra.mxu0 %v1082
        %1231 = vmatprep.subr.bf16.mxu0 0
        %1232 = vmatpush1.bf16.msra.mxu0 %v1083
        %1233 = vmatprep.subr.bf16.mxu0 0
        %1234 = vmatpush1.bf16.msra.mxu0 %v1084
        %1235 = vmatprep.subr.bf16.mxu0 0
        %1236 = vmatpush1.bf16.msra.mxu0 %v1085
        %1237 = vmatprep.subr.bf16.mxu0 0
        %1238 = vmatpush1.bf16.msra.mxu0 %v1086
        %1239 = vmatprep.subr.bf16.mxu0 0
        %1240 = vmatpush1.bf16.msra.mxu0 %v1087
        %1241 = vmatprep.subr.bf16.mxu0 0
        %1242 = vmatpush1.bf16.msra.mxu0 %v1088
        %1243 = vmatprep.subr.bf16.mxu0 0
        %1244 = vmatpush1.bf16.msra.mxu0 %v1089
        %1245 = vmatprep.subr.bf16.mxu0 0
        %1246 = vmatpush1.bf16.msra.mxu0 %v1090
        %1247 = vmatprep.subr.bf16.mxu0 0
        %1248 = vmatpush1.bf16.msra.mxu0 %v1091
        %1249 = vmatprep.subr.bf16.mxu0 0
        %1250 = vmatpush1.bf16.msra.mxu0 %v1092
        %1251 = vmatprep.subr.bf16.mxu0 0
        %1252 = vmatpush1.bf16.msra.mxu0 %v1093
        %1253 = vmatprep.subr.bf16.mxu0 0
        %1254 = vmatpush1.bf16.msra.mxu0 %v1094
        %1255 = vmatprep.mubr.bf16.mxu0 %v600
        %1256 = vmatmul.mubr.bf16.gmra.mrb[0].mxu0 %v580
        %v1257 = vpop.f32.mrb[0].mxu0
        %v1258 = vadd.f32 %v789, %v1257
        %v1259 = vpop.f32.mrb[0].mxu0
        %v1260 = vpop.f32.mrb[0].mxu0
        %v1261 = vadd.f32 %v789, %v1260
        %v1262 = vpop.f32.mrb[0].mxu0
        %1263 = vmatprep.mubr.bf16.mxu0 %v601
        %1264 = vmatmul.mubr.bf16.gmra.mrb[0].mxu0 %v581
        %v1265 = vpop.f32.mrb[0].mxu0
        %v1266 = vadd.f32 %v789, %v1265
        %v1267 = vpop.f32.mrb[0].mxu0
        %v1268 = vpop.f32.mrb[0].mxu0
        %v1269 = vadd.f32 %v789, %v1268
        %v1270 = vpop.f32.mrb[0].mxu0
        %1271 = vmatprep.mubr.bf16.mxu0 %v602
        %1272 = vmatmul.mubr.bf16.gmra.mrb[0].mxu0 %v582
        %v1273 = vpop.f32.mrb[0].mxu0
        %v1274 = vadd.f32 %v789, %v1273
        %v1275 = vpop.f32.mrb[0].mxu0
        %v1276 = vpop.f32.mrb[0].mxu0
        %v1277 = vadd.f32 %v789, %v1276
        %v1278 = vpop.f32.mrb[0].mxu0
        %1279 = vmatprep.mubr.bf16.mxu0 %v603
        %1280 = vmatmul.mubr.bf16.gmra.mrb[0].mxu0 %v583
        %v1281 = vpop.f32.mrb[0].mxu0
        %v1282 = vadd.f32 %v789, %v1281
        %v1283 = vpop.f32.mrb[0].mxu0
        %v1284 = vpop.f32.mrb[0].mxu0
        %v1285 = vadd.f32 %v789, %v1284
        %v1286 = vpop.f32.mrb[0].mxu0
        %1287 = vmatprep.mubr.bf16.mxu0 %v604
        %1288 = vmatmul.mubr.bf16.gmra.mrb[0].mxu0 %v584
        %v1289 = vpop.f32.mrb[0].mxu0
        %v1290 = vadd.f32 %v789, %v1289
        %v1291 = vpop.f32.mrb[0].mxu0
        %v1292 = vpop.f32.mrb[0].mxu0
        %v1293 = vadd.f32 %v789, %v1292
        %v1294 = vpop.f32.mrb[0].mxu0
        %1295 = vmatprep.mubr.bf16.mxu0 %v605
        %1296 = vmatmul.mubr.bf16.gmra.mrb[0].mxu0 %v585
        %v1297 = vpop.f32.mrb[0].mxu0
        %v1298 = vadd.f32 %v789, %v1297
        %v1299 = vpop.f32.mrb[0].mxu0
        %v1300 = vpop.f32.mrb[0].mxu0
        %v1301 = vadd.f32 %v789, %v1300
        %v1302 = vpop.f32.mrb[0].mxu0
        %1303 = vmatprep.mubr.bf16.mxu0 %v606
        %1304 = vmatmul.mubr.bf16.gmra.mrb[0].mxu0 %v586
        %v1305 = vpop.f32.mrb[0].mxu0
        %v1306 = vadd.f32 %v789, %v1305
        %v1307 = vpop.f32.mrb[0].mxu0
        %v1308 = vpop.f32.mrb[0].mxu0
        %v1309 = vadd.f32 %v789, %v1308
        %v1310 = vpop.f32.mrb[0].mxu0
        %1311 = vmatprep.mubr.bf16.mxu0 %v607
        %1312 = vmatmul.mubr.bf16.gmra.mrb[0].mxu0 %v587
        %v1313 = vpop.f32.mrb[0].mxu0
        %v1314 = vadd.f32 %v789, %v1313
        %v1315 = vpop.f32.mrb[0].mxu0
        %v1316 = vpop.f32.mrb[0].mxu0
        %v1317 = vadd.f32 %v789, %v1316
        %v1318 = vpop.f32.mrb[0].mxu0
        %1319 = vmatprep.mubr.bf16.mxu0 %v608
        %1320 = vmatmul.mubr.bf16.gmra.mrb[0].mxu0 %v588
        %v1321 = vpop.f32.mrb[0].mxu0
        %v1322 = vadd.f32 %v789, %v1321
        %v1323 = vpop.f32.mrb[0].mxu0
        %v1324 = vpop.f32.mrb[0].mxu0
        %v1325 = vadd.f32 %v789, %v1324
        %v1326 = vpop.f32.mrb[0].mxu0
        %1327 = vmatprep.mubr.bf16.mxu0 %v609
        %1328 = vmatmul.mubr.bf16.gmra.mrb[0].mxu0 %v589
        %v1329 = vpop.f32.mrb[0].mxu0
        %v1330 = vadd.f32 %v789, %v1329
        %v1331 = vpop.f32.mrb[0].mxu0
        %v1332 = vpop.f32.mrb[0].mxu0
        %v1333 = vadd.f32 %v789, %v1332
        %v1334 = vpop.f32.mrb[0].mxu0
        %1335 = vmatprep.mubr.bf16.mxu0 %v610
        %1336 = vmatmul.mubr.bf16.gmra.mrb[0].mxu0 %v590
        %v1337 = vpop.f32.mrb[0].mxu0
        %v1338 = vadd.f32 %v789, %v1337
        %v1339 = vpop.f32.mrb[0].mxu0
        %v1340 = vpop.f32.mrb[0].mxu0
        %v1341 = vadd.f32 %v789, %v1340
        %v1342 = vpop.f32.mrb[0].mxu0
        %1343 = vmatprep.mubr.bf16.mxu0 %v611
        %1344 = vmatmul.mubr.bf16.gmra.mrb[0].mxu0 %v591
        %v1345 = vpop.f32.mrb[0].mxu0
        %v1346 = vadd.f32 %v789, %v1345
        %v1347 = vpop.f32.mrb[0].mxu0
        %v1348 = vpop.f32.mrb[0].mxu0
        %v1349 = vadd.f32 %v789, %v1348
        %v1350 = vpop.f32.mrb[0].mxu0
        %1351 = vmatprep.mubr.bf16.mxu0 %v612
        %1352 = vmatmul.mubr.bf16.gmra.mrb[0].mxu0 %v592
        %v1353 = vpop.f32.mrb[0].mxu0
        %v1354 = vadd.f32 %v789, %v1353
        %v1355 = vpop.f32.mrb[0].mxu0
        %v1356 = vpop.f32.mrb[0].mxu0
        %v1357 = vadd.f32 %v789, %v1356
        %v1358 = vpop.f32.mrb[0].mxu0
        %1359 = vmatprep.mubr.bf16.mxu0 %v613
        %1360 = vmatmul.mubr.bf16.gmra.mrb[0].mxu0 %v593
        %v1361 = vpop.f32.mrb[0].mxu0
        %v1362 = vadd.f32 %v789, %v1361
        %v1363 = vpop.f32.mrb[0].mxu0
        %v1364 = vpop.f32.mrb[0].mxu0
        %v1365 = vadd.f32 %v789, %v1364
        %v1366 = vpop.f32.mrb[0].mxu0
        %1367 = vmatprep.mubr.bf16.mxu0 %v614
        %1368 = vmatmul.mubr.bf16.gmra.mrb[0].mxu0 %v594
        %v1369 = vpop.f32.mrb[0].mxu0
        %v1370 = vadd.f32 %v789, %v1369
        %v1371 = vpop.f32.mrb[0].mxu0
        %v1372 = vpop.f32.mrb[0].mxu0
        %v1373 = vadd.f32 %v789, %v1372
        %v1374 = vpop.f32.mrb[0].mxu0
        %1375 = vmatprep.mubr.bf16.mxu0 %v615
        %1376 = vmatmul.mubr.bf16.gmra.mrb[0].mxu0 %v595
        %v1377 = vpop.f32.mrb[0].mxu0
        %v1378 = vadd.f32 %v789, %v1377
        %v1379 = vpop.f32.mrb[0].mxu0
        %v1380 = vpop.f32.mrb[0].mxu0
        %v1381 = vadd.f32 %v789, %v1380
        %v1382 = vpop.f32.mrb[0].mxu0
        %1383 = vmatprep.mubr.bf16.mxu0 %v616
        %1384 = vmatmul.mubr.bf16.gmra.mrb[0].mxu0 %v596
        %v1385 = vpop.f32.mrb[0].mxu0
        %v1386 = vadd.f32 %v789, %v1385
        %v1387 = vpop.f32.mrb[0].mxu0
        %v1388 = vpop.f32.mrb[0].mxu0
        %v1389 = vadd.f32 %v789, %v1388
        %v1390 = vpop.f32.mrb[0].mxu0
        %1391 = vmatprep.mubr.bf16.mxu0 %v617
        %1392 = vmatmul.mubr.bf16.gmra.mrb[0].mxu0 %v597
        %v1393 = vpop.f32.mrb[0].mxu0
        %v1394 = vadd.f32 %v789, %v1393
        %v1395 = vpop.f32.mrb[0].mxu0
        %v1396 = vpop.f32.mrb[0].mxu0
        %v1397 = vadd.f32 %v789, %v1396
        %v1398 = vpop.f32.mrb[0].mxu0
        %1399 = vdwg.mxu0
        %1400 = vmatprep.subr.bf16.mxu0 0
        %1401 = vmatpush1.bf16.msra.mxu0 %v1095
        %1402 = vmatprep.subr.bf16.mxu0 0
        %1403 = vmatpush1.bf16.msra.mxu0 %v1096
        %1404 = vmatprep.subr.bf16.mxu0 0
        %1405 = vmatpush1.bf16.msra.mxu0 %v1097
        %1406 = vmatprep.subr.bf16.mxu0 0
        %1407 = vmatpush1.bf16.msra.mxu0 %v1098
        %1408 = vmatprep.subr.bf16.mxu0 0
        %1409 = vmatpush1.bf16.msra.mxu0 %v1099
        %1410 = vmatprep.subr.bf16.mxu0 0
        %1411 = vmatpush1.bf16.msra.mxu0 %v1100
        %1412 = vmatprep.subr.bf16.mxu0 0
        %1413 = vmatpush1.bf16.msra.mxu0 %v1101
        %1414 = vmatprep.subr.bf16.mxu0 0
        %1415 = vmatpush1.bf16.msra.mxu0 %v1102
        %1416 = vmatprep.subr.bf16.mxu0 0
        %1417 = vmatpush1.bf16.msra.mxu0 %v1103
        %1418 = vmatprep.subr.bf16.mxu0 0
        %1419 = vmatpush1.bf16.msra.mxu0 %v1104
        %1420 = vmatprep.subr.bf16.mxu0 0
        %1421 = vmatpush1.bf16.msra.mxu0 %v1105
        %1422 = vmatprep.subr.bf16.mxu0 0
        %1423 = vmatpush1.bf16.msra.mxu0 %v1106
        %1424 = vmatprep.subr.bf16.mxu0 0
        %1425 = vmatpush1.bf16.msra.mxu0 %v1107
        %1426 = vmatprep.subr.bf16.mxu0 0
        %1427 = vmatpush1.bf16.msra.mxu0 %v1108
        %1428 = vmatprep.subr.bf16.mxu0 0
        %1429 = vmatpush1.bf16.msra.mxu0 %v1109
        %1430 = vmatprep.subr.bf16.mxu0 0
        %1431 = vmatpush1.bf16.msra.mxu0 %v1110
        %1432 = vmatprep.mubr.bf16.mxu0 %v581
        %1433 = vmatmul.mubr.bf16.gmra.mrb[0].mxu0 %v620
        %v1434 = vpop.f32.mrb[0].mxu0
        %v1435 = vadd.f32 %v1258, %v1434
        %v1436 = vpop.f32.mrb[0].mxu0
        %v1437 = vpop.f32.mrb[0].mxu0
        %v1438 = vadd.f32 %v1261, %v1437
        %v1439 = vpop.f32.mrb[0].mxu0
        %1440 = vmatprep.mubr.bf16.mxu0 %v582
        %1441 = vmatmul.mubr.bf16.gmra.mrb[0].mxu0 %v621
        %v1442 = vpop.f32.mrb[0].mxu0
        %v1443 = vadd.f32 %v1266, %v1442
        %v1444 = vpop.f32.mrb[0].mxu0
        %v1445 = vpop.f32.mrb[0].mxu0
        %v1446 = vadd.f32 %v1269, %v1445
        %v1447 = vpop.f32.mrb[0].mxu0
        %1448 = vmatprep.mubr.bf16.mxu0 %v583
        %1449 = vmatmul.mubr.bf16.gmra.mrb[0].mxu0 %v622
        %v1450 = vpop.f32.mrb[0].mxu0
        %v1451 = vadd.f32 %v1274, %v1450
        %v1452 = vpop.f32.mrb[0].mxu0
        %v1453 = vpop.f32.mrb[0].mxu0
        %v1454 = vadd.f32 %v1277, %v1453
        %v1455 = vpop.f32.mrb[0].mxu0
        %1456 = vmatprep.mubr.bf16.mxu0 %v584
        %1457 = vmatmul.mubr.bf16.gmra.mrb[0].mxu0 %v623
        %v1458 = vpop.f32.mrb[0].mxu0
        %v1459 = vadd.f32 %v1282, %v1458
        %v1460 = vpop.f32.mrb[0].mxu0
        %v1461 = vpop.f32.mrb[0].mxu0
        %v1462 = vadd.f32 %v1285, %v1461
        %v1463 = vpop.f32.mrb[0].mxu0
        %1464 = vmatprep.mubr.bf16.mxu0 %v585
        %1465 = vmatmul.mubr.bf16.gmra.mrb[0].mxu0 %v624
        %v1466 = vpop.f32.mrb[0].mxu0
        %v1467 = vadd.f32 %v1290, %v1466
        %v1468 = vpop.f32.mrb[0].mxu0
        %v1469 = vpop.f32.mrb[0].mxu0
        %v1470 = vadd.f32 %v1293, %v1469
        %v1471 = vpop.f32.mrb[0].mxu0
        %1472 = vmatprep.mubr.bf16.mxu0 %v586
        %1473 = vmatmul.mubr.bf16.gmra.mrb[0].mxu0 %v625
        %v1474 = vpop.f32.mrb[0].mxu0
        %v1475 = vadd.f32 %v1298, %v1474
        %v1476 = vpop.f32.mrb[0].mxu0
        %v1477 = vpop.f32.mrb[0].mxu0
        %v1478 = vadd.f32 %v1301, %v1477
        %v1479 = vpop.f32.mrb[0].mxu0
        %1480 = vmatprep.mubr.bf16.mxu0 %v587
        %1481 = vmatmul.mubr.bf16.gmra.mrb[0].mxu0 %v626
        %v1482 = vpop.f32.mrb[0].mxu0
        %v1483 = vadd.f32 %v1306, %v1482
        %v1484 = vpop.f32.mrb[0].mxu0
        %v1485 = vpop.f32.mrb[0].mxu0
        %v1486 = vadd.f32 %v1309, %v1485
        %v1487 = vpop.f32.mrb[0].mxu0
        %1488 = vmatprep.mubr.bf16.mxu0 %v588
        %1489 = vmatmul.mubr.bf16.gmra.mrb[0].mxu0 %v627
        %v1490 = vpop.f32.mrb[0].mxu0
        %v1491 = vadd.f32 %v1314, %v1490
        %v1492 = vpop.f32.mrb[0].mxu0
        %v1493 = vpop.f32.mrb[0].mxu0
        %v1494 = vadd.f32 %v1317, %v1493
        %v1495 = vpop.f32.mrb[0].mxu0
        %1496 = vmatprep.mubr.bf16.mxu0 %v589
        %1497 = vmatmul.mubr.bf16.gmra.mrb[0].mxu0 %v628
        %v1498 = vpop.f32.mrb[0].mxu0
        %v1499 = vadd.f32 %v1322, %v1498
        %v1500 = vpop.f32.mrb[0].mxu0
        %v1501 = vpop.f32.mrb[0].mxu0
        %v1502 = vadd.f32 %v1325, %v1501
        %v1503 = vpop.f32.mrb[0].mxu0
        %1504 = vmatprep.mubr.bf16.mxu0 %v590
        %1505 = vmatmul.mubr.bf16.gmra.mrb[0].mxu0 %v629
        %v1506 = vpop.f32.mrb[0].mxu0
        %v1507 = vadd.f32 %v1330, %v1506
        %v1508 = vpop.f32.mrb[0].mxu0
        %v1509 = vpop.f32.mrb[0].mxu0
        %v1510 = vadd.f32 %v1333, %v1509
        %v1511 = vpop.f32.mrb[0].mxu0
        %1512 = vmatprep.mubr.bf16.mxu0 %v591
        %1513 = vmatmul.mubr.bf16.gmra.mrb[0].mxu0 %v630
        %v1514 = vpop.f32.mrb[0].mxu0
        %v1515 = vadd.f32 %v1338, %v1514
        %v1516 = vpop.f32.mrb[0].mxu0
        %v1517 = vpop.f32.mrb[0].mxu0
        %v1518 = vadd.f32 %v1341, %v1517
        %v1519 = vpop.f32.mrb[0].mxu0
        %1520 = vmatprep.mubr.bf16.mxu0 %v592
        %1521 = vmatmul.mubr.bf16.gmra.mrb[0].mxu0 %v631
        %v1522 = vpop.f32.mrb[0].mxu0
        %v1523 = vadd.f32 %v1346, %v1522
        %v1524 = vpop.f32.mrb[0].mxu0
        %v1525 = vpop.f32.mrb[0].mxu0
        %v1526 = vadd.f32 %v1349, %v1525
        %v1527 = vpop.f32.mrb[0].mxu0
        %1528 = vmatprep.mubr.bf16.mxu0 %v593
        %1529 = vmatmul.mubr.bf16.gmra.mrb[0].mxu0 %v632
        %v1530 = vpop.f32.mrb[0].mxu0
        %v1531 = vadd.f32 %v1354, %v1530
        %v1532 = vpop.f32.mrb[0].mxu0
        %v1533 = vpop.f32.mrb[0].mxu0
        %v1534 = vadd.f32 %v1357, %v1533
        %v1535 = vpop.f32.mrb[0].mxu0
        %1536 = vmatprep.mubr.bf16.mxu0 %v594
        %1537 = vmatmul.mubr.bf16.gmra.mrb[0].mxu0 %v633
        %v1538 = vpop.f32.mrb[0].mxu0
        %v1539 = vadd.f32 %v1362, %v1538
        %v1540 = vpop.f32.mrb[0].mxu0
        %v1541 = vpop.f32.mrb[0].mxu0
        %v1542 = vadd.f32 %v1365, %v1541
        %v1543 = vpop.f32.mrb[0].mxu0
        %1544 = vmatprep.mubr.bf16.mxu0 %v595
        %1545 = vmatmul.mubr.bf16.gmra.mrb[0].mxu0 %v634
        %v1546 = vpop.f32.mrb[0].mxu0
        %v1547 = vadd.f32 %v1370, %v1546
        %v1548 = vpop.f32.mrb[0].mxu0
        %v1549 = vpop.f32.mrb[0].mxu0
        %v1550 = vadd.f32 %v1373, %v1549
        %v1551 = vpop.f32.mrb[0].mxu0
        %1552 = vmatprep.mubr.bf16.mxu0 %v596
        %1553 = vmatmul.mubr.bf16.gmra.mrb[0].mxu0 %v635
        %v1554 = vpop.f32.mrb[0].mxu0
        %v1555 = vadd.f32 %v1378, %v1554
        %v1556 = vpop.f32.mrb[0].mxu0
        %v1557 = vpop.f32.mrb[0].mxu0
        %v1558 = vadd.f32 %v1381, %v1557
        %v1559 = vpop.f32.mrb[0].mxu0
        %1560 = vmatprep.mubr.bf16.mxu0 %v597
        %1561 = vmatmul.mubr.bf16.gmra.mrb[0].mxu0 %v636
        %v1562 = vpop.f32.mrb[0].mxu0
        %v1563 = vadd.f32 %v1386, %v1562
        %v1564 = vpop.f32.mrb[0].mxu0
        %v1565 = vpop.f32.mrb[0].mxu0
        %v1566 = vadd.f32 %v1389, %v1565
        %v1567 = vpop.f32.mrb[0].mxu0
        %1568 = vmatprep.mubr.bf16.mxu0 %v598
        %1569 = vmatmul.mubr.bf16.gmra.mrb[0].mxu0 %v637
        %v1570 = vpop.f32.mrb[0].mxu0
        %v1571 = vadd.f32 %v1394, %v1570
        %v1572 = vpop.f32.mrb[0].mxu0
        %v1573 = vpop.f32.mrb[0].mxu0
        %v1574 = vadd.f32 %v1397, %v1573
        %v1575 = vpop.f32.mrb[0].mxu0
        %1576 = vdwg.mxu0
        %1577 = vmatprep.subr.bf16.mxu0 0
        %1578 = vmatpush1.bf16.msra.mxu0 %v1111
        %1579 = vmatprep.subr.bf16.mxu0 0
        %1580 = vmatpush1.bf16.msra.mxu0 %v1112
        %1581 = vmatprep.subr.bf16.mxu0 0
        %1582 = vmatpush1.bf16.msra.mxu0 %v1113
        %1583 = vmatprep.subr.bf16.mxu0 0
        %1584 = vmatpush1.bf16.msra.mxu0 %v1114
        %1585 = vmatprep.subr.bf16.mxu0 0
        %1586 = vmatpush1.bf16.msra.mxu0 %v1115
        %1587 = vmatprep.subr.bf16.mxu0 0
        %1588 = vmatpush1.bf16.msra.mxu0 %v1116
        %1589 = vmatprep.subr.bf16.mxu0 0
        %1590 = vmatpush1.bf16.msra.mxu0 %v1117
        %1591 = vmatprep.subr.bf16.mxu0 0
        %1592 = vmatpush1.bf16.msra.mxu0 %v1118
        %1593 = vmatprep.subr.bf16.mxu0 0
        %1594 = vmatpush1.bf16.msra.mxu0 %v1119
        %1595 = vmatprep.subr.bf16.mxu0 0
        %1596 = vmatpush1.bf16.msra.mxu0 %v1120
        %1597 = vmatprep.subr.bf16.mxu0 0
        %1598 = vmatpush1.bf16.msra.mxu0 %v1121
        %1599 = vmatprep.subr.bf16.mxu0 0
        %1600 = vmatpush1.bf16.msra.mxu0 %v1122
        %1601 = vmatprep.subr.bf16.mxu0 0
        %1602 = vmatpush1.bf16.msra.mxu0 %v1123
        %1603 = vmatprep.subr.bf16.mxu0 0
        %1604 = vmatpush1.bf16.msra.mxu0 %v1124
        %1605 = vmatprep.subr.bf16.mxu0 0
        %1606 = vmatpush1.bf16.msra.mxu0 %v1125
        %1607 = vmatprep.subr.bf16.mxu0 0
        %1608 = vmatpush1.bf16.msra.mxu0 %v1126
        %1609 = vmatprep.mubr.bf16.mxu0 %v621
        %1610 = vmatmul.mubr.bf16.gmra.mrb[0].mxu0 %v601
        %v1611 = vpop.f32.mrb[0].mxu0
        %v1612 = vadd.f32 %v1435, %v1611
        %v1613 = vpop.f32.mrb[0].mxu0
        %v1614 = vpop.f32.mrb[0].mxu0
        %v1615 = vadd.f32 %v1438, %v1614
        %v1616 = vpop.f32.mrb[0].mxu0
        %1617 = vmatprep.mubr.bf16.mxu0 %v622
        %1618 = vmatmul.mubr.bf16.gmra.mrb[0].mxu0 %v602
        %v1619 = vpop.f32.mrb[0].mxu0
        %v1620 = vadd.f32 %v1443, %v1619
        %v1621 = vpop.f32.mrb[0].mxu0
        %v1622 = vpop.f32.mrb[0].mxu0
        %v1623 = vadd.f32 %v1446, %v1622
        %v1624 = vpop.f32.mrb[0].mxu0
        %1625 = vmatprep.mubr.bf16.mxu0 %v623
        %1626 = vmatmul.mubr.bf16.gmra.mrb[0].mxu0 %v603
        %v1627 = vpop.f32.mrb[0].mxu0
        %v1628 = vadd.f32 %v1451, %v1627
        %v1629 = vpop.f32.mrb[0].mxu0
        %v1630 = vpop.f32.mrb[0].mxu0
        %v1631 = vadd.f32 %v1454, %v1630
        %v1632 = vpop.f32.mrb[0].mxu0
        %1633 = vmatprep.mubr.bf16.mxu0 %v624
        %1634 = vmatmul.mubr.bf16.gmra.mrb[0].mxu0 %v604
        %v1635 = vpop.f32.mrb[0].mxu0
        %v1636 = vadd.f32 %v1459, %v1635
        %v1637 = vpop.f32.mrb[0].mxu0
        %v1638 = vpop.f32.mrb[0].mxu0
        %v1639 = vadd.f32 %v1462, %v1638
        %v1640 = vpop.f32.mrb[0].mxu0
        %1641 = vmatprep.mubr.bf16.mxu0 %v625
        %1642 = vmatmul.mubr.bf16.gmra.mrb[0].mxu0 %v605
        %v1643 = vpop.f32.mrb[0].mxu0
        %v1644 = vadd.f32 %v1467, %v1643
        %v1645 = vpop.f32.mrb[0].mxu0
        %v1646 = vpop.f32.mrb[0].mxu0
        %v1647 = vadd.f32 %v1470, %v1646
        %v1648 = vpop.f32.mrb[0].mxu0
        %1649 = vmatprep.mubr.bf16.mxu0 %v626
        %1650 = vmatmul.mubr.bf16.gmra.mrb[0].mxu0 %v606
        %v1651 = vpop.f32.mrb[0].mxu0
        %v1652 = vadd.f32 %v1475, %v1651
        %v1653 = vpop.f32.mrb[0].mxu0
        %v1654 = vpop.f32.mrb[0].mxu0
        %v1655 = vadd.f32 %v1478, %v1654
        %v1656 = vpop.f32.mrb[0].mxu0
        %1657 = vmatprep.mubr.bf16.mxu0 %v627
        %1658 = vmatmul.mubr.bf16.gmra.mrb[0].mxu0 %v607
        %v1659 = vpop.f32.mrb[0].mxu0
        %v1660 = vadd.f32 %v1483, %v1659
        %v1661 = vpop.f32.mrb[0].mxu0
        %v1662 = vpop.f32.mrb[0].mxu0
        %v1663 = vadd.f32 %v1486, %v1662
        %v1664 = vpop.f32.mrb[0].mxu0
        %1665 = vmatprep.mubr.bf16.mxu0 %v628
        %1666 = vmatmul.mubr.bf16.gmra.mrb[0].mxu0 %v608
        %v1667 = vpop.f32.mrb[0].mxu0
        %v1668 = vadd.f32 %v1491, %v1667
        %v1669 = vpop.f32.mrb[0].mxu0
        %v1670 = vpop.f32.mrb[0].mxu0
        %v1671 = vadd.f32 %v1494, %v1670
        %v1672 = vpop.f32.mrb[0].mxu0
        %1673 = vmatprep.mubr.bf16.mxu0 %v629
        %1674 = vmatmul.mubr.bf16.gmra.mrb[0].mxu0 %v609
        %v1675 = vpop.f32.mrb[0].mxu0
        %v1676 = vadd.f32 %v1499, %v1675
        %v1677 = vpop.f32.mrb[0].mxu0
        %v1678 = vpop.f32.mrb[0].mxu0
        %v1679 = vadd.f32 %v1502, %v1678
        %v1680 = vpop.f32.mrb[0].mxu0
        %1681 = vmatprep.mubr.bf16.mxu0 %v630
        %1682 = vmatmul.mubr.bf16.gmra.mrb[0].mxu0 %v610
        %v1683 = vpop.f32.mrb[0].mxu0
        %v1684 = vadd.f32 %v1507, %v1683
        %v1685 = vpop.f32.mrb[0].mxu0
        %v1686 = vpop.f32.mrb[0].mxu0
        %v1687 = vadd.f32 %v1510, %v1686
        %v1688 = vpop.f32.mrb[0].mxu0
        %1689 = vmatprep.mubr.bf16.mxu0 %v631
        %1690 = vmatmul.mubr.bf16.gmra.mrb[0].mxu0 %v611
        %v1691 = vpop.f32.mrb[0].mxu0
        %v1692 = vadd.f32 %v1515, %v1691
        %v1693 = vpop.f32.mrb[0].mxu0
        %v1694 = vpop.f32.mrb[0].mxu0
        %v1695 = vadd.f32 %v1518, %v1694
        %v1696 = vpop.f32.mrb[0].mxu0
        %1697 = vmatprep.mubr.bf16.mxu0 %v632
        %1698 = vmatmul.mubr.bf16.gmra.mrb[0].mxu0 %v612
        %v1699 = vpop.f32.mrb[0].mxu0
        %v1700 = vadd.f32 %v1523, %v1699
        %v1701 = vpop.f32.mrb[0].mxu0
        %v1702 = vpop.f32.mrb[0].mxu0
        %v1703 = vadd.f32 %v1526, %v1702
        %v1704 = vpop.f32.mrb[0].mxu0
        %1705 = vmatprep.mubr.bf16.mxu0 %v633
        %1706 = vmatmul.mubr.bf16.gmra.mrb[0].mxu0 %v613
        %v1707 = vpop.f32.mrb[0].mxu0
        %v1708 = vadd.f32 %v1531, %v1707
        %v1709 = vpop.f32.mrb[0].mxu0
        %v1710 = vpop.f32.mrb[0].mxu0
        %v1711 = vadd.f32 %v1534, %v1710
        %v1712 = vpop.f32.mrb[0].mxu0
        %1713 = vmatprep.mubr.bf16.mxu0 %v634
        %1714 = vmatmul.mubr.bf16.gmra.mrb[0].mxu0 %v614
        %v1715 = vpop.f32.mrb[0].mxu0
        %v1716 = vadd.f32 %v1539, %v1715
        %v1717 = vpop.f32.mrb[0].mxu0
        %v1718 = vpop.f32.mrb[0].mxu0
        %v1719 = vadd.f32 %v1542, %v1718
        %v1720 = vpop.f32.mrb[0].mxu0
        %1721 = vmatprep.mubr.bf16.mxu0 %v635
        %1722 = vmatmul.mubr.bf16.gmra.mrb[0].mxu0 %v615
        %v1723 = vpop.f32.mrb[0].mxu0
        %v1724 = vadd.f32 %v1547, %v1723
        %v1725 = vpop.f32.mrb[0].mxu0
        %v1726 = vpop.f32.mrb[0].mxu0
        %v1727 = vadd.f32 %v1550, %v1726
        %v1728 = vpop.f32.mrb[0].mxu0
        %1729 = vmatprep.mubr.bf16.mxu0 %v636
        %1730 = vmatmul.mubr.bf16.gmra.mrb[0].mxu0 %v616
        %v1731 = vpop.f32.mrb[0].mxu0
        %v1732 = vadd.f32 %v1555, %v1731
        %v1733 = vpop.f32.mrb[0].mxu0
        %v1734 = vpop.f32.mrb[0].mxu0
        %v1735 = vadd.f32 %v1558, %v1734
        %v1736 = vpop.f32.mrb[0].mxu0
        %1737 = vmatprep.mubr.bf16.mxu0 %v637
        %1738 = vmatmul.mubr.bf16.gmra.mrb[0].mxu0 %v617
        %v1739 = vpop.f32.mrb[0].mxu0
        %v1740 = vadd.f32 %v1563, %v1739
        %v1741 = vpop.f32.mrb[0].mxu0
        %v1742 = vpop.f32.mrb[0].mxu0
        %v1743 = vadd.f32 %v1566, %v1742
        %v1744 = vpop.f32.mrb[0].mxu0
        %1745 = vmatprep.mubr.bf16.mxu0 %v638
        %1746 = vmatmul.mubr.bf16.gmra.mrb[0].mxu0 %v618
        %v1747 = vpop.f32.mrb[0].mxu0
        %v1748 = vadd.f32 %v1571, %v1747
        %v1749 = vpop.f32.mrb[0].mxu0
        %v1750 = vpop.f32.mrb[0].mxu0
        %v1751 = vadd.f32 %v1574, %v1750
        %v1752 = vpop.f32.mrb[0].mxu0
        %1753 = vdwg.mxu0
        %1754 = vmatprep.subr.bf16.mxu0 0
        %1755 = vmatpush1.bf16.msra.mxu0 %v1127
        %1756 = vmatprep.subr.bf16.mxu0 0
        %1757 = vmatpush1.bf16.msra.mxu0 %v1128
        %1758 = vmatprep.subr.bf16.mxu0 0
        %1759 = vmatpush1.bf16.msra.mxu0 %v1129
        %1760 = vmatprep.subr.bf16.mxu0 0
        %1761 = vmatpush1.bf16.msra.mxu0 %v1130
        %1762 = vmatprep.subr.bf16.mxu0 0
        %1763 = vmatpush1.bf16.msra.mxu0 %v1131
        %1764 = vmatprep.subr.bf16.mxu0 0
        %1765 = vmatpush1.bf16.msra.mxu0 %v1132
        %1766 = vmatprep.subr.bf16.mxu0 0
        %1767 = vmatpush1.bf16.msra.mxu0 %v1133
        %1768 = vmatprep.subr.bf16.mxu0 0
        %1769 = vmatpush1.bf16.msra.mxu0 %v1134
        %1770 = vmatprep.subr.bf16.mxu0 0
        %1771 = vmatpush1.bf16.msra.mxu0 %v1135
        %1772 = vmatprep.subr.bf16.mxu0 0
        %1773 = vmatpush1.bf16.msra.mxu0 %v1136
        %1774 = vmatprep.subr.bf16.mxu0 0
        %1775 = vmatpush1.bf16.msra.mxu0 %v1137
        %1776 = vmatprep.subr.bf16.mxu0 0
        %1777 = vmatpush1.bf16.msra.mxu0 %v1138
        %1778 = vmatprep.subr.bf16.mxu0 0
        %1779 = vmatpush1.bf16.msra.mxu0 %v1139
        %1780 = vmatprep.subr.bf16.mxu0 0
        %1781 = vmatpush1.bf16.msra.mxu0 %v1140
        %1782 = vmatprep.subr.bf16.mxu0 0
        %1783 = vmatpush1.bf16.msra.mxu0 %v1141
        %1784 = vmatprep.subr.bf16.mxu0 0
        %1785 = vmatpush1.bf16.msra.mxu0 %v1142
        %1786 = vmatprep.mubr.bf16.mxu0 %v602
        %1787 = vmatmul.mubr.bf16.gmra.mrb[0].mxu0 %v582
        %v1788 = vpop.f32.mrb[0].mxu0
        %v1789 = vadd.f32 %v1612, %v1788
        %v1790 = vpop.f32.mrb[0].mxu0
        %v1791 = vpop.f32.mrb[0].mxu0
        %v1792 = vadd.f32 %v1615, %v1791
        %v1793 = vpop.f32.mrb[0].mxu0
        %1794 = vmatprep.mubr.bf16.mxu0 %v603
        %1795 = vmatmul.mubr.bf16.gmra.mrb[0].mxu0 %v583
        %v1796 = vpop.f32.mrb[0].mxu0
        %v1797 = vadd.f32 %v1620, %v1796
        %v1798 = vpop.f32.mrb[0].mxu0
        %v1799 = vpop.f32.mrb[0].mxu0
        %v1800 = vadd.f32 %v1623, %v1799
        %v1801 = vpop.f32.mrb[0].mxu0
        %1802 = vmatprep.mubr.bf16.mxu0 %v604
        %1803 = vmatmul.mubr.bf16.gmra.mrb[0].mxu0 %v584
        %v1804 = vpop.f32.mrb[0].mxu0
        %v1805 = vadd.f32 %v1628, %v1804
        %v1806 = vpop.f32.mrb[0].mxu0
        %v1807 = vpop.f32.mrb[0].mxu0
        %v1808 = vadd.f32 %v1631, %v1807
        %v1809 = vpop.f32.mrb[0].mxu0
        %1810 = vmatprep.mubr.bf16.mxu0 %v605
        %1811 = vmatmul.mubr.bf16.gmra.mrb[0].mxu0 %v585
        %v1812 = vpop.f32.mrb[0].mxu0
        %v1813 = vadd.f32 %v1636, %v1812
        %v1814 = vpop.f32.mrb[0].mxu0
        %v1815 = vpop.f32.mrb[0].mxu0
        %v1816 = vadd.f32 %v1639, %v1815
        %v1817 = vpop.f32.mrb[0].mxu0
        %1818 = vmatprep.mubr.bf16.mxu0 %v606
        %1819 = vmatmul.mubr.bf16.gmra.mrb[0].mxu0 %v586
        %v1820 = vpop.f32.mrb[0].mxu0
        %v1821 = vadd.f32 %v1644, %v1820
        %v1822 = vpop.f32.mrb[0].mxu0
        %v1823 = vpop.f32.mrb[0].mxu0
        %v1824 = vadd.f32 %v1647, %v1823
        %v1825 = vpop.f32.mrb[0].mxu0
        %1826 = vmatprep.mubr.bf16.mxu0 %v607
        %1827 = vmatmul.mubr.bf16.gmra.mrb[0].mxu0 %v587
        %v1828 = vpop.f32.mrb[0].mxu0
        %v1829 = vadd.f32 %v1652, %v1828
        %v1830 = vpop.f32.mrb[0].mxu0
        %v1831 = vpop.f32.mrb[0].mxu0
        %v1832 = vadd.f32 %v1655, %v1831
        %v1833 = vpop.f32.mrb[0].mxu0
        %1834 = vmatprep.mubr.bf16.mxu0 %v608
        %1835 = vmatmul.mubr.bf16.gmra.mrb[0].mxu0 %v588
        %v1836 = vpop.f32.mrb[0].mxu0
        %v1837 = vadd.f32 %v1660, %v1836
        %v1838 = vpop.f32.mrb[0].mxu0
        %v1839 = vpop.f32.mrb[0].mxu0
        %v1840 = vadd.f32 %v1663, %v1839
        %v1841 = vpop.f32.mrb[0].mxu0
        %1842 = vmatprep.mubr.bf16.mxu0 %v609
        %1843 = vmatmul.mubr.bf16.gmra.mrb[0].mxu0 %v589
        %v1844 = vpop.f32.mrb[0].mxu0
        %v1845 = vadd.f32 %v1668, %v1844
        %v1846 = vpop.f32.mrb[0].mxu0
        %v1847 = vpop.f32.mrb[0].mxu0
        %v1848 = vadd.f32 %v1671, %v1847
        %v1849 = vpop.f32.mrb[0].mxu0
        %1850 = vmatprep.mubr.bf16.mxu0 %v610
        %1851 = vmatmul.mubr.bf16.gmra.mrb[0].mxu0 %v590
        %v1852 = vpop.f32.mrb[0].mxu0
        %v1853 = vadd.f32 %v1676, %v1852
        %v1854 = vpop.f32.mrb[0].mxu0
        %v1855 = vpop.f32.mrb[0].mxu0
        %v1856 = vadd.f32 %v1679, %v1855
        %v1857 = vpop.f32.mrb[0].mxu0
        %1858 = vmatprep.mubr.bf16.mxu0 %v611
        %1859 = vmatmul.mubr.bf16.gmra.mrb[0].mxu0 %v591
        %v1860 = vpop.f32.mrb[0].mxu0
        %v1861 = vadd.f32 %v1684, %v1860
        %v1862 = vpop.f32.mrb[0].mxu0
        %v1863 = vpop.f32.mrb[0].mxu0
        %v1864 = vadd.f32 %v1687, %v1863
        %v1865 = vpop.f32.mrb[0].mxu0
        %1866 = vmatprep.mubr.bf16.mxu0 %v612
        %1867 = vmatmul.mubr.bf16.gmra.mrb[0].mxu0 %v592
        %v1868 = vpop.f32.mrb[0].mxu0
        %v1869 = vadd.f32 %v1692, %v1868
        %v1870 = vpop.f32.mrb[0].mxu0
        %v1871 = vpop.f32.mrb[0].mxu0
        %v1872 = vadd.f32 %v1695, %v1871
        %v1873 = vpop.f32.mrb[0].mxu0
        %1874 = vmatprep.mubr.bf16.mxu0 %v613
        %1875 = vmatmul.mubr.bf16.gmra.mrb[0].mxu0 %v593
        %v1876 = vpop.f32.mrb[0].mxu0
        %v1877 = vadd.f32 %v1700, %v1876
        %v1878 = vpop.f32.mrb[0].mxu0
        %v1879 = vpop.f32.mrb[0].mxu0
        %v1880 = vadd.f32 %v1703, %v1879
        %v1881 = vpop.f32.mrb[0].mxu0
        %1882 = vmatprep.mubr.bf16.mxu0 %v614
        %1883 = vmatmul.mubr.bf16.gmra.mrb[0].mxu0 %v594
        %v1884 = vpop.f32.mrb[0].mxu0
        %v1885 = vadd.f32 %v1708, %v1884
        %v1886 = vpop.f32.mrb[0].mxu0
        %v1887 = vpop.f32.mrb[0].mxu0
        %v1888 = vadd.f32 %v1711, %v1887
        %v1889 = vpop.f32.mrb[0].mxu0
        %1890 = vmatprep.mubr.bf16.mxu0 %v615
        %1891 = vmatmul.mubr.bf16.gmra.mrb[0].mxu0 %v595
        %v1892 = vpop.f32.mrb[0].mxu0
        %v1893 = vadd.f32 %v1716, %v1892
        %v1894 = vpop.f32.mrb[0].mxu0
        %v1895 = vpop.f32.mrb[0].mxu0
        %v1896 = vadd.f32 %v1719, %v1895
        %v1897 = vpop.f32.mrb[0].mxu0
        %1898 = vmatprep.mubr.bf16.mxu0 %v616
        %1899 = vmatmul.mubr.bf16.gmra.mrb[0].mxu0 %v596
        %v1900 = vpop.f32.mrb[0].mxu0
        %v1901 = vadd.f32 %v1724, %v1900
        %v1902 = vpop.f32.mrb[0].mxu0
        %v1903 = vpop.f32.mrb[0].mxu0
        %v1904 = vadd.f32 %v1727, %v1903
        %v1905 = vpop.f32.mrb[0].mxu0
        %1906 = vmatprep.mubr.bf16.mxu0 %v617
        %1907 = vmatmul.mubr.bf16.gmra.mrb[0].mxu0 %v597
        %v1908 = vpop.f32.mrb[0].mxu0
        %v1909 = vadd.f32 %v1732, %v1908
        %v1910 = vpop.f32.mrb[0].mxu0
        %v1911 = vpop.f32.mrb[0].mxu0
        %v1912 = vadd.f32 %v1735, %v1911
        %v1913 = vpop.f32.mrb[0].mxu0
        %1914 = vmatprep.mubr.bf16.mxu0 %v618
        %1915 = vmatmul.mubr.bf16.gmra.mrb[0].mxu0 %v598
        %v1916 = vpop.f32.mrb[0].mxu0
        %v1917 = vadd.f32 %v1740, %v1916
        %v1918 = vpop.f32.mrb[0].mxu0
        %v1919 = vpop.f32.mrb[0].mxu0
        %v1920 = vadd.f32 %v1743, %v1919
        %v1921 = vpop.f32.mrb[0].mxu0
        %1922 = vmatprep.mubr.bf16.mxu0 %v619
        %1923 = vmatmul.mubr.bf16.gmra.mrb[0].mxu0 %v599
        %v1924 = vpop.f32.mrb[0].mxu0
        %v1925 = vadd.f32 %v1748, %v1924
        %v1926 = vpop.f32.mrb[0].mxu0
        %v1927 = vpop.f32.mrb[0].mxu0
        %v1928 = vadd.f32 %v1751, %v1927
        %v1929 = vpop.f32.mrb[0].mxu0
        %1930 = vdwg.mxu0
        %1931 = vmatprep.subr.bf16.mxu0 0
        %1932 = vmatpush1.bf16.msra.mxu0 %v1143
        %1933 = vmatprep.subr.bf16.mxu0 0
        %1934 = vmatpush1.bf16.msra.mxu0 %v1144
        %1935 = vmatprep.subr.bf16.mxu0 0
        %1936 = vmatpush1.bf16.msra.mxu0 %v1145
        %1937 = vmatprep.subr.bf16.mxu0 0
        %1938 = vmatpush1.bf16.msra.mxu0 %v1146
        %1939 = vmatprep.subr.bf16.mxu0 0
        %1940 = vmatpush1.bf16.msra.mxu0 %v1147
        %1941 = vmatprep.subr.bf16.mxu0 0
        %1942 = vmatpush1.bf16.msra.mxu0 %v1148
        %1943 = vmatprep.subr.bf16.mxu0 0
        %1944 = vmatpush1.bf16.msra.mxu0 %v1149
        %1945 = vmatprep.subr.bf16.mxu0 0
        %1946 = vmatpush1.bf16.msra.mxu0 %v1150
        %1947 = vmatprep.subr.bf16.mxu0 0
        %1948 = vmatpush1.bf16.msra.mxu0 0
        %1949 = vmatprep.subr.bf16.mxu0 0
        %1950 = vmatpush1.bf16.msra.mxu0 0
        %1951 = vmatprep.subr.bf16.mxu0 0
        %1952 = vmatpush1.bf16.msra.mxu0 0
        %1953 = vmatprep.subr.bf16.mxu0 0
        %1954 = vmatpush1.bf16.msra.mxu0 0
        %1955 = vmatprep.subr.bf16.mxu0 0
        %1956 = vmatpush1.bf16.msra.mxu0 0
        %1957 = vmatprep.subr.bf16.mxu0 0
        %1958 = vmatpush1.bf16.msra.mxu0 0
        %1959 = vmatprep.subr.bf16.mxu0 0
        %1960 = vmatpush1.bf16.msra.mxu0 0
        %1961 = vmatprep.subr.bf16.mxu0 0
        %1962 = vmatpush1.bf16.msra.mxu0 0
        %1963 = vmatprep.mubr.bf16.mxu0 0
        %1964 = vmatmul.mubr.bf16.gmra.mrb[0].mxu0 %v622
        %v1965 = vpop.f32.mrb[0].mxu0
        %v1966 = vadd.f32 %v1789, %v1965
        %v1967 = vpop.f32.mrb[0].mxu0
        %v1968 = vpop.f32.mrb[0].mxu0
        %v1969 = vadd.f32 %v1792, %v1968
        %v1970 = vpop.f32.mrb[0].mxu0
        %1971 = vmatprep.mubr.bf16.mxu0 0
        %1972 = vmatmul.mubr.bf16.gmra.mrb[0].mxu0 %v623
        %v1973 = vpop.f32.mrb[0].mxu0
        %v1974 = vadd.f32 %v1797, %v1973
        %v1975 = vpop.f32.mrb[0].mxu0
        %v1976 = vpop.f32.mrb[0].mxu0
        %v1977 = vadd.f32 %v1800, %v1976
        %v1978 = vpop.f32.mrb[0].mxu0
        %1979 = vmatprep.mubr.bf16.mxu0 0
        %1980 = vmatmul.mubr.bf16.gmra.mrb[0].mxu0 %v624
        %v1981 = vpop.f32.mrb[0].mxu0
        %v1982 = vadd.f32 %v1805, %v1981
        %v1983 = vpop.f32.mrb[0].mxu0
        %v1984 = vpop.f32.mrb[0].mxu0
        %v1985 = vadd.f32 %v1808, %v1984
        %v1986 = vpop.f32.mrb[0].mxu0
        %1987 = vmatprep.mubr.bf16.mxu0 0
        %1988 = vmatmul.mubr.bf16.gmra.mrb[0].mxu0 %v625
        %v1989 = vpop.f32.mrb[0].mxu0
        %v1990 = vadd.f32 %v1813, %v1989
        %v1991 = vpop.f32.mrb[0].mxu0
        %v1992 = vpop.f32.mrb[0].mxu0
        %v1993 = vadd.f32 %v1816, %v1992
        %v1994 = vpop.f32.mrb[0].mxu0
        %1995 = vmatprep.mubr.bf16.mxu0 0
        %1996 = vmatmul.mubr.bf16.gmra.mrb[0].mxu0 %v626
        %v1997 = vpop.f32.mrb[0].mxu0
        %v1998 = vadd.f32 %v1821, %v1997
        %v1999 = vpop.f32.mrb[0].mxu0
        %v2000 = vpop.f32.mrb[0].mxu0
        %v2001 = vadd.f32 %v1824, %v2000
        %v2002 = vpop.f32.mrb[0].mxu0
        %2003 = vmatprep.mubr.bf16.mxu0 0
        %2004 = vmatmul.mubr.bf16.gmra.mrb[0].mxu0 %v627
        %v2005 = vpop.f32.mrb[0].mxu0
        %v2006 = vadd.f32 %v1829, %v2005
        %v2007 = vpop.f32.mrb[0].mxu0
        %v2008 = vpop.f32.mrb[0].mxu0
        %v2009 = vadd.f32 %v1832, %v2008
        %v2010 = vpop.f32.mrb[0].mxu0
        %2011 = vmatprep.mubr.bf16.mxu0 0
        %2012 = vmatmul.mubr.bf16.gmra.mrb[0].mxu0 %v628
        %v2013 = vpop.f32.mrb[0].mxu0
        %v2014 = vadd.f32 %v1837, %v2013
        %v2015 = vpop.f32.mrb[0].mxu0
        %v2016 = vpop.f32.mrb[0].mxu0
        %v2017 = vadd.f32 %v1840, %v2016
        %v2018 = vpop.f32.mrb[0].mxu0
        %2019 = vmatprep.mubr.bf16.mxu0 0
        %2020 = vmatmul.mubr.bf16.gmra.mrb[0].mxu0 %v629
        %v2021 = vpop.f32.mrb[0].mxu0
        %v2022 = vadd.f32 %v1845, %v2021
        %v2023 = vpop.f32.mrb[0].mxu0
        %v2024 = vpop.f32.mrb[0].mxu0
        %v2025 = vadd.f32 %v1848, %v2024
        %v2026 = vpop.f32.mrb[0].mxu0
        %2027 = vmatprep.mubr.bf16.mxu0 0
        %2028 = vmatmul.mubr.bf16.gmra.mrb[0].mxu0 %v630
        %v2029 = vpop.f32.mrb[0].mxu0
        %v2030 = vadd.f32 %v1853, %v2029
        %v2031 = vpop.f32.mrb[0].mxu0
        %v2032 = vpop.f32.mrb[0].mxu0
        %v2033 = vadd.f32 %v1856, %v2032
        %v2034 = vpop.f32.mrb[0].mxu0
        %2035 = vmatprep.mubr.bf16.mxu0 0
        %2036 = vmatmul.mubr.bf16.gmra.mrb[0].mxu0 %v631
        %v2037 = vpop.f32.mrb[0].mxu0
        %v2038 = vadd.f32 %v1861, %v2037
        %v2039 = vpop.f32.mrb[0].mxu0
        %v2040 = vpop.f32.mrb[0].mxu0
        %v2041 = vadd.f32 %v1864, %v2040
        %v2042 = vpop.f32.mrb[0].mxu0
        %2043 = vmatprep.mubr.bf16.mxu0 0
        %2044 = vmatmul.mubr.bf16.gmra.mrb[0].mxu0 %v632
        %v2045 = vpop.f32.mrb[0].mxu0
        %v2046 = vadd.f32 %v1869, %v2045
        %v2047 = vpop.f32.mrb[0].mxu0
        %v2048 = vpop.f32.mrb[0].mxu0
        %v2049 = vadd.f32 %v1872, %v2048
        %v2050 = vpop.f32.mrb[0].mxu0
        %2051 = vmatprep.mubr.bf16.mxu0 0
        %2052 = vmatmul.mubr.bf16.gmra.mrb[0].mxu0 %v633
        %v2053 = vpop.f32.mrb[0].mxu0
        %v2054 = vadd.f32 %v1877, %v2053
        %v2055 = vpop.f32.mrb[0].mxu0
        %v2056 = vpop.f32.mrb[0].mxu0
        %v2057 = vadd.f32 %v1880, %v2056
        %v2058 = vpop.f32.mrb[0].mxu0
        %2059 = vmatprep.mubr.bf16.mxu0 0
        %2060 = vmatmul.mubr.bf16.gmra.mrb[0].mxu0 %v634
        %v2061 = vpop.f32.mrb[0].mxu0
        %v2062 = vadd.f32 %v1885, %v2061
        %v2063 = vpop.f32.mrb[0].mxu0
        %v2064 = vpop.f32.mrb[0].mxu0
        %v2065 = vadd.f32 %v1888, %v2064
        %v2066 = vpop.f32.mrb[0].mxu0
        %2067 = vmatprep.mubr.bf16.mxu0 0
        %2068 = vmatmul.mubr.bf16.gmra.mrb[0].mxu0 %v635
        %v2069 = vpop.f32.mrb[0].mxu0
        %v2070 = vadd.f32 %v1893, %v2069
        %v2071 = vpop.f32.mrb[0].mxu0
        %v2072 = vpop.f32.mrb[0].mxu0
        %v2073 = vadd.f32 %v1896, %v2072
        %v2074 = vpop.f32.mrb[0].mxu0
        %2075 = vmatprep.mubr.bf16.mxu0 0
        %2076 = vmatmul.mubr.bf16.gmra.mrb[0].mxu0 %v636
        %v2077 = vpop.f32.mrb[0].mxu0
        %v2078 = vadd.f32 %v1901, %v2077
        %v2079 = vpop.f32.mrb[0].mxu0
        %v2080 = vpop.f32.mrb[0].mxu0
        %v2081 = vadd.f32 %v1904, %v2080
        %v2082 = vpop.f32.mrb[0].mxu0
        %2083 = vmatprep.mubr.bf16.mxu0 0
        %2084 = vmatmul.mubr.bf16.gmra.mrb[0].mxu0 %v637
        %v2085 = vpop.f32.mrb[0].mxu0
        %v2086 = vadd.f32 %v1909, %v2085
        %v2087 = vpop.f32.mrb[0].mxu0
        %v2088 = vpop.f32.mrb[0].mxu0
        %v2089 = vadd.f32 %v1912, %v2088
        %v2090 = vpop.f32.mrb[0].mxu0
        %2091 = vmatprep.mubr.bf16.mxu0 0
        %2092 = vmatmul.mubr.bf16.gmra.mrb[0].mxu0 %v638
        %v2093 = vpop.f32.mrb[0].mxu0
        %v2094 = vadd.f32 %v1917, %v2093
        %v2095 = vpop.f32.mrb[0].mxu0
        %v2096 = vpop.f32.mrb[0].mxu0
        %v2097 = vadd.f32 %v1920, %v2096
        %v2098 = vpop.f32.mrb[0].mxu0
        %2099 = vmatprep.mubr.bf16.mxu0 0
        %2100 = vmatmul.mubr.bf16.gmra.mrb[0].mxu0 %v639
        %v2101 = vpop.f32.mrb[0].mxu0
        %v2102 = vadd.f32 %v1925, %v2101
        %v2103 = vpop.f32.mrb[0].mxu0
        %v2104 = vpop.f32.mrb[0].mxu0
        %v2105 = vadd.f32 %v1928, %v2104
        %v2106 = vpop.f32.mrb[0].mxu0
        %2107 = vdwg.mxu0
        %v2108 = vmax.f32 %v1966, 0.0
        %v2109 = vmax.f32 %v1969, 0.0
        %v2110 = vmax.f32 %v1974, 0.0
        %v2111 = vmax.f32 %v1977, 0.0
        %v2112 = vmax.f32 %v1982, 0.0
        %v2113 = vmax.f32 %v1985, 0.0
        %v2114 = vmax.f32 %v1990, 0.0
        %v2115 = vmax.f32 %v1993, 0.0
        %v2116 = vmax.f32 %v1998, 0.0
        %v2117 = vmax.f32 %v2001, 0.0
        %v2118 = vmax.f32 %v2006, 0.0
        %v2119 = vmax.f32 %v2009, 0.0
        %v2120 = vmax.f32 %v2014, 0.0
        %v2121 = vmax.f32 %v2017, 0.0
        %v2122 = vmax.f32 %v2022, 0.0
        %v2123 = vmax.f32 %v2025, 0.0
        %v2124 = vmax.f32 %v2030, 0.0
        %v2125 = vmax.f32 %v2033, 0.0
        %v2126 = vmax.f32 %v2038, 0.0
        %v2127 = vmax.f32 %v2041, 0.0
        %v2128 = vmax.f32 %v2046, 0.0
        %v2129 = vmax.f32 %v2049, 0.0
        %v2130 = vmax.f32 %v2054, 0.0
        %v2131 = vmax.f32 %v2057, 0.0
        %v2132 = vmax.f32 %v2062, 0.0
        %v2133 = vmax.f32 %v2065, 0.0
        %v2134 = vmax.f32 %v2070, 0.0
        %v2135 = vmax.f32 %v2073, 0.0
        %v2136 = vmax.f32 %v2078, 0.0
        %v2137 = vmax.f32 %v2081, 0.0
        %v2138 = vmax.f32 %v2086, 0.0
        %v2139 = vmax.f32 %v2089, 0.0
        %v2140 = vmax.f32 %v2094, 0.0
        %v2141 = vmax.f32 %v2097, 0.0
        %v2142 = vmax.f32 %v2102, 0.0
        %v2143 = vmax.f32 %v2105, 0.0
        %2144 = vst [vmem:[#allocation2] sm:$0xff] %v2108
        %2145 = vst [vmem:[#allocation2 + $0x8] sm:$0xff] %v2109
        %2146 = vst [vmem:[#allocation2 + $0x10] sm:$0xff] %v2110
        %2147 = vst [vmem:[#allocation2 + $0x18] sm:$0xff] %v2111
        %2148 = vst [vmem:[#allocation2 + $0x20] sm:$0xff] %v2112
        %2149 = vst [vmem:[#allocation2 + $0x28] sm:$0xff] %v2113
        %2150 = vst [vmem:[#allocation2 + $0x30] sm:$0xff] %v2114
        %2151 = vst [vmem:[#allocation2 + $0x38] sm:$0xff] %v2115
        %2152 = vst [vmem:[#allocation2 + $0x40] sm:$0xff] %v2116
        %2153 = vst [vmem:[#allocation2 + $0x48] sm:$0xff] %v2117
        %2154 = vst [vmem:[#allocation2 + $0x50] sm:$0xff] %v2118
        %2155 = vst [vmem:[#allocation2 + $0x58] sm:$0xff] %v2119
        %2156 = vst [vmem:[#allocation2 + $0x60] sm:$0xff] %v2120
        %2157 = vst [vmem:[#allocation2 + $0x68] sm:$0xff] %v2121
        %2158 = vst [vmem:[#allocation2 + $0x70] sm:$0xff] %v2122
        %2159 = vst [vmem:[#allocation2 + $0x78] sm:$0xff] %v2123
        %2160 = vst [vmem:[#allocation2 + $0x80] sm:$0xff] %v2124
        %2161 = vst [vmem:[#allocation2 + $0x88] sm:$0xff] %v2125
        %2162 = vst [vmem:[#allocation2 + $0x90] sm:$0xff] %v2126
        %2163 = vst [vmem:[#allocation2 + $0x98] sm:$0xff] %v2127
        %2164 = vst [vmem:[#allocation2 + $0xa0] sm:$0xff] %v2128
        %2165 = vst [vmem:[#allocation2 + $0xa8] sm:$0xff] %v2129
        %2166 = vst [vmem:[#allocation2 + $0xb0] sm:$0xff] %v2130
        %2167 = vst [vmem:[#allocation2 + $0xb8] sm:$0xff] %v2131
        %2168 = vst [vmem:[#allocation2 + $0xc0] sm:$0xff] %v2132
        %2169 = vst [vmem:[#allocation2 + $0xc8] sm:$0xff] %v2133
        %2170 = vst [vmem:[#allocation2 + $0xd0] sm:$0xff] %v2134
        %2171 = vst [vmem:[#allocation2 + $0xd8] sm:$0xff] %v2135
        %2172 = vst [vmem:[#allocation2 + $0xe0] sm:$0xff] %v2136
        %2173 = vst [vmem:[#allocation2 + $0xe8] sm:$0xff] %v2137
        %2174 = vst [vmem:[#allocation2 + $0xf0] sm:$0xff] %v2138
        %2175 = vst [vmem:[#allocation2 + $0xf8] sm:$0xff] %v2139
        %2176 = vst [vmem:[#allocation2 + $0x100] sm:$0xff] %v2140
        %2177 = vst [vmem:[#allocation2 + $0x108] sm:$0xff] %v2141
        %2178 = vst [vmem:[#allocation2 + $0x110] sm:$0xff] %v2142
        %2179 = vst [vmem:[#allocation2 + $0x118] sm:$0xff] %v2143
        %p2180 = scmp.eq.s32.totalorder %s28, 0
        // Predicated region
        $region53: #{tpu_custom_call.1} parent=39 // pred_check
          %p2181 = pneg %p2180
        $region54: #{tpu_custom_call.1} parent=39 // pred_check_branch
          %2183 = sbr.rel (%p2181) target = $region56
        $region55: #{tpu_custom_call.1} parent=39 // pred_region
          %2184 = vst [vmem:[#allocation2] sm:$0xff] 0.0
          %2185 = vst [vmem:[#allocation2 + $0x8] sm:$0xff] 0.0
          %2186 = vst [vmem:[#allocation2 + $0x110] sm:$0xff] 0.0
          %2187 = vst [vmem:[#allocation2 + $0x118] sm:$0xff] 0.0
        $region56: #{tpu_custom_call.1} parent=39 // pred_fallthru
          _
        %v2188 = vld [vmem:[#allocation2] sm:$0xff]
        %v2189 = vld [vmem:[#allocation2 + $0x8] sm:$0xff]
        %v2190 = vld [vmem:[#allocation2 + $0x10] sm:$0xff]
        %v2191 = vld [vmem:[#allocation2 + $0x18] sm:$0xff]
        %v2192 = vld [vmem:[#allocation2 + $0x20] sm:$0xff]
        %v2193 = vld [vmem:[#allocation2 + $0x28] sm:$0xff]
        %v2194 = vld [vmem:[#allocation2 + $0x30] sm:$0xff]
        %v2195 = vld [vmem:[#allocation2 + $0x38] sm:$0xff]
        %v2196 = vld [vmem:[#allocation2 + $0x40] sm:$0xff]
        %v2197 = vld [vmem:[#allocation2 + $0x48] sm:$0xff]
        %v2198 = vld [vmem:[#allocation2 + $0x50] sm:$0xff]
        %v2199 = vld [vmem:[#allocation2 + $0x58] sm:$0xff]
        %v2200 = vld [vmem:[#allocation2 + $0x60] sm:$0xff]
        %v2201 = vld [vmem:[#allocation2 + $0x68] sm:$0xff]
        %v2202 = vld [vmem:[#allocation2 + $0x70] sm:$0xff]
        %v2203 = vld [vmem:[#allocation2 + $0x78] sm:$0xff]
        %v2204 = vld [vmem:[#allocation2 + $0x80] sm:$0xff]
        %v2205 = vld [vmem:[#allocation2 + $0x88] sm:$0xff]
        %v2206 = vld [vmem:[#allocation2 + $0x90] sm:$0xff]
        %v2207 = vld [vmem:[#allocation2 + $0x98] sm:$0xff]
        %v2208 = vld [vmem:[#allocation2 + $0xa0] sm:$0xff]
        %v2209 = vld [vmem:[#allocation2 + $0xa8] sm:$0xff]
        %v2210 = vld [vmem:[#allocation2 + $0xb0] sm:$0xff]
        %v2211 = vld [vmem:[#allocation2 + $0xb8] sm:$0xff]
        %v2212 = vld [vmem:[#allocation2 + $0xc0] sm:$0xff]
        %v2213 = vld [vmem:[#allocation2 + $0xc8] sm:$0xff]
        %v2214 = vld [vmem:[#allocation2 + $0xd0] sm:$0xff]
        %v2215 = vld [vmem:[#allocation2 + $0xd8] sm:$0xff]
        %v2216 = vld [vmem:[#allocation2 + $0xe0] sm:$0xff]
        %v2217 = vld [vmem:[#allocation2 + $0xe8] sm:$0xff]
        %v2218 = vld [vmem:[#allocation2 + $0xf0] sm:$0xff]
        %v2219 = vld [vmem:[#allocation2 + $0xf8] sm:$0xff]
        %v2220 = vld [vmem:[#allocation2 + $0x100] sm:$0xff]
        %v2221 = vld [vmem:[#allocation2 + $0x108] sm:$0xff]
        %v2222 = vld [vmem:[#allocation2 + $0x110] sm:$0xff]
        %v2223 = vld [vmem:[#allocation2 + $0x118] sm:$0xff]
        %v2224 = vrot.slane %v2188, 7
        %v2225 = vrot.slane %v2189, 7
        %v2226 = vrot.slane %v2190, 7
        %v2227 = vrot.slane %v2191, 7
        %v2228 = vrot.slane %v2192, 7
        %v2229 = vrot.slane %v2193, 7
        %v2230 = vrot.slane %v2194, 7
        %v2231 = vrot.slane %v2195, 7
        %v2232 = vrot.slane %v2196, 7
        %v2233 = vrot.slane %v2197, 7
        %v2234 = vrot.slane %v2198, 7
        %v2235 = vrot.slane %v2199, 7
        %v2236 = vrot.slane %v2200, 7
        %v2237 = vrot.slane %v2201, 7
        %v2238 = vrot.slane %v2202, 7
        %v2239 = vrot.slane %v2203, 7
        %v2240 = vrot.slane %v2204, 7
        %v2241 = vrot.slane %v2205, 7
        %v2242 = vrot.slane %v2206, 7
        %v2243 = vrot.slane %v2207, 7
        %v2244 = vrot.slane %v2208, 7
        %v2245 = vrot.slane %v2209, 7
        %v2246 = vrot.slane %v2210, 7
        %v2247 = vrot.slane %v2211, 7
        %v2248 = vrot.slane %v2212, 7
        %v2249 = vrot.slane %v2213, 7
        %v2250 = vrot.slane %v2214, 7
        %v2251 = vrot.slane %v2215, 7
        %v2252 = vrot.slane %v2216, 7
        %v2253 = vrot.slane %v2217, 7
        %v2254 = vrot.slane %v2218, 7
        %v2255 = vrot.slane %v2219, 7
        %v2256 = vrot.slane %v2220, 7
        %v2257 = vrot.slane %v2221, 7
        %v2258 = vrot.slane %v2222, 7
        %v2259 = vrot.slane %v2223, 7
        %v2260 = vsel %vm378, %v2258, %v2259
        %v2261 = vsel %vm378, %v2257, %v2258
        %v2262 = vsel %vm378, %v2256, %v2257
        %v2263 = vsel %vm378, %v2255, %v2256
        %v2264 = vsel %vm378, %v2254, %v2255
        %v2265 = vsel %vm378, %v2253, %v2254
        %v2266 = vsel %vm378, %v2252, %v2253
        %v2267 = vsel %vm378, %v2251, %v2252
        %v2268 = vsel %vm378, %v2250, %v2251
        %v2269 = vsel %vm378, %v2249, %v2250
        %v2270 = vsel %vm378, %v2248, %v2249
        %v2271 = vsel %vm378, %v2247, %v2248
        %v2272 = vsel %vm378, %v2246, %v2247
        %v2273 = vsel %vm378, %v2245, %v2246
        %v2274 = vsel %vm378, %v2244, %v2245
        %v2275 = vsel %vm378, %v2243, %v2244
        %v2276 = vsel %vm378, %v2242, %v2243
        %v2277 = vsel %vm378, %v2241, %v2242
        %v2278 = vsel %vm378, %v2240, %v2241
        %v2279 = vsel %vm378, %v2239, %v2240
        %v2280 = vsel %vm378, %v2238, %v2239
        %v2281 = vsel %vm378, %v2237, %v2238
        %v2282 = vsel %vm378, %v2236, %v2237
        %v2283 = vsel %vm378, %v2235, %v2236
        %v2284 = vsel %vm378, %v2234, %v2235
        %v2285 = vsel %vm378, %v2233, %v2234
        %v2286 = vsel %vm378, %v2232, %v2233
        %v2287 = vsel %vm378, %v2231, %v2232
        %v2288 = vsel %vm378, %v2230, %v2231
        %v2289 = vsel %vm378, %v2229, %v2230
        %v2290 = vsel %vm378, %v2228, %v2229
        %v2291 = vsel %vm378, %v2227, %v2228
        %v2292 = vsel %vm378, %v2226, %v2227
        %v2293 = vsel %vm378, %v2225, %v2226
        %v2294 = vsel %vm378, %v2224, %v2225
        %v2295 = vsel %vm378, %v2259, %v2224
        %v2296 = vsel %vm292, %v2295, 0.0
        %v2297 = vsel %vm293, %v2294, 0.0
        %v2298 = vsel %vm292, %v2293, 0.0
        %v2299 = vsel %vm293, %v2292, 0.0
        %v2300 = vsel %vm292, %v2291, 0.0
        %v2301 = vsel %vm293, %v2290, 0.0
        %v2302 = vsel %vm292, %v2289, 0.0
        %v2303 = vsel %vm293, %v2288, 0.0
        %v2304 = vsel %vm292, %v2287, 0.0
        %v2305 = vsel %vm293, %v2286, 0.0
        %v2306 = vsel %vm292, %v2285, 0.0
        %v2307 = vsel %vm293, %v2284, 0.0
        %v2308 = vsel %vm292, %v2283, 0.0
        %v2309 = vsel %vm293, %v2282, 0.0
        %v2310 = vsel %vm292, %v2281, 0.0
        %v2311 = vsel %vm293, %v2280, 0.0
        %v2312 = vsel %vm292, %v2279, 0.0
        %v2313 = vsel %vm293, %v2278, 0.0
        %v2314 = vsel %vm292, %v2277, 0.0
        %v2315 = vsel %vm293, %v2276, 0.0
        %v2316 = vsel %vm292, %v2275, 0.0
        %v2317 = vsel %vm293, %v2274, 0.0
        %v2318 = vsel %vm292, %v2273, 0.0
        %v2319 = vsel %vm293, %v2272, 0.0
        %v2320 = vsel %vm292, %v2271, 0.0
        %v2321 = vsel %vm293, %v2270, 0.0
        %v2322 = vsel %vm292, %v2269, 0.0
        %v2323 = vsel %vm293, %v2268, 0.0
        %v2324 = vsel %vm292, %v2267, 0.0
        %v2325 = vsel %vm293, %v2266, 0.0
        %v2326 = vsel %vm292, %v2265, 0.0
        %v2327 = vsel %vm293, %v2264, 0.0
        %v2328 = vsel %vm292, %v2263, 0.0
        %v2329 = vsel %vm293, %v2262, 0.0
        %v2330 = vsel %vm292, %v2261, 0.0
        %v2331 = vsel %vm293, %v2260, 0.0
        %v2332 = vrot.slane %v2188, 1
        %v2333 = vrot.slane %v2189, 1
        %v2334 = vrot.slane %v2190, 1
        %v2335 = vrot.slane %v2191, 1
        %v2336 = vrot.slane %v2192, 1
        %v2337 = vrot.slane %v2193, 1
        %v2338 = vrot.slane %v2194, 1
        %v2339 = vrot.slane %v2195, 1
        %v2340 = vrot.slane %v2196, 1
        %v2341 = vrot.slane %v2197, 1
        %v2342 = vrot.slane %v2198, 1
        %v2343 = vrot.slane %v2199, 1
        %v2344 = vrot.slane %v2200, 1
        %v2345 = vrot.slane %v2201, 1
        %v2346 = vrot.slane %v2202, 1
        %v2347 = vrot.slane %v2203, 1
        %v2348 = vrot.slane %v2204, 1
        %v2349 = vrot.slane %v2205, 1
        %v2350 = vrot.slane %v2206, 1
        %v2351 = vrot.slane %v2207, 1
        %v2352 = vrot.slane %v2208, 1
        %v2353 = vrot.slane %v2209, 1
        %v2354 = vrot.slane %v2210, 1
        %v2355 = vrot.slane %v2211, 1
        %v2356 = vrot.slane %v2212, 1
        %v2357 = vrot.slane %v2213, 1
        %v2358 = vrot.slane %v2214, 1
        %v2359 = vrot.slane %v2215, 1
        %v2360 = vrot.slane %v2216, 1
        %v2361 = vrot.slane %v2217, 1
        %v2362 = vrot.slane %v2218, 1
        %v2363 = vrot.slane %v2219, 1
        %v2364 = vrot.slane %v2220, 1
        %v2365 = vrot.slane %v2221, 1
        %v2366 = vrot.slane %v2222, 1
        %v2367 = vrot.slane %v2223, 1
        %v2368 = vsel %vm499, %v2366, %v2367
        %v2369 = vsel %vm499, %v2365, %v2366
        %v2370 = vsel %vm499, %v2364, %v2365
        %v2371 = vsel %vm499, %v2363, %v2364
        %v2372 = vsel %vm499, %v2362, %v2363
        %v2373 = vsel %vm499, %v2361, %v2362
        %v2374 = vsel %vm499, %v2360, %v2361
        %v2375 = vsel %vm499, %v2359, %v2360
        %v2376 = vsel %vm499, %v2358, %v2359
        %v2377 = vsel %vm499, %v2357, %v2358
        %v2378 = vsel %vm499, %v2356, %v2357
        %v2379 = vsel %vm499, %v2355, %v2356
        %v2380 = vsel %vm499, %v2354, %v2355
        %v2381 = vsel %vm499, %v2353, %v2354
        %v2382 = vsel %vm499, %v2352, %v2353
        %v2383 = vsel %vm499, %v2351, %v2352
        %v2384 = vsel %vm499, %v2350, %v2351
        %v2385 = vsel %vm499, %v2349, %v2350
        %v2386 = vsel %vm499, %v2348, %v2349
        %v2387 = vsel %vm499, %v2347, %v2348
        %v2388 = vsel %vm499, %v2346, %v2347
        %v2389 = vsel %vm499, %v2345, %v2346
        %v2390 = vsel %vm499, %v2344, %v2345
        %v2391 = vsel %vm499, %v2343, %v2344
        %v2392 = vsel %vm499, %v2342, %v2343
        %v2393 = vsel %vm499, %v2341, %v2342
        %v2394 = vsel %vm499, %v2340, %v2341
        %v2395 = vsel %vm499, %v2339, %v2340
        %v2396 = vsel %vm499, %v2338, %v2339
        %v2397 = vsel %vm499, %v2337, %v2338
        %v2398 = vsel %vm499, %v2336, %v2337
        %v2399 = vsel %vm499, %v2335, %v2336
        %v2400 = vsel %vm499, %v2334, %v2335
        %v2401 = vsel %vm499, %v2333, %v2334
        %v2402 = vsel %vm499, %v2332, %v2333
        %v2403 = vsel %vm499, %v2367, %v2332
        %v2404 = vsel %vm294, %v2402, 0.0
        %v2405 = vsel %vm295, %v2401, 0.0
        %v2406 = vsel %vm294, %v2400, 0.0
        %v2407 = vsel %vm295, %v2399, 0.0
        %v2408 = vsel %vm294, %v2398, 0.0
        %v2409 = vsel %vm295, %v2397, 0.0
        %v2410 = vsel %vm294, %v2396, 0.0
        %v2411 = vsel %vm295, %v2395, 0.0
        %v2412 = vsel %vm294, %v2394, 0.0
        %v2413 = vsel %vm295, %v2393, 0.0
        %v2414 = vsel %vm294, %v2392, 0.0
        %v2415 = vsel %vm295, %v2391, 0.0
        %v2416 = vsel %vm294, %v2390, 0.0
        %v2417 = vsel %vm295, %v2389, 0.0
        %v2418 = vsel %vm294, %v2388, 0.0
        %v2419 = vsel %vm295, %v2387, 0.0
        %v2420 = vsel %vm294, %v2386, 0.0
        %v2421 = vsel %vm295, %v2385, 0.0
        %v2422 = vsel %vm294, %v2384, 0.0
        %v2423 = vsel %vm295, %v2383, 0.0
        %v2424 = vsel %vm294, %v2382, 0.0
        %v2425 = vsel %vm295, %v2381, 0.0
        %v2426 = vsel %vm294, %v2380, 0.0
        %v2427 = vsel %vm295, %v2379, 0.0
        %v2428 = vsel %vm294, %v2378, 0.0
        %v2429 = vsel %vm295, %v2377, 0.0
        %v2430 = vsel %vm294, %v2376, 0.0
        %v2431 = vsel %vm295, %v2375, 0.0
        %v2432 = vsel %vm294, %v2374, 0.0
        %v2433 = vsel %vm295, %v2373, 0.0
        %v2434 = vsel %vm294, %v2372, 0.0
        %v2435 = vsel %vm295, %v2371, 0.0
        %v2436 = vsel %vm294, %v2370, 0.0
        %v2437 = vsel %vm295, %v2369, 0.0
        %v2438 = vsel %vm294, %v2368, 0.0
        %v2439 = vsel %vm295, %v2403, 0.0
        %v2440 = vpack.c.bf16 %v2297, %v2296
        %v2441 = vpack.c.bf16 %v2299, %v2298
        %v2442 = vpack.c.bf16 %v2301, %v2300
        %v2443 = vpack.c.bf16 %v2303, %v2302
        %v2444 = vpack.c.bf16 %v2305, %v2304
        %v2445 = vpack.c.bf16 %v2307, %v2306
        %v2446 = vpack.c.bf16 %v2309, %v2308
        %v2447 = vpack.c.bf16 %v2311, %v2310
        %v2448 = vpack.c.bf16 %v2313, %v2312
        %v2449 = vpack.c.bf16 %v2315, %v2314
        %v2450 = vpack.c.bf16 %v2317, %v2316
        %v2451 = vpack.c.bf16 %v2319, %v2318
        %v2452 = vpack.c.bf16 %v2321, %v2320
        %v2453 = vpack.c.bf16 %v2323, %v2322
        %v2454 = vpack.c.bf16 %v2325, %v2324
        %v2455 = vpack.c.bf16 %v2327, %v2326
        %v2456 = vpack.c.bf16 %v2329, %v2328
        %v2457 = vpack.c.bf16 %v2331, %v2330
        %v2458 = vpack.c.bf16 %v2189, %v2188
        %v2459 = vpack.c.bf16 %v2191, %v2190
        %v2460 = vpack.c.bf16 %v2193, %v2192
        %v2461 = vpack.c.bf16 %v2195, %v2194
        %v2462 = vpack.c.bf16 %v2197, %v2196
        %v2463 = vpack.c.bf16 %v2199, %v2198
        %v2464 = vpack.c.bf16 %v2201, %v2200
        %v2465 = vpack.c.bf16 %v2203, %v2202
        %v2466 = vpack.c.bf16 %v2205, %v2204
        %v2467 = vpack.c.bf16 %v2207, %v2206
        %v2468 = vpack.c.bf16 %v2209, %v2208
        %v2469 = vpack.c.bf16 %v2211, %v2210
        %v2470 = vpack.c.bf16 %v2213, %v2212
        %v2471 = vpack.c.bf16 %v2215, %v2214
        %v2472 = vpack.c.bf16 %v2217, %v2216
        %v2473 = vpack.c.bf16 %v2219, %v2218
        %v2474 = vpack.c.bf16 %v2221, %v2220
        %v2475 = vpack.c.bf16 %v2223, %v2222
        %v2476 = vpack.c.bf16 %v2405, %v2404
        %v2477 = vpack.c.bf16 %v2407, %v2406
        %v2478 = vpack.c.bf16 %v2409, %v2408
        %v2479 = vpack.c.bf16 %v2411, %v2410
        %v2480 = vpack.c.bf16 %v2413, %v2412
        %v2481 = vpack.c.bf16 %v2415, %v2414
        %v2482 = vpack.c.bf16 %v2417, %v2416
        %v2483 = vpack.c.bf16 %v2419, %v2418
        %v2484 = vpack.c.bf16 %v2421, %v2420
        %v2485 = vpack.c.bf16 %v2423, %v2422
        %v2486 = vpack.c.bf16 %v2425, %v2424
        %v2487 = vpack.c.bf16 %v2427, %v2426
        %v2488 = vpack.c.bf16 %v2429, %v2428
        %v2489 = vpack.c.bf16 %v2431, %v2430
        %v2490 = vpack.c.bf16 %v2433, %v2432
        %v2491 = vpack.c.bf16 %v2435, %v2434
        %v2492 = vpack.c.bf16 %v2437, %v2436
        %v2493 = vpack.c.bf16 %v2439, %v2438
        %v2494 = vld [vmem:[#allocation8] sm:$0xf]
        %v2495 = vld [vmem:[#allocation8 + $0x4] sm:$0xf]
        %v2496 = vld [vmem:[#allocation8 + $0x8] sm:$0xf]
        %v2497 = vld [vmem:[#allocation8 + $0xc] sm:$0xf]
        %v2498 = vld [vmem:[#allocation8 + $0x10] sm:$0xf]
        %v2499 = vld [vmem:[#allocation8 + $0x14] sm:$0xf]
        %v2500 = vld [vmem:[#allocation8 + $0x18] sm:$0xf]
        %v2501 = vld [vmem:[#allocation8 + $0x1c] sm:$0xf]
        %v2502 = vld [vmem:[#allocation8 + $0x20] sm:$0xf]
        %v2503 = vld [vmem:[#allocation8 + $0x24] sm:$0xf]
        %v2504 = vld [vmem:[#allocation8 + $0x28] sm:$0xf]
        %v2505 = vld [vmem:[#allocation8 + $0x2c] sm:$0xf]
        %v2506 = vld [vmem:[#allocation8 + $0x30] sm:$0xf]
        %v2507 = vld [vmem:[#allocation8 + $0x34] sm:$0xf]
        %v2508 = vld [vmem:[#allocation8 + $0x38] sm:$0xf]
        %v2509 = vld [vmem:[#allocation8 + $0x3c] sm:$0xf]
        %v2510 = vld [vmem:[#allocation8 + $0x40] sm:$0xf]
        %v2511 = vld [vmem:[#allocation8 + $0x44] sm:$0xf]
        %v2512 = vld [vmem:[#allocation8 + $0x48] sm:$0xf]
        %v2513 = vld [vmem:[#allocation8 + $0x4c] sm:$0xf]
        %v2514 = vld [vmem:[#allocation8 + $0x50] sm:$0xf]
        %v2515 = vld [vmem:[#allocation8 + $0x54] sm:$0xf]
        %v2516 = vld [vmem:[#allocation8 + $0x58] sm:$0xf]
        %v2517 = vld [vmem:[#allocation8 + $0x5c] sm:$0xf]
        %v2518 = vld [vmem:[#allocation8 + $0x60] sm:$0xf]
        %v2519 = vld [vmem:[#allocation8 + $0x64] sm:$0xf]
        %v2520 = vld [vmem:[#allocation8 + $0x68] sm:$0xf]
        %v2521 = vld [vmem:[#allocation8 + $0x6c] sm:$0xf]
        %v2522 = vld [vmem:[#allocation8 + $0x70] sm:$0xf]
        %v2523 = vld [vmem:[#allocation8 + $0x74] sm:$0xf]
        %v2524 = vld [vmem:[#allocation8 + $0x78] sm:$0xf]
        %v2525 = vld [vmem:[#allocation8 + $0x7c] sm:$0xf]
        %v2526 = vld [vmem:[#allocation8 + $0x80] sm:$0xf]
        %v2527 = vld [vmem:[#allocation8 + $0x84] sm:$0xf]
        %v2528 = vld [vmem:[#allocation8 + $0x88] sm:$0xf]
        %v2529 = vld [vmem:[#allocation8 + $0x8c] sm:$0xf]
        %v2530 = vld [vmem:[#allocation8 + $0x90] sm:$0xf]
        %v2531 = vld [vmem:[#allocation8 + $0x94] sm:$0xf]
        %v2532 = vld [vmem:[#allocation8 + $0x98] sm:$0xf]
        %v2533 = vld [vmem:[#allocation8 + $0x9c] sm:$0xf]
        %v2534 = vld [vmem:[#allocation8 + $0xa0] sm:$0xf]
        %v2535 = vld [vmem:[#allocation8 + $0xa4] sm:$0xf]
        %v2536 = vld [vmem:[#allocation8 + $0xa8] sm:$0xf]
        %v2537 = vld [vmem:[#allocation8 + $0xac] sm:$0xf]
        %v2538 = vld [vmem:[#allocation8 + $0xb0] sm:$0xf]
        %v2539 = vld [vmem:[#allocation8 + $0xb4] sm:$0xf]
        %v2540 = vld [vmem:[#allocation8 + $0xb8] sm:$0xf]
        %v2541 = vld [vmem:[#allocation8 + $0xbc] sm:$0xf]
        %v2542 = vld [vmem:[#allocation8 + $0xc0] sm:$0xf]
        %v2543 = vld [vmem:[#allocation8 + $0xc4] sm:$0xf]
        %v2544 = vld [vmem:[#allocation8 + $0xc8] sm:$0xf]
        %v2545 = vld [vmem:[#allocation8 + $0xcc] sm:$0xf]
        %v2546 = vld [vmem:[#allocation8 + $0xd0] sm:$0xf]
        %v2547 = vld [vmem:[#allocation8 + $0xd4] sm:$0xf]
        %v2548 = vld [vmem:[#allocation8 + $0xd8] sm:$0xf]
        %v2549 = vld [vmem:[#allocation8 + $0xdc] sm:$0xf]
        %v2550 = vld [vmem:[#allocation8 + $0xe0] sm:$0xf]
        %v2551 = vld [vmem:[#allocation8 + $0xe4] sm:$0xf]
        %v2552 = vld [vmem:[#allocation8 + $0xe8] sm:$0xf]
        %v2553 = vld [vmem:[#allocation8 + $0xec] sm:$0xf]
        %v2554 = vld [vmem:[#allocation8 + $0xf0] sm:$0xf]
        %v2555 = vld [vmem:[#allocation8 + $0xf4] sm:$0xf]
        %v2556 = vld [vmem:[#allocation8 + $0xf8] sm:$0xf]
        %v2557 = vld [vmem:[#allocation8 + $0xfc] sm:$0xf]
        %v2558 = vld [vmem:[#allocation8 + $0x100] sm:$0xf]
        %v2559 = vld [vmem:[#allocation8 + $0x104] sm:$0xf]
        %v2560 = vld [vmem:[#allocation8 + $0x108] sm:$0xf]
        %v2561 = vld [vmem:[#allocation8 + $0x10c] sm:$0xf]
        %v2562 = vld [vmem:[#allocation8 + $0x110] sm:$0xf]
        %v2563 = vld [vmem:[#allocation8 + $0x114] sm:$0xf]
        %v2564 = vld [vmem:[#allocation8 + $0x118] sm:$0xf]
        %v2565 = vld [vmem:[#allocation8 + $0x11c] sm:$0xf]
        %v2566 = vld [vmem:[#allocation8 + $0x120] sm:$0xf]
        %v2567 = vld [vmem:[#allocation8 + $0x124] sm:$0xf]
        %v2568 = vld [vmem:[#allocation8 + $0x128] sm:$0xf]
        %v2569 = vld [vmem:[#allocation8 + $0x12c] sm:$0xf]
        %v2570 = vld [vmem:[#allocation8 + $0x130] sm:$0xf]
        %v2571 = vld [vmem:[#allocation8 + $0x134] sm:$0xf]
        %v2572 = vld [vmem:[#allocation8 + $0x138] sm:$0xf]
        %v2573 = vld [vmem:[#allocation8 + $0x13c] sm:$0xf]
        %v2574 = vld [vmem:[#allocation8 + $0x140] sm:$0xf]
        %v2575 = vld [vmem:[#allocation8 + $0x144] sm:$0xf]
        %v2576 = vld [vmem:[#allocation8 + $0x148] sm:$0xf]
        %v2577 = vld [vmem:[#allocation8 + $0x14c] sm:$0xf]
        %v2578 = vld [vmem:[#allocation8 + $0x150] sm:$0xf]
        %v2579 = vld [vmem:[#allocation8 + $0x154] sm:$0xf]
        %v2580 = vld [vmem:[#allocation8 + $0x158] sm:$0xf]
        %v2581 = vld [vmem:[#allocation8 + $0x15c] sm:$0xf]
        %v2582 = vld [vmem:[#allocation8 + $0x160] sm:$0xf]
        %v2583 = vld [vmem:[#allocation8 + $0x164] sm:$0xf]
        %v2584 = vld [vmem:[#allocation8 + $0x168] sm:$0xf]
        %v2585 = vld [vmem:[#allocation8 + $0x16c] sm:$0xf]
        %v2586 = vld [vmem:[#allocation8 + $0x170] sm:$0xf]
        %v2587 = vld [vmem:[#allocation8 + $0x174] sm:$0xf]
        %v2588 = vld [vmem:[#allocation8 + $0x178] sm:$0xf]
        %v2589 = vld [vmem:[#allocation8 + $0x17c] sm:$0xf]
        %v2590 = vld [vmem:[#allocation8 + $0x180] sm:$0xf]
        %v2591 = vld [vmem:[#allocation8 + $0x184] sm:$0xf]
        %v2592 = vld [vmem:[#allocation8 + $0x188] sm:$0xf]
        %v2593 = vld [vmem:[#allocation8 + $0x18c] sm:$0xf]
        %v2594 = vld [vmem:[#allocation8 + $0x190] sm:$0xf]
        %v2595 = vld [vmem:[#allocation8 + $0x194] sm:$0xf]
        %v2596 = vld [vmem:[#allocation8 + $0x198] sm:$0xf]
        %v2597 = vld [vmem:[#allocation8 + $0x19c] sm:$0xf]
        %v2598 = vld [vmem:[#allocation8 + $0x1a0] sm:$0xf]
        %v2599 = vld [vmem:[#allocation8 + $0x1a4] sm:$0xf]
        %v2600 = vld [vmem:[#allocation8 + $0x1a8] sm:$0xf]
        %v2601 = vld [vmem:[#allocation8 + $0x1ac] sm:$0xf]
        %v2602 = vld [vmem:[#allocation8 + $0x1b0] sm:$0xf]
        %v2603 = vld [vmem:[#allocation8 + $0x1b4] sm:$0xf]
        %v2604 = vld [vmem:[#allocation8 + $0x1b8] sm:$0xf]
        %v2605 = vld [vmem:[#allocation8 + $0x1bc] sm:$0xf]
        %v2606 = vld [vmem:[#allocation8 + $0x1c0] sm:$0xf]
        %v2607 = vld [vmem:[#allocation8 + $0x1c4] sm:$0xf]
        %v2608 = vld [vmem:[#allocation8 + $0x1c8] sm:$0xf]
        %v2609 = vld [vmem:[#allocation8 + $0x1cc] sm:$0xf]
        %v2610 = vld [vmem:[#allocation8 + $0x1d0] sm:$0xf]
        %v2611 = vld [vmem:[#allocation8 + $0x1d4] sm:$0xf]
        %v2612 = vld [vmem:[#allocation8 + $0x1d8] sm:$0xf]
        %v2613 = vld [vmem:[#allocation8 + $0x1dc] sm:$0xf]
        %v2614 = vld [vmem:[#allocation8 + $0x1e0] sm:$0xf]
        %v2615 = vld [vmem:[#allocation8 + $0x1e4] sm:$0xf]
        %v2616 = vld [vmem:[#allocation8 + $0x1e8] sm:$0xf]
        %v2617 = vld [vmem:[#allocation8 + $0x1ec] sm:$0xf]
        %v2618 = vld [vmem:[#allocation8 + $0x1f0] sm:$0xf]
        %v2619 = vld [vmem:[#allocation8 + $0x1f4] sm:$0xf]
        %v2620 = vld [vmem:[#allocation8 + $0x1f8] sm:$0xf]
        %v2621 = vld [vmem:[#allocation8 + $0x1fc] sm:$0xf]
        %v2622 = vld [vmem:[#allocation8 + $0x200] sm:$0xf]
        %v2623 = vld [vmem:[#allocation8 + $0x204] sm:$0xf]
        %v2624 = vld [vmem:[#allocation8 + $0x208] sm:$0xf]
        %v2625 = vld [vmem:[#allocation8 + $0x20c] sm:$0xf]
        %v2626 = vld [vmem:[#allocation8 + $0x210] sm:$0xf]
        %v2627 = vld [vmem:[#allocation8 + $0x214] sm:$0xf]
        %v2628 = vld [vmem:[#allocation8 + $0x218] sm:$0xf]
        %v2629 = vld [vmem:[#allocation8 + $0x21c] sm:$0xf]
        %v2630 = vld [vmem:[#allocation8 + $0x220] sm:$0xf]
        %v2631 = vld [vmem:[#allocation8 + $0x224] sm:$0xf]
        %v2632 = vld [vmem:[#allocation8 + $0x228] sm:$0xf]
        %v2633 = vld [vmem:[#allocation8 + $0x22c] sm:$0xf]
        %v2634 = vld [vmem:[#allocation8 + $0x230] sm:$0xf]
        %v2635 = vld [vmem:[#allocation8 + $0x234] sm:$0xf]
        %v2636 = vld [vmem:[#allocation8 + $0x238] sm:$0xf]
        %v2637 = vld [vmem:[#allocation8 + $0x23c] sm:$0xf]
        %s2638 = sadd.s32 %s288, 2
        %s2639 = smul.u32 %s2638, 16
        %s2640 = scalar_lea.vmem %s251, %s2639 [#allocation3]
        %v2641 = vld [vmem:[%s2640] sm:$0xff]
        %v2642 = vld [vmem:[%s2640 + $0x8] sm:$0xff]
        %v2643 = vld [vmem:[%s2640 + $0x10] sm:$0xff]
        %v2644 = vld [vmem:[%s2640 + $0x18] sm:$0xff]
        %v2645 = vld [vmem:[%s2640 + $0x20] sm:$0xff]
        %v2646 = vld [vmem:[%s2640 + $0x28] sm:$0xff]
        %v2647 = vld [vmem:[%s2640 + $0x30] sm:$0xff]
        %v2648 = vld [vmem:[%s2640 + $0x38] sm:$0xff]
        %v2649 = vld [vmem:[%s2640 + $0x40] sm:$0xff]
        %v2650 = vld [vmem:[%s2640 + $0x48] sm:$0xff]
        %v2651 = vld [vmem:[%s2640 + $0x50] sm:$0xff]
        %v2652 = vld [vmem:[%s2640 + $0x58] sm:$0xff]
        %v2653 = vld [vmem:[%s2640 + $0x60] sm:$0xff]
        %v2654 = vld [vmem:[%s2640 + $0x68] sm:$0xff]
        %v2655 = vld [vmem:[%s2640 + $0x70] sm:$0xff]
        %v2656 = vld [vmem:[%s2640 + $0x78] sm:$0xff]
        %v2657 = vld [vmem:[%s2640 + $0x80] sm:$0xff]
        %v2658 = vld [vmem:[%s2640 + $0x88] sm:$0xff]
        %v2659 = vld [vmem:[%s2640 + $0x90] sm:$0xff]
        %v2660 = vld [vmem:[%s2640 + $0x98] sm:$0xff]
        %v2661 = vld [vmem:[%s2640 + $0xa0] sm:$0xff]
        %v2662 = vld [vmem:[%s2640 + $0xa8] sm:$0xff]
        %v2663 = vld [vmem:[%s2640 + $0xb0] sm:$0xff]
        %v2664 = vld [vmem:[%s2640 + $0xb8] sm:$0xff]
        %v2665 = vld [vmem:[%s2640 + $0xc0] sm:$0xff]
        %v2666 = vld [vmem:[%s2640 + $0xc8] sm:$0xff]
        %v2667 = vld [vmem:[%s2640 + $0xd0] sm:$0xff]
        %v2668 = vld [vmem:[%s2640 + $0xd8] sm:$0xff]
        %v2669 = vld [vmem:[%s2640 + $0xe0] sm:$0xff]
        %v2670 = vld [vmem:[%s2640 + $0xe8] sm:$0xff]
        %v2671 = vld [vmem:[%s2640 + $0xf0] sm:$0xff]
        %v2672 = vld [vmem:[%s2640 + $0xf8] sm:$0xff]
        %v2673 = vld [vmem:[%s4] sm:$0x1]
        %v2675 = vlaneseq
        %v2676 = vshrl.u32 %v2675, 7
        %v2677 = vsub.s32 0, %v2676
        %v2678 = vrot.slane %v2673, %v2677
        %v2824 = vunpack.c.l.b16 %v2494
        %v2825 = vunpack.c.l.b16 %v2495
        %v2826 = vunpack.c.l.b16 %v2496
        %v2827 = vunpack.c.l.b16 %v2497
        %v2828 = vunpack.c.l.b16 %v2498
        %v2829 = vunpack.c.l.b16 %v2499
        %v2830 = vunpack.c.l.b16 %v2500
        %v2831 = vunpack.c.l.b16 %v2501
        %v2832 = vunpack.c.l.b16 %v2502
        %v2833 = vunpack.c.l.b16 %v2503
        %v2834 = vunpack.c.l.b16 %v2504
        %v2835 = vunpack.c.l.b16 %v2505
        %v2836 = vunpack.c.l.b16 %v2506
        %v2837 = vunpack.c.l.b16 %v2507
        %v2838 = vunpack.c.l.b16 %v2508
        %v2839 = vunpack.c.l.b16 %v2509
        %v2840 = vunpack.c.l.b16 %v2510
        %v2841 = vunpack.c.l.b16 %v2511
        %v2842 = vunpack.c.l.b16 %v2512
        %v2843 = vunpack.c.l.b16 %v2513
        %v2844 = vunpack.c.l.b16 %v2514
        %v2845 = vunpack.c.l.b16 %v2515
        %v2846 = vunpack.c.l.b16 %v2516
        %v2847 = vunpack.c.l.b16 %v2517
        %v2848 = vunpack.c.l.b16 %v2518
        %v2849 = vunpack.c.l.b16 %v2519
        %v2850 = vunpack.c.l.b16 %v2520
        %v2851 = vunpack.c.l.b16 %v2521
        %v2852 = vunpack.c.l.b16 %v2522
        %v2853 = vunpack.c.l.b16 %v2523
        %v2854 = vunpack.c.l.b16 %v2524
        %v2855 = vunpack.c.l.b16 %v2525
        %v2856 = vunpack.c.l.b16 %v2526
        %v2857 = vunpack.c.l.b16 %v2527
        %v2858 = vunpack.c.l.b16 %v2528
        %v2859 = vunpack.c.l.b16 %v2529
        %v2860 = vunpack.c.l.b16 %v2530
        %v2861 = vunpack.c.l.b16 %v2531
        %v2862 = vunpack.c.l.b16 %v2532
        %v2863 = vunpack.c.l.b16 %v2533
        %v2864 = vunpack.c.l.b16 %v2534
        %v2865 = vunpack.c.l.b16 %v2535
        %v2866 = vunpack.c.l.b16 %v2536
        %v2867 = vunpack.c.l.b16 %v2537
        %v2868 = vunpack.c.l.b16 %v2538
        %v2869 = vunpack.c.l.b16 %v2539
        %v2870 = vunpack.c.l.b16 %v2540
        %v2871 = vunpack.c.l.b16 %v2541
        %v2872 = vunpack.c.l.b16 %v2542
        %v2873 = vunpack.c.l.b16 %v2543
        %v2874 = vunpack.c.l.b16 %v2544
        %v2875 = vunpack.c.l.b16 %v2545
        %v2876 = vunpack.c.l.b16 %v2546
        %v2877 = vunpack.c.l.b16 %v2547
        %v2878 = vunpack.c.l.b16 %v2548
        %v2879 = vunpack.c.l.b16 %v2549
        %v2880 = vunpack.c.l.b16 %v2550
        %v2881 = vunpack.c.l.b16 %v2551
        %v2882 = vunpack.c.l.b16 %v2552
        %v2883 = vunpack.c.l.b16 %v2553
        %v2884 = vunpack.c.l.b16 %v2554
        %v2885 = vunpack.c.l.b16 %v2555
        %v2886 = vunpack.c.l.b16 %v2556
        %v2887 = vunpack.c.l.b16 %v2557
        %v2888 = vunpack.c.l.b16 %v2558
        %v2889 = vunpack.c.l.b16 %v2559
        %v2890 = vunpack.c.l.b16 %v2560
        %v2891 = vunpack.c.l.b16 %v2561
        %v2892 = vunpack.c.l.b16 %v2562
        %v2893 = vunpack.c.l.b16 %v2563
        %v2894 = vunpack.c.l.b16 %v2564
        %v2895 = vunpack.c.l.b16 %v2565
        %v2896 = vunpack.c.l.b16 %v2566
        %v2897 = vunpack.c.l.b16 %v2567
        %v2898 = vunpack.c.l.b16 %v2568
        %v2899 = vunpack.c.l.b16 %v2569
        %v2900 = vunpack.c.l.b16 %v2570
        %v2901 = vunpack.c.l.b16 %v2571
        %v2902 = vunpack.c.l.b16 %v2572
        %v2903 = vunpack.c.l.b16 %v2573
        %v2904 = vunpack.c.l.b16 %v2574
        %v2905 = vunpack.c.l.b16 %v2575
        %v2906 = vunpack.c.l.b16 %v2576
        %v2907 = vunpack.c.l.b16 %v2577
        %v2908 = vunpack.c.l.b16 %v2578
        %v2909 = vunpack.c.l.b16 %v2579
        %v2910 = vunpack.c.l.b16 %v2580
        %v2911 = vunpack.c.l.b16 %v2581
        %v2912 = vunpack.c.l.b16 %v2582
        %v2913 = vunpack.c.l.b16 %v2583
        %v2914 = vunpack.c.l.b16 %v2584
        %v2915 = vunpack.c.l.b16 %v2585
        %v2916 = vunpack.c.l.b16 %v2586
        %v2917 = vunpack.c.l.b16 %v2587
        %v2918 = vunpack.c.l.b16 %v2588
        %v2919 = vunpack.c.l.b16 %v2589
        %v2920 = vunpack.c.l.b16 %v2590
        %v2921 = vunpack.c.l.b16 %v2591
        %v2922 = vunpack.c.l.b16 %v2592
        %v2923 = vunpack.c.l.b16 %v2593
        %v2924 = vunpack.c.l.b16 %v2594
        %v2925 = vunpack.c.l.b16 %v2595
        %v2926 = vunpack.c.l.b16 %v2596
        %v2927 = vunpack.c.l.b16 %v2597
        %v2928 = vunpack.c.l.b16 %v2598
        %v2929 = vunpack.c.l.b16 %v2599
        %v2930 = vunpack.c.l.b16 %v2600
        %v2931 = vunpack.c.l.b16 %v2601
        %v2932 = vunpack.c.l.b16 %v2602
        %v2933 = vunpack.c.l.b16 %v2603
        %v2934 = vunpack.c.l.b16 %v2604
        %v2935 = vunpack.c.l.b16 %v2605
        %v2936 = vunpack.c.l.b16 %v2606
        %v2937 = vunpack.c.l.b16 %v2607
        %v2938 = vunpack.c.l.b16 %v2608
        %v2939 = vunpack.c.l.b16 %v2609
        %v2940 = vunpack.c.l.b16 %v2610
        %v2941 = vunpack.c.l.b16 %v2611
        %v2942 = vunpack.c.l.b16 %v2612
        %v2943 = vunpack.c.l.b16 %v2613
        %v2944 = vunpack.c.l.b16 %v2614
        %v2945 = vunpack.c.l.b16 %v2615
        %v2946 = vunpack.c.l.b16 %v2616
        %v2947 = vunpack.c.l.b16 %v2617
        %v2948 = vunpack.c.l.b16 %v2618
        %v2949 = vunpack.c.l.b16 %v2619
        %v2950 = vunpack.c.l.b16 %v2620
        %v2951 = vunpack.c.l.b16 %v2621
        %v2952 = vunpack.c.l.b16 %v2622
        %v2953 = vunpack.c.l.b16 %v2623
        %v2954 = vunpack.c.l.b16 %v2624
        %v2955 = vunpack.c.l.b16 %v2625
        %v2956 = vunpack.c.l.b16 %v2626
        %v2957 = vunpack.c.l.b16 %v2627
        %v2958 = vunpack.c.l.b16 %v2628
        %v2959 = vunpack.c.l.b16 %v2629
        %v2960 = vunpack.c.l.b16 %v2630
        %v2961 = vunpack.c.l.b16 %v2631
        %v2962 = vunpack.c.l.b16 %v2632
        %v2963 = vunpack.c.l.b16 %v2633
        %v2964 = vunpack.c.l.b16 %v2634
        %v2965 = vunpack.c.l.b16 %v2635
        %v2966 = vunpack.c.l.b16 %v2636
        %v2967 = vunpack.c.l.b16 %v2637
        %v2968 = vpack.c.b16 %v2825, %v2824
        %v2969 = vpack.c.b16 %v2827, %v2826
        %v2970 = vpack.c.b16 %v2829, %v2828
        %v2971 = vpack.c.b16 %v2831, %v2830
        %v2972 = vpack.c.b16 %v2833, %v2832
        %v2973 = vpack.c.b16 %v2835, %v2834
        %v2974 = vpack.c.b16 %v2837, %v2836
        %v2975 = vpack.c.b16 %v2839, %v2838
        %v2976 = vpack.c.b16 %v2841, %v2840
        %v2977 = vpack.c.b16 %v2843, %v2842
        %v2978 = vpack.c.b16 %v2845, %v2844
        %v2979 = vpack.c.b16 %v2847, %v2846
        %v2980 = vpack.c.b16 %v2849, %v2848
        %v2981 = vpack.c.b16 %v2851, %v2850
        %v2982 = vpack.c.b16 %v2853, %v2852
        %v2983 = vpack.c.b16 %v2855, %v2854
        %v2984 = vpack.c.b16 %v2857, %v2856
        %v2985 = vpack.c.b16 %v2859, %v2858
        %v2986 = vpack.c.b16 %v2861, %v2860
        %v2987 = vpack.c.b16 %v2863, %v2862
        %v2988 = vpack.c.b16 %v2865, %v2864
        %v2989 = vpack.c.b16 %v2867, %v2866
        %v2990 = vpack.c.b16 %v2869, %v2868
        %v2991 = vpack.c.b16 %v2871, %v2870
        %v2992 = vpack.c.b16 %v2873, %v2872
        %v2993 = vpack.c.b16 %v2875, %v2874
        %v2994 = vpack.c.b16 %v2877, %v2876
        %v2995 = vpack.c.b16 %v2879, %v2878
        %v2996 = vpack.c.b16 %v2881, %v2880
        %v2997 = vpack.c.b16 %v2883, %v2882
        %v2998 = vpack.c.b16 %v2885, %v2884
        %v2999 = vpack.c.b16 %v2887, %v2886
        %v3000 = vpack.c.b16 %v2889, %v2888
        %v3001 = vpack.c.b16 %v2891, %v2890
        %v3002 = vpack.c.b16 %v2893, %v2892
        %v3003 = vpack.c.b16 %v2895, %v2894
        %v3004 = vpack.c.b16 %v2897, %v2896
        %v3005 = vpack.c.b16 %v2899, %v2898
        %v3006 = vpack.c.b16 %v2901, %v2900
        %v3007 = vpack.c.b16 %v2903, %v2902
        %v3008 = vpack.c.b16 %v2905, %v2904
        %v3009 = vpack.c.b16 %v2907, %v2906
        %v3010 = vpack.c.b16 %v2909, %v2908
        %v3011 = vpack.c.b16 %v2911, %v2910
        %v3012 = vpack.c.b16 %v2913, %v2912
        %v3013 = vpack.c.b16 %v2915, %v2914
        %v3014 = vpack.c.b16 %v2917, %v2916
        %v3015 = vpack.c.b16 %v2919, %v2918
        %v3016 = vpack.c.b16 %v2921, %v2920
        %v3017 = vpack.c.b16 %v2923, %v2922
        %v3018 = vpack.c.b16 %v2925, %v2924
        %v3019 = vpack.c.b16 %v2927, %v2926
        %v3020 = vpack.c.b16 %v2929, %v2928
        %v3021 = vpack.c.b16 %v2931, %v2930
        %v3022 = vpack.c.b16 %v2933, %v2932
        %v3023 = vpack.c.b16 %v2935, %v2934
        %v3024 = vpack.c.b16 %v2937, %v2936
        %v3025 = vpack.c.b16 %v2939, %v2938
        %v3026 = vpack.c.b16 %v2941, %v2940
        %v3027 = vpack.c.b16 %v2943, %v2942
        %v3028 = vpack.c.b16 %v2945, %v2944
        %v3029 = vpack.c.b16 %v2947, %v2946
        %v3030 = vpack.c.b16 %v2949, %v2948
        %v3031 = vpack.c.b16 %v2951, %v2950
        %v3032 = vpack.c.b16 %v2953, %v2952
        %v3033 = vpack.c.b16 %v2955, %v2954
        %v3034 = vpack.c.b16 %v2957, %v2956
        %v3035 = vpack.c.b16 %v2959, %v2958
        %v3036 = vpack.c.b16 %v2961, %v2960
        %v3037 = vpack.c.b16 %v2963, %v2962
        %v3038 = vpack.c.b16 %v2965, %v2964
        %v3039 = vpack.c.b16 %v2967, %v2966
        %3112 = vmatprep.subr.bf16.mxu0 0
        %3113 = vmatpush1.bf16.msra.mxu0 %v2968
        %3114 = vmatprep.subr.bf16.mxu0 0
        %3115 = vmatpush1.bf16.msra.mxu0 %v2969
        %3116 = vmatprep.subr.bf16.mxu0 0
        %3117 = vmatpush1.bf16.msra.mxu0 %v2970
        %3118 = vmatprep.subr.bf16.mxu0 0
        %3119 = vmatpush1.bf16.msra.mxu0 %v2971
        %3120 = vmatprep.subr.bf16.mxu0 0
        %3121 = vmatpush1.bf16.msra.mxu0 %v2972
        %3122 = vmatprep.subr.bf16.mxu0 0
        %3123 = vmatpush1.bf16.msra.mxu0 %v2973
        %3124 = vmatprep.subr.bf16.mxu0 0
        %3125 = vmatpush1.bf16.msra.mxu0 %v2974
        %3126 = vmatprep.subr.bf16.mxu0 0
        %3127 = vmatpush1.bf16.msra.mxu0 %v2975
        %3128 = vmatprep.subr.bf16.mxu0 0
        %3129 = vmatpush1.bf16.msra.mxu0 %v2976
        %3130 = vmatprep.subr.bf16.mxu0 0
        %3131 = vmatpush1.bf16.msra.mxu0 %v2977
        %3132 = vmatprep.subr.bf16.mxu0 0
        %3133 = vmatpush1.bf16.msra.mxu0 %v2978
        %3134 = vmatprep.subr.bf16.mxu0 0
        %3135 = vmatpush1.bf16.msra.mxu0 %v2979
        %3136 = vmatprep.subr.bf16.mxu0 0
        %3137 = vmatpush1.bf16.msra.mxu0 %v2980
        %3138 = vmatprep.subr.bf16.mxu0 0
        %3139 = vmatpush1.bf16.msra.mxu0 %v2981
        %3140 = vmatprep.subr.bf16.mxu0 0
        %3141 = vmatpush1.bf16.msra.mxu0 %v2982
        %3142 = vmatprep.subr.bf16.mxu0 0
        %3143 = vmatpush1.bf16.msra.mxu0 %v2983
        %3144 = vmatprep.mubr.bf16.mxu0 %v2458
        %3145 = vmatmul.mubr.bf16.gmra.mrb[0].mxu0 %v2440
        %v3146 = vpop.f32.mrb[0].mxu0
        %v3147 = vadd.f32 %v2678, %v3146
        %v3148 = vpop.f32.mrb[0].mxu0
        %v3149 = vpop.f32.mrb[0].mxu0
        %v3150 = vadd.f32 %v2678, %v3149
        %v3151 = vpop.f32.mrb[0].mxu0
        %3152 = vmatprep.mubr.bf16.mxu0 %v2459
        %3153 = vmatmul.mubr.bf16.gmra.mrb[0].mxu0 %v2441
        %v3154 = vpop.f32.mrb[0].mxu0
        %v3155 = vadd.f32 %v2678, %v3154
        %v3156 = vpop.f32.mrb[0].mxu0
        %v3157 = vpop.f32.mrb[0].mxu0
        %v3158 = vadd.f32 %v2678, %v3157
        %v3159 = vpop.f32.mrb[0].mxu0
        %3160 = vmatprep.mubr.bf16.mxu0 %v2460
        %3161 = vmatmul.mubr.bf16.gmra.mrb[0].mxu0 %v2442
        %v3162 = vpop.f32.mrb[0].mxu0
        %v3163 = vadd.f32 %v2678, %v3162
        %v3164 = vpop.f32.mrb[0].mxu0
        %v3165 = vpop.f32.mrb[0].mxu0
        %v3166 = vadd.f32 %v2678, %v3165
        %v3167 = vpop.f32.mrb[0].mxu0
        %3168 = vmatprep.mubr.bf16.mxu0 %v2461
        %3169 = vmatmul.mubr.bf16.gmra.mrb[0].mxu0 %v2443
        %v3170 = vpop.f32.mrb[0].mxu0
        %v3171 = vadd.f32 %v2678, %v3170
        %v3172 = vpop.f32.mrb[0].mxu0
        %v3173 = vpop.f32.mrb[0].mxu0
        %v3174 = vadd.f32 %v2678, %v3173
        %v3175 = vpop.f32.mrb[0].mxu0
        %3176 = vmatprep.mubr.bf16.mxu0 %v2462
        %3177 = vmatmul.mubr.bf16.gmra.mrb[0].mxu0 %v2444
        %v3178 = vpop.f32.mrb[0].mxu0
        %v3179 = vadd.f32 %v2678, %v3178
        %v3180 = vpop.f32.mrb[0].mxu0
        %v3181 = vpop.f32.mrb[0].mxu0
        %v3182 = vadd.f32 %v2678, %v3181
        %v3183 = vpop.f32.mrb[0].mxu0
        %3184 = vmatprep.mubr.bf16.mxu0 %v2463
        %3185 = vmatmul.mubr.bf16.gmra.mrb[0].mxu0 %v2445
        %v3186 = vpop.f32.mrb[0].mxu0
        %v3187 = vadd.f32 %v2678, %v3186
        %v3188 = vpop.f32.mrb[0].mxu0
        %v3189 = vpop.f32.mrb[0].mxu0
        %v3190 = vadd.f32 %v2678, %v3189
        %v3191 = vpop.f32.mrb[0].mxu0
        %3192 = vmatprep.mubr.bf16.mxu0 %v2464
        %3193 = vmatmul.mubr.bf16.gmra.mrb[0].mxu0 %v2446
        %v3194 = vpop.f32.mrb[0].mxu0
        %v3195 = vadd.f32 %v2678, %v3194
        %v3196 = vpop.f32.mrb[0].mxu0
        %v3197 = vpop.f32.mrb[0].mxu0
        %v3198 = vadd.f32 %v2678, %v3197
        %v3199 = vpop.f32.mrb[0].mxu0
        %3200 = vmatprep.mubr.bf16.mxu0 %v2465
        %3201 = vmatmul.mubr.bf16.gmra.mrb[0].mxu0 %v2447
        %v3202 = vpop.f32.mrb[0].mxu0
        %v3203 = vadd.f32 %v2678, %v3202
        %v3204 = vpop.f32.mrb[0].mxu0
        %v3205 = vpop.f32.mrb[0].mxu0
        %v3206 = vadd.f32 %v2678, %v3205
        %v3207 = vpop.f32.mrb[0].mxu0
        %3208 = vmatprep.mubr.bf16.mxu0 %v2466
        %3209 = vmatmul.mubr.bf16.gmra.mrb[0].mxu0 %v2448
        %v3210 = vpop.f32.mrb[0].mxu0
        %v3211 = vadd.f32 %v2678, %v3210
        %v3212 = vpop.f32.mrb[0].mxu0
        %v3213 = vpop.f32.mrb[0].mxu0
        %v3214 = vadd.f32 %v2678, %v3213
        %v3215 = vpop.f32.mrb[0].mxu0
        %3216 = vmatprep.mubr.bf16.mxu0 %v2467
        %3217 = vmatmul.mubr.bf16.gmra.mrb[0].mxu0 %v2449
        %v3218 = vpop.f32.mrb[0].mxu0
        %v3219 = vadd.f32 %v2678, %v3218
        %v3220 = vpop.f32.mrb[0].mxu0
        %v3221 = vpop.f32.mrb[0].mxu0
        %v3222 = vadd.f32 %v2678, %v3221
        %v3223 = vpop.f32.mrb[0].mxu0
        %3224 = vmatprep.mubr.bf16.mxu0 %v2468
        %3225 = vmatmul.mubr.bf16.gmra.mrb[0].mxu0 %v2450
        %v3226 = vpop.f32.mrb[0].mxu0
        %v3227 = vadd.f32 %v2678, %v3226
        %v3228 = vpop.f32.mrb[0].mxu0
        %v3229 = vpop.f32.mrb[0].mxu0
        %v3230 = vadd.f32 %v2678, %v3229
        %v3231 = vpop.f32.mrb[0].mxu0
        %3232 = vmatprep.mubr.bf16.mxu0 %v2469
        %3233 = vmatmul.mubr.bf16.gmra.mrb[0].mxu0 %v2451
        %v3234 = vpop.f32.mrb[0].mxu0
        %v3235 = vadd.f32 %v2678, %v3234
        %v3236 = vpop.f32.mrb[0].mxu0
        %v3237 = vpop.f32.mrb[0].mxu0
        %v3238 = vadd.f32 %v2678, %v3237
        %v3239 = vpop.f32.mrb[0].mxu0
        %3240 = vmatprep.mubr.bf16.mxu0 %v2470
        %3241 = vmatmul.mubr.bf16.gmra.mrb[0].mxu0 %v2452
        %v3242 = vpop.f32.mrb[0].mxu0
        %v3243 = vadd.f32 %v2678, %v3242
        %v3244 = vpop.f32.mrb[0].mxu0
        %v3245 = vpop.f32.mrb[0].mxu0
        %v3246 = vadd.f32 %v2678, %v3245
        %v3247 = vpop.f32.mrb[0].mxu0
        %3248 = vmatprep.mubr.bf16.mxu0 %v2471
        %3249 = vmatmul.mubr.bf16.gmra.mrb[0].mxu0 %v2453
        %v3250 = vpop.f32.mrb[0].mxu0
        %v3251 = vadd.f32 %v2678, %v3250
        %v3252 = vpop.f32.mrb[0].mxu0
        %v3253 = vpop.f32.mrb[0].mxu0
        %v3254 = vadd.f32 %v2678, %v3253
        %v3255 = vpop.f32.mrb[0].mxu0
        %3256 = vmatprep.mubr.bf16.mxu0 %v2472
        %3257 = vmatmul.mubr.bf16.gmra.mrb[0].mxu0 %v2454
        %v3258 = vpop.f32.mrb[0].mxu0
        %v3259 = vadd.f32 %v2678, %v3258
        %v3260 = vpop.f32.mrb[0].mxu0
        %v3261 = vpop.f32.mrb[0].mxu0
        %v3262 = vadd.f32 %v2678, %v3261
        %v3263 = vpop.f32.mrb[0].mxu0
        %3264 = vmatprep.mubr.bf16.mxu0 %v2473
        %3265 = vmatmul.mubr.bf16.gmra.mrb[0].mxu0 %v2455
        %v3266 = vpop.f32.mrb[0].mxu0
        %v3267 = vadd.f32 %v2678, %v3266
        %v3268 = vpop.f32.mrb[0].mxu0
        %v3269 = vpop.f32.mrb[0].mxu0
        %v3270 = vadd.f32 %v2678, %v3269
        %v3271 = vpop.f32.mrb[0].mxu0
        %3272 = vdwg.mxu0
        %3273 = vmatprep.subr.bf16.mxu0 0
        %3274 = vmatpush1.bf16.msra.mxu0 %v2984
        %3275 = vmatprep.subr.bf16.mxu0 0
        %3276 = vmatpush1.bf16.msra.mxu0 %v2985
        %3277 = vmatprep.subr.bf16.mxu0 0
        %3278 = vmatpush1.bf16.msra.mxu0 %v2986
        %3279 = vmatprep.subr.bf16.mxu0 0
        %3280 = vmatpush1.bf16.msra.mxu0 %v2987
        %3281 = vmatprep.subr.bf16.mxu0 0
        %3282 = vmatpush1.bf16.msra.mxu0 %v2988
        %3283 = vmatprep.subr.bf16.mxu0 0
        %3284 = vmatpush1.bf16.msra.mxu0 %v2989
        %3285 = vmatprep.subr.bf16.mxu0 0
        %3286 = vmatpush1.bf16.msra.mxu0 %v2990
        %3287 = vmatprep.subr.bf16.mxu0 0
        %3288 = vmatpush1.bf16.msra.mxu0 %v2991
        %3289 = vmatprep.subr.bf16.mxu0 0
        %3290 = vmatpush1.bf16.msra.mxu0 %v2992
        %3291 = vmatprep.subr.bf16.mxu0 0
        %3292 = vmatpush1.bf16.msra.mxu0 %v2993
        %3293 = vmatprep.subr.bf16.mxu0 0
        %3294 = vmatpush1.bf16.msra.mxu0 %v2994
        %3295 = vmatprep.subr.bf16.mxu0 0
        %3296 = vmatpush1.bf16.msra.mxu0 %v2995
        %3297 = vmatprep.subr.bf16.mxu0 0
        %3298 = vmatpush1.bf16.msra.mxu0 %v2996
        %3299 = vmatprep.subr.bf16.mxu0 0
        %3300 = vmatpush1.bf16.msra.mxu0 %v2997
        %3301 = vmatprep.subr.bf16.mxu0 0
        %3302 = vmatpush1.bf16.msra.mxu0 %v2998
        %3303 = vmatprep.subr.bf16.mxu0 0
        %3304 = vmatpush1.bf16.msra.mxu0 %v2999
        %3305 = vmatprep.mubr.bf16.mxu0 %v2441
        %3306 = vmatmul.mubr.bf16.gmra.mrb[0].mxu0 %v2476
        %v3307 = vpop.f32.mrb[0].mxu0
        %v3308 = vadd.f32 %v3147, %v3307
        %v3309 = vpop.f32.mrb[0].mxu0
        %v3310 = vpop.f32.mrb[0].mxu0
        %v3311 = vadd.f32 %v3150, %v3310
        %v3312 = vpop.f32.mrb[0].mxu0
        %3313 = vmatprep.mubr.bf16.mxu0 %v2442
        %3314 = vmatmul.mubr.bf16.gmra.mrb[0].mxu0 %v2477
        %v3315 = vpop.f32.mrb[0].mxu0
        %v3316 = vadd.f32 %v3155, %v3315
        %v3317 = vpop.f32.mrb[0].mxu0
        %v3318 = vpop.f32.mrb[0].mxu0
        %v3319 = vadd.f32 %v3158, %v3318
        %v3320 = vpop.f32.mrb[0].mxu0
        %3321 = vmatprep.mubr.bf16.mxu0 %v2443
        %3322 = vmatmul.mubr.bf16.gmra.mrb[0].mxu0 %v2478
        %v3323 = vpop.f32.mrb[0].mxu0
        %v3324 = vadd.f32 %v3163, %v3323
        %v3325 = vpop.f32.mrb[0].mxu0
        %v3326 = vpop.f32.mrb[0].mxu0
        %v3327 = vadd.f32 %v3166, %v3326
        %v3328 = vpop.f32.mrb[0].mxu0
        %3329 = vmatprep.mubr.bf16.mxu0 %v2444
        %3330 = vmatmul.mubr.bf16.gmra.mrb[0].mxu0 %v2479
        %v3331 = vpop.f32.mrb[0].mxu0
        %v3332 = vadd.f32 %v3171, %v3331
        %v3333 = vpop.f32.mrb[0].mxu0
        %v3334 = vpop.f32.mrb[0].mxu0
        %v3335 = vadd.f32 %v3174, %v3334
        %v3336 = vpop.f32.mrb[0].mxu0
        %3337 = vmatprep.mubr.bf16.mxu0 %v2445
        %3338 = vmatmul.mubr.bf16.gmra.mrb[0].mxu0 %v2480
        %v3339 = vpop.f32.mrb[0].mxu0
        %v3340 = vadd.f32 %v3179, %v3339
        %v3341 = vpop.f32.mrb[0].mxu0
        %v3342 = vpop.f32.mrb[0].mxu0
        %v3343 = vadd.f32 %v3182, %v3342
        %v3344 = vpop.f32.mrb[0].mxu0
        %3345 = vmatprep.mubr.bf16.mxu0 %v2446
        %3346 = vmatmul.mubr.bf16.gmra.mrb[0].mxu0 %v2481
        %v3347 = vpop.f32.mrb[0].mxu0
        %v3348 = vadd.f32 %v3187, %v3347
        %v3349 = vpop.f32.mrb[0].mxu0
        %v3350 = vpop.f32.mrb[0].mxu0
        %v3351 = vadd.f32 %v3190, %v3350
        %v3352 = vpop.f32.mrb[0].mxu0
        %3353 = vmatprep.mubr.bf16.mxu0 %v2447
        %3354 = vmatmul.mubr.bf16.gmra.mrb[0].mxu0 %v2482
        %v3355 = vpop.f32.mrb[0].mxu0
        %v3356 = vadd.f32 %v3195, %v3355
        %v3357 = vpop.f32.mrb[0].mxu0
        %v3358 = vpop.f32.mrb[0].mxu0
        %v3359 = vadd.f32 %v3198, %v3358
        %v3360 = vpop.f32.mrb[0].mxu0
        %3361 = vmatprep.mubr.bf16.mxu0 %v2448
        %3362 = vmatmul.mubr.bf16.gmra.mrb[0].mxu0 %v2483
        %v3363 = vpop.f32.mrb[0].mxu0
        %v3364 = vadd.f32 %v3203, %v3363
        %v3365 = vpop.f32.mrb[0].mxu0
        %v3366 = vpop.f32.mrb[0].mxu0
        %v3367 = vadd.f32 %v3206, %v3366
        %v3368 = vpop.f32.mrb[0].mxu0
        %3369 = vmatprep.mubr.bf16.mxu0 %v2449
        %3370 = vmatmul.mubr.bf16.gmra.mrb[0].mxu0 %v2484
        %v3371 = vpop.f32.mrb[0].mxu0
        %v3372 = vadd.f32 %v3211, %v3371
        %v3373 = vpop.f32.mrb[0].mxu0
        %v3374 = vpop.f32.mrb[0].mxu0
        %v3375 = vadd.f32 %v3214, %v3374
        %v3376 = vpop.f32.mrb[0].mxu0
        %3377 = vmatprep.mubr.bf16.mxu0 %v2450
        %3378 = vmatmul.mubr.bf16.gmra.mrb[0].mxu0 %v2485
        %v3379 = vpop.f32.mrb[0].mxu0
        %v3380 = vadd.f32 %v3219, %v3379
        %v3381 = vpop.f32.mrb[0].mxu0
        %v3382 = vpop.f32.mrb[0].mxu0
        %v3383 = vadd.f32 %v3222, %v3382
        %v3384 = vpop.f32.mrb[0].mxu0
        %3385 = vmatprep.mubr.bf16.mxu0 %v2451
        %3386 = vmatmul.mubr.bf16.gmra.mrb[0].mxu0 %v2486
        %v3387 = vpop.f32.mrb[0].mxu0
        %v3388 = vadd.f32 %v3227, %v3387
        %v3389 = vpop.f32.mrb[0].mxu0
        %v3390 = vpop.f32.mrb[0].mxu0
        %v3391 = vadd.f32 %v3230, %v3390
        %v3392 = vpop.f32.mrb[0].mxu0
        %3393 = vmatprep.mubr.bf16.mxu0 %v2452
        %3394 = vmatmul.mubr.bf16.gmra.mrb[0].mxu0 %v2487
        %v3395 = vpop.f32.mrb[0].mxu0
        %v3396 = vadd.f32 %v3235, %v3395
        %v3397 = vpop.f32.mrb[0].mxu0
        %v3398 = vpop.f32.mrb[0].mxu0
        %v3399 = vadd.f32 %v3238, %v3398
        %v3400 = vpop.f32.mrb[0].mxu0
        %3401 = vmatprep.mubr.bf16.mxu0 %v2453
        %3402 = vmatmul.mubr.bf16.gmra.mrb[0].mxu0 %v2488
        %v3403 = vpop.f32.mrb[0].mxu0
        %v3404 = vadd.f32 %v3243, %v3403
        %v3405 = vpop.f32.mrb[0].mxu0
        %v3406 = vpop.f32.mrb[0].mxu0
        %v3407 = vadd.f32 %v3246, %v3406
        %v3408 = vpop.f32.mrb[0].mxu0
        %3409 = vmatprep.mubr.bf16.mxu0 %v2454
        %3410 = vmatmul.mubr.bf16.gmra.mrb[0].mxu0 %v2489
        %v3411 = vpop.f32.mrb[0].mxu0
        %v3412 = vadd.f32 %v3251, %v3411
        %v3413 = vpop.f32.mrb[0].mxu0
        %v3414 = vpop.f32.mrb[0].mxu0
        %v3415 = vadd.f32 %v3254, %v3414
        %v3416 = vpop.f32.mrb[0].mxu0
        %3417 = vmatprep.mubr.bf16.mxu0 %v2455
        %3418 = vmatmul.mubr.bf16.gmra.mrb[0].mxu0 %v2490
        %v3419 = vpop.f32.mrb[0].mxu0
        %v3420 = vadd.f32 %v3259, %v3419
        %v3421 = vpop.f32.mrb[0].mxu0
        %v3422 = vpop.f32.mrb[0].mxu0
        %v3423 = vadd.f32 %v3262, %v3422
        %v3424 = vpop.f32.mrb[0].mxu0
        %3425 = vmatprep.mubr.bf16.mxu0 %v2456
        %3426 = vmatmul.mubr.bf16.gmra.mrb[0].mxu0 %v2491
        %v3427 = vpop.f32.mrb[0].mxu0
        %v3428 = vadd.f32 %v3267, %v3427
        %v3429 = vpop.f32.mrb[0].mxu0
        %v3430 = vpop.f32.mrb[0].mxu0
        %v3431 = vadd.f32 %v3270, %v3430
        %v3432 = vpop.f32.mrb[0].mxu0
        %3433 = vdwg.mxu0
        %3434 = vmatprep.subr.bf16.mxu0 0
        %3435 = vmatpush1.bf16.msra.mxu0 %v3000
        %3436 = vmatprep.subr.bf16.mxu0 0
        %3437 = vmatpush1.bf16.msra.mxu0 %v3001
        %3438 = vmatprep.subr.bf16.mxu0 0
        %3439 = vmatpush1.bf16.msra.mxu0 %v3002
        %3440 = vmatprep.subr.bf16.mxu0 0
        %3441 = vmatpush1.bf16.msra.mxu0 %v3003
        %3442 = vmatprep.subr.bf16.mxu0 0
        %3443 = vmatpush1.bf16.msra.mxu0 %v3004
        %3444 = vmatprep.subr.bf16.mxu0 0
        %3445 = vmatpush1.bf16.msra.mxu0 %v3005
        %3446 = vmatprep.subr.bf16.mxu0 0
        %3447 = vmatpush1.bf16.msra.mxu0 %v3006
        %3448 = vmatprep.subr.bf16.mxu0 0
        %3449 = vmatpush1.bf16.msra.mxu0 %v3007
        %3450 = vmatprep.subr.bf16.mxu0 0
        %3451 = vmatpush1.bf16.msra.mxu0 %v3008
        %3452 = vmatprep.subr.bf16.mxu0 0
        %3453 = vmatpush1.bf16.msra.mxu0 %v3009
        %3454 = vmatprep.subr.bf16.mxu0 0
        %3455 = vmatpush1.bf16.msra.mxu0 %v3010
        %3456 = vmatprep.subr.bf16.mxu0 0
        %3457 = vmatpush1.bf16.msra.mxu0 %v3011
        %3458 = vmatprep.subr.bf16.mxu0 0
        %3459 = vmatpush1.bf16.msra.mxu0 %v3012
        %3460 = vmatprep.subr.bf16.mxu0 0
        %3461 = vmatpush1.bf16.msra.mxu0 %v3013
        %3462 = vmatprep.subr.bf16.mxu0 0
        %3463 = vmatpush1.bf16.msra.mxu0 %v3014
        %3464 = vmatprep.subr.bf16.mxu0 0
        %3465 = vmatpush1.bf16.msra.mxu0 %v3015
        %3466 = vmatprep.mubr.bf16.mxu0 %v2477
        %3467 = vmatmul.mubr.bf16.gmra.mrb[0].mxu0 %v2459
        %v3468 = vpop.f32.mrb[0].mxu0
        %v3469 = vadd.f32 %v3308, %v3468
        %v3470 = vpop.f32.mrb[0].mxu0
        %v3471 = vpop.f32.mrb[0].mxu0
        %v3472 = vadd.f32 %v3311, %v3471
        %v3473 = vpop.f32.mrb[0].mxu0
        %3474 = vmatprep.mubr.bf16.mxu0 %v2478
        %3475 = vmatmul.mubr.bf16.gmra.mrb[0].mxu0 %v2460
        %v3476 = vpop.f32.mrb[0].mxu0
        %v3477 = vadd.f32 %v3316, %v3476
        %v3478 = vpop.f32.mrb[0].mxu0
        %v3479 = vpop.f32.mrb[0].mxu0
        %v3480 = vadd.f32 %v3319, %v3479
        %v3481 = vpop.f32.mrb[0].mxu0
        %3482 = vmatprep.mubr.bf16.mxu0 %v2479
        %3483 = vmatmul.mubr.bf16.gmra.mrb[0].mxu0 %v2461
        %v3484 = vpop.f32.mrb[0].mxu0
        %v3485 = vadd.f32 %v3324, %v3484
        %v3486 = vpop.f32.mrb[0].mxu0
        %v3487 = vpop.f32.mrb[0].mxu0
        %v3488 = vadd.f32 %v3327, %v3487
        %v3489 = vpop.f32.mrb[0].mxu0
        %3490 = vmatprep.mubr.bf16.mxu0 %v2480
        %3491 = vmatmul.mubr.bf16.gmra.mrb[0].mxu0 %v2462
        %v3492 = vpop.f32.mrb[0].mxu0
        %v3493 = vadd.f32 %v3332, %v3492
        %v3494 = vpop.f32.mrb[0].mxu0
        %v3495 = vpop.f32.mrb[0].mxu0
        %v3496 = vadd.f32 %v3335, %v3495
        %v3497 = vpop.f32.mrb[0].mxu0
        %3498 = vmatprep.mubr.bf16.mxu0 %v2481
        %3499 = vmatmul.mubr.bf16.gmra.mrb[0].mxu0 %v2463
        %v3500 = vpop.f32.mrb[0].mxu0
        %v3501 = vadd.f32 %v3340, %v3500
        %v3502 = vpop.f32.mrb[0].mxu0
        %v3503 = vpop.f32.mrb[0].mxu0
        %v3504 = vadd.f32 %v3343, %v3503
        %v3505 = vpop.f32.mrb[0].mxu0
        %3506 = vmatprep.mubr.bf16.mxu0 %v2482
        %3507 = vmatmul.mubr.bf16.gmra.mrb[0].mxu0 %v2464
        %v3508 = vpop.f32.mrb[0].mxu0
        %v3509 = vadd.f32 %v3348, %v3508
        %v3510 = vpop.f32.mrb[0].mxu0
        %v3511 = vpop.f32.mrb[0].mxu0
        %v3512 = vadd.f32 %v3351, %v3511
        %v3513 = vpop.f32.mrb[0].mxu0
        %3514 = vmatprep.mubr.bf16.mxu0 %v2483
        %3515 = vmatmul.mubr.bf16.gmra.mrb[0].mxu0 %v2465
        %v3516 = vpop.f32.mrb[0].mxu0
        %v3517 = vadd.f32 %v3356, %v3516
        %v3518 = vpop.f32.mrb[0].mxu0
        %v3519 = vpop.f32.mrb[0].mxu0
        %v3520 = vadd.f32 %v3359, %v3519
        %v3521 = vpop.f32.mrb[0].mxu0
        %3522 = vmatprep.mubr.bf16.mxu0 %v2484
        %3523 = vmatmul.mubr.bf16.gmra.mrb[0].mxu0 %v2466
        %v3524 = vpop.f32.mrb[0].mxu0
        %v3525 = vadd.f32 %v3364, %v3524
        %v3526 = vpop.f32.mrb[0].mxu0
        %v3527 = vpop.f32.mrb[0].mxu0
        %v3528 = vadd.f32 %v3367, %v3527
        %v3529 = vpop.f32.mrb[0].mxu0
        %3530 = vmatprep.mubr.bf16.mxu0 %v2485
        %3531 = vmatmul.mubr.bf16.gmra.mrb[0].mxu0 %v2467
        %v3532 = vpop.f32.mrb[0].mxu0
        %v3533 = vadd.f32 %v3372, %v3532
        %v3534 = vpop.f32.mrb[0].mxu0
        %v3535 = vpop.f32.mrb[0].mxu0
        %v3536 = vadd.f32 %v3375, %v3535
        %v3537 = vpop.f32.mrb[0].mxu0
        %3538 = vmatprep.mubr.bf16.mxu0 %v2486
        %3539 = vmatmul.mubr.bf16.gmra.mrb[0].mxu0 %v2468
        %v3540 = vpop.f32.mrb[0].mxu0
        %v3541 = vadd.f32 %v3380, %v3540
        %v3542 = vpop.f32.mrb[0].mxu0
        %v3543 = vpop.f32.mrb[0].mxu0
        %v3544 = vadd.f32 %v3383, %v3543
        %v3545 = vpop.f32.mrb[0].mxu0
        %3546 = vmatprep.mubr.bf16.mxu0 %v2487
        %3547 = vmatmul.mubr.bf16.gmra.mrb[0].mxu0 %v2469
        %v3548 = vpop.f32.mrb[0].mxu0
        %v3549 = vadd.f32 %v3388, %v3548
        %v3550 = vpop.f32.mrb[0].mxu0
        %v3551 = vpop.f32.mrb[0].mxu0
        %v3552 = vadd.f32 %v3391, %v3551
        %v3553 = vpop.f32.mrb[0].mxu0
        %3554 = vmatprep.mubr.bf16.mxu0 %v2488
        %3555 = vmatmul.mubr.bf16.gmra.mrb[0].mxu0 %v2470
        %v3556 = vpop.f32.mrb[0].mxu0
        %v3557 = vadd.f32 %v3396, %v3556
        %v3558 = vpop.f32.mrb[0].mxu0
        %v3559 = vpop.f32.mrb[0].mxu0
        %v3560 = vadd.f32 %v3399, %v3559
        %v3561 = vpop.f32.mrb[0].mxu0
        %3562 = vmatprep.mubr.bf16.mxu0 %v2489
        %3563 = vmatmul.mubr.bf16.gmra.mrb[0].mxu0 %v2471
        %v3564 = vpop.f32.mrb[0].mxu0
        %v3565 = vadd.f32 %v3404, %v3564
        %v3566 = vpop.f32.mrb[0].mxu0
        %v3567 = vpop.f32.mrb[0].mxu0
        %v3568 = vadd.f32 %v3407, %v3567
        %v3569 = vpop.f32.mrb[0].mxu0
        %3570 = vmatprep.mubr.bf16.mxu0 %v2490
        %3571 = vmatmul.mubr.bf16.gmra.mrb[0].mxu0 %v2472
        %v3572 = vpop.f32.mrb[0].mxu0
        %v3573 = vadd.f32 %v3412, %v3572
        %v3574 = vpop.f32.mrb[0].mxu0
        %v3575 = vpop.f32.mrb[0].mxu0
        %v3576 = vadd.f32 %v3415, %v3575
        %v3577 = vpop.f32.mrb[0].mxu0
        %3578 = vmatprep.mubr.bf16.mxu0 %v2491
        %3579 = vmatmul.mubr.bf16.gmra.mrb[0].mxu0 %v2473
        %v3580 = vpop.f32.mrb[0].mxu0
        %v3581 = vadd.f32 %v3420, %v3580
        %v3582 = vpop.f32.mrb[0].mxu0
        %v3583 = vpop.f32.mrb[0].mxu0
        %v3584 = vadd.f32 %v3423, %v3583
        %v3585 = vpop.f32.mrb[0].mxu0
        %3586 = vmatprep.mubr.bf16.mxu0 %v2492
        %3587 = vmatmul.mubr.bf16.gmra.mrb[0].mxu0 %v2474
        %v3588 = vpop.f32.mrb[0].mxu0
        %v3589 = vadd.f32 %v3428, %v3588
        %v3590 = vpop.f32.mrb[0].mxu0
        %v3591 = vpop.f32.mrb[0].mxu0
        %v3592 = vadd.f32 %v3431, %v3591
        %v3593 = vpop.f32.mrb[0].mxu0
        %3594 = vdwg.mxu0
        %3595 = vmatprep.subr.bf16.mxu0 0
        %3596 = vmatpush1.bf16.msra.mxu0 %v3016
        %3597 = vmatprep.subr.bf16.mxu0 0
        %3598 = vmatpush1.bf16.msra.mxu0 %v3017
        %3599 = vmatprep.subr.bf16.mxu0 0
        %3600 = vmatpush1.bf16.msra.mxu0 %v3018
        %3601 = vmatprep.subr.bf16.mxu0 0
        %3602 = vmatpush1.bf16.msra.mxu0 %v3019
        %3603 = vmatprep.subr.bf16.mxu0 0
        %3604 = vmatpush1.bf16.msra.mxu0 %v3020
        %3605 = vmatprep.subr.bf16.mxu0 0
        %3606 = vmatpush1.bf16.msra.mxu0 %v3021
        %3607 = vmatprep.subr.bf16.mxu0 0
        %3608 = vmatpush1.bf16.msra.mxu0 %v3022
        %3609 = vmatprep.subr.bf16.mxu0 0
        %3610 = vmatpush1.bf16.msra.mxu0 %v3023
        %3611 = vmatprep.subr.bf16.mxu0 0
        %3612 = vmatpush1.bf16.msra.mxu0 %v3024
        %3613 = vmatprep.subr.bf16.mxu0 0
        %3614 = vmatpush1.bf16.msra.mxu0 %v3025
        %3615 = vmatprep.subr.bf16.mxu0 0
        %3616 = vmatpush1.bf16.msra.mxu0 %v3026
        %3617 = vmatprep.subr.bf16.mxu0 0
        %3618 = vmatpush1.bf16.msra.mxu0 %v3027
        %3619 = vmatprep.subr.bf16.mxu0 0
        %3620 = vmatpush1.bf16.msra.mxu0 %v3028
        %3621 = vmatprep.subr.bf16.mxu0 0
        %3622 = vmatpush1.bf16.msra.mxu0 %v3029
        %3623 = vmatprep.subr.bf16.mxu0 0
        %3624 = vmatpush1.bf16.msra.mxu0 %v3030
        %3625 = vmatprep.subr.bf16.mxu0 0
        %3626 = vmatpush1.bf16.msra.mxu0 %v3031
        %3627 = vmatprep.mubr.bf16.mxu0 %v2460
        %3628 = vmatmul.mubr.bf16.gmra.mrb[0].mxu0 %v2442
        %v3629 = vpop.f32.mrb[0].mxu0
        %v3630 = vadd.f32 %v3469, %v3629
        %v3631 = vpop.f32.mrb[0].mxu0
        %v3632 = vpop.f32.mrb[0].mxu0
        %v3633 = vadd.f32 %v3472, %v3632
        %v3634 = vpop.f32.mrb[0].mxu0
        %3635 = vmatprep.mubr.bf16.mxu0 %v2461
        %3636 = vmatmul.mubr.bf16.gmra.mrb[0].mxu0 %v2443
        %v3637 = vpop.f32.mrb[0].mxu0
        %v3638 = vadd.f32 %v3477, %v3637
        %v3639 = vpop.f32.mrb[0].mxu0
        %v3640 = vpop.f32.mrb[0].mxu0
        %v3641 = vadd.f32 %v3480, %v3640
        %v3642 = vpop.f32.mrb[0].mxu0
        %3643 = vmatprep.mubr.bf16.mxu0 %v2462
        %3644 = vmatmul.mubr.bf16.gmra.mrb[0].mxu0 %v2444
        %v3645 = vpop.f32.mrb[0].mxu0
        %v3646 = vadd.f32 %v3485, %v3645
        %v3647 = vpop.f32.mrb[0].mxu0
        %v3648 = vpop.f32.mrb[0].mxu0
        %v3649 = vadd.f32 %v3488, %v3648
        %v3650 = vpop.f32.mrb[0].mxu0
        %3651 = vmatprep.mubr.bf16.mxu0 %v2463
        %3652 = vmatmul.mubr.bf16.gmra.mrb[0].mxu0 %v2445
        %v3653 = vpop.f32.mrb[0].mxu0
        %v3654 = vadd.f32 %v3493, %v3653
        %v3655 = vpop.f32.mrb[0].mxu0
        %v3656 = vpop.f32.mrb[0].mxu0
        %v3657 = vadd.f32 %v3496, %v3656
        %v3658 = vpop.f32.mrb[0].mxu0
        %3659 = vmatprep.mubr.bf16.mxu0 %v2464
        %3660 = vmatmul.mubr.bf16.gmra.mrb[0].mxu0 %v2446
        %v3661 = vpop.f32.mrb[0].mxu0
        %v3662 = vadd.f32 %v3501, %v3661
        %v3663 = vpop.f32.mrb[0].mxu0
        %v3664 = vpop.f32.mrb[0].mxu0
        %v3665 = vadd.f32 %v3504, %v3664
        %v3666 = vpop.f32.mrb[0].mxu0
        %3667 = vmatprep.mubr.bf16.mxu0 %v2465
        %3668 = vmatmul.mubr.bf16.gmra.mrb[0].mxu0 %v2447
        %v3669 = vpop.f32.mrb[0].mxu0
        %v3670 = vadd.f32 %v3509, %v3669
        %v3671 = vpop.f32.mrb[0].mxu0
        %v3672 = vpop.f32.mrb[0].mxu0
        %v3673 = vadd.f32 %v3512, %v3672
        %v3674 = vpop.f32.mrb[0].mxu0
        %3675 = vmatprep.mubr.bf16.mxu0 %v2466
        %3676 = vmatmul.mubr.bf16.gmra.mrb[0].mxu0 %v2448
        %v3677 = vpop.f32.mrb[0].mxu0
        %v3678 = vadd.f32 %v3517, %v3677
        %v3679 = vpop.f32.mrb[0].mxu0
        %v3680 = vpop.f32.mrb[0].mxu0
        %v3681 = vadd.f32 %v3520, %v3680
        %v3682 = vpop.f32.mrb[0].mxu0
        %3683 = vmatprep.mubr.bf16.mxu0 %v2467
        %3684 = vmatmul.mubr.bf16.gmra.mrb[0].mxu0 %v2449
        %v3685 = vpop.f32.mrb[0].mxu0
        %v3686 = vadd.f32 %v3525, %v3685
        %v3687 = vpop.f32.mrb[0].mxu0
        %v3688 = vpop.f32.mrb[0].mxu0
        %v3689 = vadd.f32 %v3528, %v3688
        %v3690 = vpop.f32.mrb[0].mxu0
        %3691 = vmatprep.mubr.bf16.mxu0 %v2468
        %3692 = vmatmul.mubr.bf16.gmra.mrb[0].mxu0 %v2450
        %v3693 = vpop.f32.mrb[0].mxu0
        %v3694 = vadd.f32 %v3533, %v3693
        %v3695 = vpop.f32.mrb[0].mxu0
        %v3696 = vpop.f32.mrb[0].mxu0
        %v3697 = vadd.f32 %v3536, %v3696
        %v3698 = vpop.f32.mrb[0].mxu0
        %3699 = vmatprep.mubr.bf16.mxu0 %v2469
        %3700 = vmatmul.mubr.bf16.gmra.mrb[0].mxu0 %v2451
        %v3701 = vpop.f32.mrb[0].mxu0
        %v3702 = vadd.f32 %v3541, %v3701
        %v3703 = vpop.f32.mrb[0].mxu0
        %v3704 = vpop.f32.mrb[0].mxu0
        %v3705 = vadd.f32 %v3544, %v3704
        %v3706 = vpop.f32.mrb[0].mxu0
        %3707 = vmatprep.mubr.bf16.mxu0 %v2470
        %3708 = vmatmul.mubr.bf16.gmra.mrb[0].mxu0 %v2452
        %v3709 = vpop.f32.mrb[0].mxu0
        %v3710 = vadd.f32 %v3549, %v3709
        %v3711 = vpop.f32.mrb[0].mxu0
        %v3712 = vpop.f32.mrb[0].mxu0
        %v3713 = vadd.f32 %v3552, %v3712
        %v3714 = vpop.f32.mrb[0].mxu0
        %3715 = vmatprep.mubr.bf16.mxu0 %v2471
        %3716 = vmatmul.mubr.bf16.gmra.mrb[0].mxu0 %v2453
        %v3717 = vpop.f32.mrb[0].mxu0
        %v3718 = vadd.f32 %v3557, %v3717
        %v3719 = vpop.f32.mrb[0].mxu0
        %v3720 = vpop.f32.mrb[0].mxu0
        %v3721 = vadd.f32 %v3560, %v3720
        %v3722 = vpop.f32.mrb[0].mxu0
        %3723 = vmatprep.mubr.bf16.mxu0 %v2472
        %3724 = vmatmul.mubr.bf16.gmra.mrb[0].mxu0 %v2454
        %v3725 = vpop.f32.mrb[0].mxu0
        %v3726 = vadd.f32 %v3565, %v3725
        %v3727 = vpop.f32.mrb[0].mxu0
        %v3728 = vpop.f32.mrb[0].mxu0
        %v3729 = vadd.f32 %v3568, %v3728
        %v3730 = vpop.f32.mrb[0].mxu0
        %3731 = vmatprep.mubr.bf16.mxu0 %v2473
        %3732 = vmatmul.mubr.bf16.gmra.mrb[0].mxu0 %v2455
        %v3733 = vpop.f32.mrb[0].mxu0
        %v3734 = vadd.f32 %v3573, %v3733
        %v3735 = vpop.f32.mrb[0].mxu0
        %v3736 = vpop.f32.mrb[0].mxu0
        %v3737 = vadd.f32 %v3576, %v3736
        %v3738 = vpop.f32.mrb[0].mxu0
        %3739 = vmatprep.mubr.bf16.mxu0 %v2474
        %3740 = vmatmul.mubr.bf16.gmra.mrb[0].mxu0 %v2456
        %v3741 = vpop.f32.mrb[0].mxu0
        %v3742 = vadd.f32 %v3581, %v3741
        %v3743 = vpop.f32.mrb[0].mxu0
        %v3744 = vpop.f32.mrb[0].mxu0
        %v3745 = vadd.f32 %v3584, %v3744
        %v3746 = vpop.f32.mrb[0].mxu0
        %3747 = vmatprep.mubr.bf16.mxu0 %v2475
        %3748 = vmatmul.mubr.bf16.gmra.mrb[0].mxu0 %v2457
        %v3749 = vpop.f32.mrb[0].mxu0
        %v3750 = vadd.f32 %v3589, %v3749
        %v3751 = vpop.f32.mrb[0].mxu0
        %v3752 = vpop.f32.mrb[0].mxu0
        %v3753 = vadd.f32 %v3592, %v3752
        %v3754 = vpop.f32.mrb[0].mxu0
        %3755 = vdwg.mxu0
        %3756 = vmatprep.subr.bf16.mxu0 0
        %3757 = vmatpush1.bf16.msra.mxu0 %v3032
        %3758 = vmatprep.subr.bf16.mxu0 0
        %3759 = vmatpush1.bf16.msra.mxu0 %v3033
        %3760 = vmatprep.subr.bf16.mxu0 0
        %3761 = vmatpush1.bf16.msra.mxu0 %v3034
        %3762 = vmatprep.subr.bf16.mxu0 0
        %3763 = vmatpush1.bf16.msra.mxu0 %v3035
        %3764 = vmatprep.subr.bf16.mxu0 0
        %3765 = vmatpush1.bf16.msra.mxu0 %v3036
        %3766 = vmatprep.subr.bf16.mxu0 0
        %3767 = vmatpush1.bf16.msra.mxu0 %v3037
        %3768 = vmatprep.subr.bf16.mxu0 0
        %3769 = vmatpush1.bf16.msra.mxu0 %v3038
        %3770 = vmatprep.subr.bf16.mxu0 0
        %3771 = vmatpush1.bf16.msra.mxu0 %v3039
        %3772 = vmatprep.subr.bf16.mxu0 0
        %3773 = vmatpush1.bf16.msra.mxu0 0
        %3774 = vmatprep.subr.bf16.mxu0 0
        %3775 = vmatpush1.bf16.msra.mxu0 0
        %3776 = vmatprep.subr.bf16.mxu0 0
        %3777 = vmatpush1.bf16.msra.mxu0 0
        %3778 = vmatprep.subr.bf16.mxu0 0
        %3779 = vmatpush1.bf16.msra.mxu0 0
        %3780 = vmatprep.subr.bf16.mxu0 0
        %3781 = vmatpush1.bf16.msra.mxu0 0
        %3782 = vmatprep.subr.bf16.mxu0 0
        %3783 = vmatpush1.bf16.msra.mxu0 0
        %3784 = vmatprep.subr.bf16.mxu0 0
        %3785 = vmatpush1.bf16.msra.mxu0 0
        %3786 = vmatprep.subr.bf16.mxu0 0
        %3787 = vmatpush1.bf16.msra.mxu0 0
        %3788 = vmatprep.mubr.bf16.mxu0 0
        %3789 = vmatmul.mubr.bf16.gmra.mrb[0].mxu0 %v2478
        %v3790 = vpop.f32.mrb[0].mxu0
        %v3791 = vadd.f32 %v3630, %v3790
        %v3792 = vpop.f32.mrb[0].mxu0
        %v3793 = vpop.f32.mrb[0].mxu0
        %v3794 = vadd.f32 %v3633, %v3793
        %v3795 = vpop.f32.mrb[0].mxu0
        %3796 = vmatprep.mubr.bf16.mxu0 0
        %3797 = vmatmul.mubr.bf16.gmra.mrb[0].mxu0 %v2479
        %v3798 = vpop.f32.mrb[0].mxu0
        %v3799 = vadd.f32 %v3638, %v3798
        %v3800 = vpop.f32.mrb[0].mxu0
        %v3801 = vpop.f32.mrb[0].mxu0
        %v3802 = vadd.f32 %v3641, %v3801
        %v3803 = vpop.f32.mrb[0].mxu0
        %3804 = vmatprep.mubr.bf16.mxu0 0
        %3805 = vmatmul.mubr.bf16.gmra.mrb[0].mxu0 %v2480
        %v3806 = vpop.f32.mrb[0].mxu0
        %v3807 = vadd.f32 %v3646, %v3806
        %v3808 = vpop.f32.mrb[0].mxu0
        %v3809 = vpop.f32.mrb[0].mxu0
        %v3810 = vadd.f32 %v3649, %v3809
        %v3811 = vpop.f32.mrb[0].mxu0
        %3812 = vmatprep.mubr.bf16.mxu0 0
        %3813 = vmatmul.mubr.bf16.gmra.mrb[0].mxu0 %v2481
        %v3814 = vpop.f32.mrb[0].mxu0
        %v3815 = vadd.f32 %v3654, %v3814
        %v3816 = vpop.f32.mrb[0].mxu0
        %v3817 = vpop.f32.mrb[0].mxu0
        %v3818 = vadd.f32 %v3657, %v3817
        %v3819 = vpop.f32.mrb[0].mxu0
        %3820 = vmatprep.mubr.bf16.mxu0 0
        %3821 = vmatmul.mubr.bf16.gmra.mrb[0].mxu0 %v2482
        %v3822 = vpop.f32.mrb[0].mxu0
        %v3823 = vadd.f32 %v3662, %v3822
        %v3824 = vpop.f32.mrb[0].mxu0
        %v3825 = vpop.f32.mrb[0].mxu0
        %v3826 = vadd.f32 %v3665, %v3825
        %v3827 = vpop.f32.mrb[0].mxu0
        %3828 = vmatprep.mubr.bf16.mxu0 0
        %3829 = vmatmul.mubr.bf16.gmra.mrb[0].mxu0 %v2483
        %v3830 = vpop.f32.mrb[0].mxu0
        %v3831 = vadd.f32 %v3670, %v3830
        %v3832 = vpop.f32.mrb[0].mxu0
        %v3833 = vpop.f32.mrb[0].mxu0
        %v3834 = vadd.f32 %v3673, %v3833
        %v3835 = vpop.f32.mrb[0].mxu0
        %3836 = vmatprep.mubr.bf16.mxu0 0
        %3837 = vmatmul.mubr.bf16.gmra.mrb[0].mxu0 %v2484
        %v3838 = vpop.f32.mrb[0].mxu0
        %v3839 = vadd.f32 %v3678, %v3838
        %v3840 = vpop.f32.mrb[0].mxu0
        %v3841 = vpop.f32.mrb[0].mxu0
        %v3842 = vadd.f32 %v3681, %v3841
        %v3843 = vpop.f32.mrb[0].mxu0
        %3844 = vmatprep.mubr.bf16.mxu0 0
        %3845 = vmatmul.mubr.bf16.gmra.mrb[0].mxu0 %v2485
        %v3846 = vpop.f32.mrb[0].mxu0
        %v3847 = vadd.f32 %v3686, %v3846
        %v3848 = vpop.f32.mrb[0].mxu0
        %v3849 = vpop.f32.mrb[0].mxu0
        %v3850 = vadd.f32 %v3689, %v3849
        %v3851 = vpop.f32.mrb[0].mxu0
        %3852 = vmatprep.mubr.bf16.mxu0 0
        %3853 = vmatmul.mubr.bf16.gmra.mrb[0].mxu0 %v2486
        %v3854 = vpop.f32.mrb[0].mxu0
        %v3855 = vadd.f32 %v3694, %v3854
        %v3856 = vpop.f32.mrb[0].mxu0
        %v3857 = vpop.f32.mrb[0].mxu0
        %v3858 = vadd.f32 %v3697, %v3857
        %v3859 = vpop.f32.mrb[0].mxu0
        %3860 = vmatprep.mubr.bf16.mxu0 0
        %3861 = vmatmul.mubr.bf16.gmra.mrb[0].mxu0 %v2487
        %v3862 = vpop.f32.mrb[0].mxu0
        %v3863 = vadd.f32 %v3702, %v3862
        %v3864 = vpop.f32.mrb[0].mxu0
        %v3865 = vpop.f32.mrb[0].mxu0
        %v3866 = vadd.f32 %v3705, %v3865
        %v3867 = vpop.f32.mrb[0].mxu0
        %3868 = vmatprep.mubr.bf16.mxu0 0
        %3869 = vmatmul.mubr.bf16.gmra.mrb[0].mxu0 %v2488
        %v3870 = vpop.f32.mrb[0].mxu0
        %v3871 = vadd.f32 %v3710, %v3870
        %v3872 = vpop.f32.mrb[0].mxu0
        %v3873 = vpop.f32.mrb[0].mxu0
        %v3874 = vadd.f32 %v3713, %v3873
        %v3875 = vpop.f32.mrb[0].mxu0
        %3876 = vmatprep.mubr.bf16.mxu0 0
        %3877 = vmatmul.mubr.bf16.gmra.mrb[0].mxu0 %v2489
        %v3878 = vpop.f32.mrb[0].mxu0
        %v3879 = vadd.f32 %v3718, %v3878
        %v3880 = vpop.f32.mrb[0].mxu0
        %v3881 = vpop.f32.mrb[0].mxu0
        %v3882 = vadd.f32 %v3721, %v3881
        %v3883 = vpop.f32.mrb[0].mxu0
        %3884 = vmatprep.mubr.bf16.mxu0 0
        %3885 = vmatmul.mubr.bf16.gmra.mrb[0].mxu0 %v2490
        %v3886 = vpop.f32.mrb[0].mxu0
        %v3887 = vadd.f32 %v3726, %v3886
        %v3888 = vpop.f32.mrb[0].mxu0
        %v3889 = vpop.f32.mrb[0].mxu0
        %v3890 = vadd.f32 %v3729, %v3889
        %v3891 = vpop.f32.mrb[0].mxu0
        %3892 = vmatprep.mubr.bf16.mxu0 0
        %3893 = vmatmul.mubr.bf16.gmra.mrb[0].mxu0 %v2491
        %v3894 = vpop.f32.mrb[0].mxu0
        %v3895 = vadd.f32 %v3734, %v3894
        %v3896 = vpop.f32.mrb[0].mxu0
        %v3897 = vpop.f32.mrb[0].mxu0
        %v3898 = vadd.f32 %v3737, %v3897
        %v3899 = vpop.f32.mrb[0].mxu0
        %3900 = vmatprep.mubr.bf16.mxu0 0
        %3901 = vmatmul.mubr.bf16.gmra.mrb[0].mxu0 %v2492
        %v3902 = vpop.f32.mrb[0].mxu0
        %v3903 = vadd.f32 %v3742, %v3902
        %v3904 = vpop.f32.mrb[0].mxu0
        %v3905 = vpop.f32.mrb[0].mxu0
        %v3906 = vadd.f32 %v3745, %v3905
        %v3907 = vpop.f32.mrb[0].mxu0
        %3908 = vmatprep.mubr.bf16.mxu0 0
        %3909 = vmatmul.mubr.bf16.gmra.mrb[0].mxu0 %v2493
        %v3910 = vpop.f32.mrb[0].mxu0
        %v3911 = vadd.f32 %v3750, %v3910
        %v3912 = vpop.f32.mrb[0].mxu0
        %v3913 = vpop.f32.mrb[0].mxu0
        %v3914 = vadd.f32 %v3753, %v3913
        %v3915 = vpop.f32.mrb[0].mxu0
        %3916 = vdwg.mxu0
        %v3917 = vadd.f32 %v3791, %v2641
        %v3918 = vadd.f32 %v3794, %v2642
        %v3919 = vadd.f32 %v3799, %v2643
        %v3920 = vadd.f32 %v3802, %v2644
        %v3921 = vadd.f32 %v3807, %v2645
        %v3922 = vadd.f32 %v3810, %v2646
        %v3923 = vadd.f32 %v3815, %v2647
        %v3924 = vadd.f32 %v3818, %v2648
        %v3925 = vadd.f32 %v3823, %v2649
        %v3926 = vadd.f32 %v3826, %v2650
        %v3927 = vadd.f32 %v3831, %v2651
        %v3928 = vadd.f32 %v3834, %v2652
        %v3929 = vadd.f32 %v3839, %v2653
        %v3930 = vadd.f32 %v3842, %v2654
        %v3931 = vadd.f32 %v3847, %v2655
        %v3932 = vadd.f32 %v3850, %v2656
        %v3933 = vadd.f32 %v3855, %v2657
        %v3934 = vadd.f32 %v3858, %v2658
        %v3935 = vadd.f32 %v3863, %v2659
        %v3936 = vadd.f32 %v3866, %v2660
        %v3937 = vadd.f32 %v3871, %v2661
        %v3938 = vadd.f32 %v3874, %v2662
        %v3939 = vadd.f32 %v3879, %v2663
        %v3940 = vadd.f32 %v3882, %v2664
        %v3941 = vadd.f32 %v3887, %v2665
        %v3942 = vadd.f32 %v3890, %v2666
        %v3943 = vadd.f32 %v3895, %v2667
        %v3944 = vadd.f32 %v3898, %v2668
        %v3945 = vadd.f32 %v3903, %v2669
        %v3946 = vadd.f32 %v3906, %v2670
        %v3947 = vadd.f32 %v3911, %v2671
        %v3948 = vadd.f32 %v3914, %v2672
        %v3949 = vmax.f32 %v3917, 0.0
        %v3950 = vmax.f32 %v3918, 0.0
        %v3951 = vmax.f32 %v3919, 0.0
        %v3952 = vmax.f32 %v3920, 0.0
        %v3953 = vmax.f32 %v3921, 0.0
        %v3954 = vmax.f32 %v3922, 0.0
        %v3955 = vmax.f32 %v3923, 0.0
        %v3956 = vmax.f32 %v3924, 0.0
        %v3957 = vmax.f32 %v3925, 0.0
        %v3958 = vmax.f32 %v3926, 0.0
        %v3959 = vmax.f32 %v3927, 0.0
        %v3960 = vmax.f32 %v3928, 0.0
        %v3961 = vmax.f32 %v3929, 0.0
        %v3962 = vmax.f32 %v3930, 0.0
        %v3963 = vmax.f32 %v3931, 0.0
        %v3964 = vmax.f32 %v3932, 0.0
        %v3965 = vmax.f32 %v3933, 0.0
        %v3966 = vmax.f32 %v3934, 0.0
        %v3967 = vmax.f32 %v3935, 0.0
        %v3968 = vmax.f32 %v3936, 0.0
        %v3969 = vmax.f32 %v3937, 0.0
        %v3970 = vmax.f32 %v3938, 0.0
        %v3971 = vmax.f32 %v3939, 0.0
        %v3972 = vmax.f32 %v3940, 0.0
        %v3973 = vmax.f32 %v3941, 0.0
        %v3974 = vmax.f32 %v3942, 0.0
        %v3975 = vmax.f32 %v3943, 0.0
        %v3976 = vmax.f32 %v3944, 0.0
        %v3977 = vmax.f32 %v3945, 0.0
        %v3978 = vmax.f32 %v3946, 0.0
        %v3979 = vmax.f32 %v3947, 0.0
        %v3980 = vmax.f32 %v3948, 0.0
        %3981 = vst [vmem:[%s285] sm:$0xff] %v3949
        %3982 = vst [vmem:[%s285 + $0x8] sm:$0xff] %v3950
        %3983 = vst [vmem:[%s285 + $0x10] sm:$0xff] %v3951
        %3984 = vst [vmem:[%s285 + $0x18] sm:$0xff] %v3952
        %3985 = vst [vmem:[%s285 + $0x20] sm:$0xff] %v3953
        %3986 = vst [vmem:[%s285 + $0x28] sm:$0xff] %v3954
        %3987 = vst [vmem:[%s285 + $0x30] sm:$0xff] %v3955
        %3988 = vst [vmem:[%s285 + $0x38] sm:$0xff] %v3956
        %3989 = vst [vmem:[%s285 + $0x40] sm:$0xff] %v3957
        %3990 = vst [vmem:[%s285 + $0x48] sm:$0xff] %v3958
        %3991 = vst [vmem:[%s285 + $0x50] sm:$0xff] %v3959
        %3992 = vst [vmem:[%s285 + $0x58] sm:$0xff] %v3960
        %3993 = vst [vmem:[%s285 + $0x60] sm:$0xff] %v3961
        %3994 = vst [vmem:[%s285 + $0x68] sm:$0xff] %v3962
        %3995 = vst [vmem:[%s285 + $0x70] sm:$0xff] %v3963
        %3996 = vst [vmem:[%s285 + $0x78] sm:$0xff] %v3964
        %3997 = vst [vmem:[%s285 + $0x80] sm:$0xff] %v3965
        %3998 = vst [vmem:[%s285 + $0x88] sm:$0xff] %v3966
        %3999 = vst [vmem:[%s285 + $0x90] sm:$0xff] %v3967
        %4000 = vst [vmem:[%s285 + $0x98] sm:$0xff] %v3968
        %4001 = vst [vmem:[%s285 + $0xa0] sm:$0xff] %v3969
        %4002 = vst [vmem:[%s285 + $0xa8] sm:$0xff] %v3970
        %4003 = vst [vmem:[%s285 + $0xb0] sm:$0xff] %v3971
        %4004 = vst [vmem:[%s285 + $0xb8] sm:$0xff] %v3972
        %4005 = vst [vmem:[%s285 + $0xc0] sm:$0xff] %v3973
        %4006 = vst [vmem:[%s285 + $0xc8] sm:$0xff] %v3974
        %4007 = vst [vmem:[%s285 + $0xd0] sm:$0xff] %v3975
        %4008 = vst [vmem:[%s285 + $0xd8] sm:$0xff] %v3976
        %4009 = vst [vmem:[%s285 + $0xe0] sm:$0xff] %v3977
        %4010 = vst [vmem:[%s285 + $0xe8] sm:$0xff] %v3978
        %4011 = vst [vmem:[%s285 + $0xf0] sm:$0xff] %v3979
        %4012 = vst [vmem:[%s285 + $0xf8] sm:$0xff] %v3980
        %s4013 = sand.u32 %s155, 1
        %s4014 = scalar_lea.sflag [#allocation5], %s4013
        %s4015 = sand.u32 %s155, 1
        %s4016 = smul.addr %s4015, 256
        %s4017 = scalar_lea.vmem [#allocation9], %s4016
        // Predicated region
        $region57: #{tpu_custom_call.1} parent=39 // pred_check
          %p4018 = pneg %p165
        $region58: #{tpu_custom_call.1} parent=39 // pred_check_branch
          %4020 = sbr.rel (%p4018) target = $region60
        $region59: #{tpu_custom_call.1} parent=39 // pred_region
          %s4021 = smul.u32 16, %s28
          %s4023 = ssub.s32 4096, 4096
          %4024 = vsyncadd %s4014, %s4023
          %s4025 = smul.addr %s4021, 2
          %s4026 = smul.addr %s27, 32
          %s4027 = sadd.s32 %s4025, %s4026
          %s4028 = smul.addr %s4027, 128
          %s4029 = scalar_lea.hbm %s5, %s4028
          %s4030 = sshll.u32 %s4017, 4
          %s4031 = int_to_ptr.vmem [resolvable:$true] %s4030
          %4036 = dma.vmem_to_hbm [thread:$0]  %s4031, 4096, %s4029, %s4014, 128, 128, 8
        $region60: #{tpu_custom_call.1} parent=39 // pred_fallthru
          _
      $region40: #{tpu_custom_call.1} parent=5 // pred_fallthru
        _
      %p4037 = scmp.le.s32.totalorder 2, %s18
      // Predicated region
      $region61: #{tpu_custom_call.1} parent=5 // pred_check
        %p4038 = pneg %p4037
      $region62: #{tpu_custom_call.1} parent=5 // pred_check_branch
        %4040 = sbr.rel (%p4038) target = $region64
      $region63: #{tpu_custom_call.1} parent=5 // pred_region
        %s4041 = ssub.s32 %s18, 2
        // Predicated region
        $region65: #{tpu_custom_call.1} parent=63 // pred_check
          %p4042 = pneg %p171
        $region66: #{tpu_custom_call.1} parent=63 // pred_check_branch
          %4044 = sbr.rel (%p4042) target = $region68
        $region67: #{tpu_custom_call.1} parent=63 // pred_region
          %s4045 = sand.u32 %s156, 1
          %s4046 = scalar_lea.sflag [#allocation5], %s4045
          %s4047 = sand.u32 %s156, 1
          %s4048 = smul.addr %s4047, 256
          %s4049 = scalar_lea.vmem [#allocation9], %s4048
          %4050 = dma.done %s4046, 4096
        $region68: #{tpu_custom_call.1} parent=63 // pred_fallthru
          _
      $region64: #{tpu_custom_call.1} parent=5 // pred_fallthru
        _
    $region6: #{tpu_custom_call.1} parent=1 // loop_footer
      %s22 = sadd.s32 1, %s18
    $region7: #{tpu_custom_call.1} parent=1 // loop_footer_branch
      %17 = sbr.rel target = $region3
    $region8: #{tpu_custom_call.1} parent=1 // loop_exit
      _
    %4051 = vsyncpa [#allocation4], 1
    %s4052 = scalar_lea.sflag [#allocation4], 1
    %4053 = vsyncpa %s4052, 1
    %4054 = vsyncpa [#allocation7], 1
    %4055 = vsyncpa [#allocation5], 1
    %s4056 = scalar_lea.sflag [#allocation5], 1
    %4057 = vsyncpa %s4056, 1

</llo_original>
